<compile_context>
chip_gen: v7x
topology: tpu7x:2x2x1
jax: 0.10.0
libtpu: 0.0.40
codegen_flags: <defaults>
</compile_context>

<pallas_src>
import functools
import numpy as np
import jax
import jax.numpy as jnp
from jax.experimental import pallas as pl
from jax.experimental.pallas import tpu as pltpu


def _window_attention_kernel(bias_ref, x_ref, wqkv_ref, bqkv_ref,
                             wproj_ref, bproj_ref, o_ref,
                             *, tb, n_tok, num_heads, head_dim):
    """One grid step processes `tb` windows.

    bias_ref : (tbb, H, N, N) f32, tbb in {1, tb}; rel-pos bias (+mask) per window
    x_ref    : (tb, N, C)     bf16
    wqkv_ref : (C, 3C)        bf16  (scale already folded into the q columns)
    bqkv_ref : (1, 3C)        f32
    wproj_ref: (C, C)         bf16
    bproj_ref: (1, C)         f32
    o_ref    : (tb, N, C)     f32
    """
    C = num_heads * head_dim
    M = tb * n_tok

    x = x_ref[...].reshape(M, C)                                     # bf16 (M, C)

    # Fused qkv projection: bf16 operands on the MXU, f32 accumulation,
    # single bias add for the whole (M, 3C) slab.
    qkv = jnp.dot(x, wqkv_ref[...], preferred_element_type=jnp.float32)
    qkv = qkv + bqkv_ref[...]                                        # (M, 3C) f32

    bias = bias_ref[...]                                             # (tbb, H, N, N) f32

    head_outs = []
    for h in range(num_heads):                                       # H is small; unrolled
        lo = h * head_dim
        q = qkv[:, lo:lo + head_dim].reshape(tb, n_tok, head_dim)
        k = qkv[:, C + lo:C + lo + head_dim].reshape(tb, n_tok, head_dim)
        v = qkv[:, 2 * C + lo:2 * C + lo + head_dim].reshape(tb, n_tok, head_dim)

        # Batched over the TB windows; contraction over head_dim (scale is
        # already folded into q via Wqkv).
        s = jnp.einsum('bqd,bkd->bqk',
                       q.astype(jnp.bfloat16), k.astype(jnp.bfloat16),
                       preferred_element_type=jnp.float32)           # (tb, N, N) f32
        s = s + bias[:, h]                                           # broadcasts if tbb == 1

        # softmax along last axis, f32 throughout.
        s = s - jnp.max(s, axis=-1, keepdims=True)
        p = jnp.exp(s)
        p = p * pl.reciprocal(jnp.sum(p, axis=-1, keepdims=True), approx=True)

        # TODO(synk): attn_drop / proj_drop are identity at p=0.0 (eval mode); dropout not implemented.
        o_h = jnp.einsum('bqk,bkd->bqd',
                         p.astype(jnp.bfloat16), v.astype(jnp.bfloat16),
                         preferred_element_type=jnp.float32)         # (tb, N, hd) f32
        head_outs.append(o_h.reshape(M, head_dim).astype(jnp.bfloat16))

    out = jnp.concatenate(head_outs, axis=-1)                        # (M, C) bf16
    out = jnp.dot(out, wproj_ref[...],
                  preferred_element_type=jnp.float32) + bproj_ref[...]
    o_ref[...] = out.reshape(tb, n_tok, C).astype(o_ref.dtype)


def _choose_tb(B_, N, nW):
    """Pick how many windows to batch per grid step.

    Constraints: TB | B_, and when a mask is given either TB | nW or nW | TB so
    the per-window (bias + mask) tensor can be addressed with a static
    BlockSpec index_map. Aim for TB*N >= 256 rows to fill the MXU M dimension,
    but keep per-step blocks comfortably inside VMEM.
    """
    best = 1
    for tb in range(1, B_ + 1):
        if B_ % tb:
            continue
        if nW is not None and (tb % nW != 0) and (nW % tb != 0):
            continue
        if tb * N > 1024:
            break
        best = tb
        if tb * N >= 256:
            break
    return best


def make_relative_position_index(window_size):
    """Same construction as the PyTorch module (numpy, host-side)."""
    Wh, Ww = window_size
    coords_h = np.arange(Wh)
    coords_w = np.arange(Ww)
    coords = np.stack(np.meshgrid(coords_h, coords_w, indexing="ij"))      # (2, Wh, Ww)
    coords_flatten = coords.reshape(2, -1)                                  # (2, N)
    rel = coords_flatten[:, :, None] - coords_flatten[:, None, :]           # (2, N, N)
    rel = rel.transpose(1, 2, 0).copy()                                     # (N, N, 2)
    rel[:, :, 0] += Wh - 1
    rel[:, :, 1] += Ww - 1
    rel[:, :, 0] *= 2 * Ww - 1
    return rel.sum(-1).astype(np.int32)                                     # (N, N)


def init_params(key, dim, window_size, num_heads):
    Wh, Ww = window_size
    k1, k2, k3, k4, k5 = jax.random.split(key, 5)
    table_len = (2 * Wh - 1) * (2 * Ww - 1)
    params = {
        # trunc_normal_(std=0.02)
        "rel_pos_table": 0.02 * jax.random.truncated_normal(
            k1, -2.0, 2.0, (table_len, num_heads), dtype=jnp.float32),
        # nn.Linear(dim, 3*dim): weight (3C, C), bias (3C,)
        "wqkv": 0.02 * jax.random.normal(k2, (3 * dim, dim), dtype=jnp.float32),
        "bqkv": 0.02 * jax.random.normal(k3, (3 * dim,), dtype=jnp.float32),
        # nn.Linear(dim, dim)
        "wproj": 0.02 * jax.random.normal(k4, (dim, dim), dtype=jnp.float32),
        "bproj": 0.02 * jax.random.normal(k5, (dim,), dtype=jnp.float32),
    }
    return params


def window_attention(x, params, rel_pos_index, window_size, num_heads, mask=None):
    """Pallas implementation of WindowAttention.forward.

    x:    (B_, N, C) float32, N = Wh*Ww
    mask: (num_windows, N, N) float32 (0 / -inf style additive mask) or None
    """
    B_, N, C = x.shape
    head_dim = C // num_heads
    scale = head_dim ** (-0.5)

    nW = None if mask is None else int(mask.shape[0])
    if nW is not None:
        assert B_ % nW == 0, "batch must be a multiple of num_windows when a mask is given"
    TB = _choose_tb(B_, N, nW)
    assert B_ % TB == 0

    # --- glue: relative position bias gather (like table[index.view(-1)]) ---
    rel_bias = params["rel_pos_table"][rel_pos_index.reshape(-1)]           # (N*N, H)
    rel_bias = rel_bias.reshape(N, N, num_heads).transpose(2, 0, 1)         # (H, N, N)
    rel_bias = rel_bias.astype(jnp.float32)

    if mask is None:
        bias_in = rel_bias[None]                                            # (1, H, N, N)
        tbb = 1
        bias_index_map = lambda g: (0, 0, 0, 0)                             # VMEM-resident
    else:
        # Per-window bias (mask folded in): only nW copies, never B_ copies.
        per_win = rel_bias[None] + mask[:, None].astype(jnp.float32)        # (nW, H, N, N)
        if TB % nW == 0:
            # Window pattern repeats every nW; tile once so every grid step
            # reuses block 0 (no re-DMA of the bias).
            bias_in = jnp.tile(per_win, (TB // nW, 1, 1, 1))                # (TB, H, N, N)
            tbb = TB
            bias_index_map = lambda g: (0, 0, 0, 0)
        elif nW % TB == 0:
            bias_in = per_win                                               # (nW, H, N, N)
            tbb = TB
            nblk = nW // TB
            bias_index_map = lambda g: (g % nblk, 0, 0, 0)
        else:  # cannot happen: _choose_tb enforces divisibility
            raise ValueError("TB incompatible with num_windows")

    # Fold the attention scale into the q rows of the qkv projection, then
    # lay weights out pre-transposed in bf16 for the MXU (f32 accumulation
    # in-kernel).
    qscale = jnp.concatenate([jnp.full((C,), scale, jnp.float32),
                              jnp.ones((2 * C,), jnp.float32)])
    wqkv_t = (params["wqkv"] * qscale[:, None]).T.astype(jnp.bfloat16)      # (C, 3C)
    bqkv_s = (params["bqkv"] * qscale).reshape(1, 3 * C).astype(jnp.float32)
    wproj_t = params["wproj"].T.astype(jnp.bfloat16)                        # (C, C)
    bproj = params["bproj"].reshape(1, C).astype(jnp.float32)

    x_in = x.astype(jnp.bfloat16)                                           # halve x HBM traffic

    kernel = functools.partial(
        _window_attention_kernel,
        tb=TB, n_tok=N, num_heads=num_heads, head_dim=head_dim)

    out = pl.pallas_call(
        kernel,
        out_shape=jax.ShapeDtypeStruct((B_, N, C), x.dtype),
        grid_spec=pltpu.PrefetchScalarGridSpec(
            num_scalar_prefetch=0,
            grid=(B_ // TB,),
            in_specs=[
                pl.BlockSpec((tbb, num_heads, N, N), bias_index_map),        # bias (+mask)
                pl.BlockSpec((TB, N, C), lambda g: (g, 0, 0)),               # x
                pl.BlockSpec((C, 3 * C), lambda g: (0, 0)),                  # Wqkv^T (scaled q)
                pl.BlockSpec((1, 3 * C), lambda g: (0, 0)),                  # bqkv (scaled q)
                pl.BlockSpec((C, C), lambda g: (0, 0)),                      # Wproj^T
                pl.BlockSpec((1, C), lambda g: (0, 0)),                      # bproj
            ],
            out_specs=pl.BlockSpec((TB, N, C), lambda g: (g, 0, 0)),
        ),
        compiler_params=pltpu.CompilerParams(
            dimension_semantics=("parallel",)),                              # v7x: 2 TCs
    )(bias_in, x_in, wqkv_t, bqkv_s, wproj_t, bproj)
    return out


def window_attention_ref(x, params, rel_pos_index, window_size, num_heads, mask=None):
    """Pure-JAX f32 reference mirroring the PyTorch forward exactly."""
    B_, N, C = x.shape
    head_dim = C // num_heads
    scale = head_dim ** (-0.5)

    qkv = x @ params["wqkv"].T + params["bqkv"]
    qkv = qkv.reshape(B_, N, 3, num_heads, head_dim).transpose(2, 0, 3, 1, 4)
    q, k, v = qkv[0], qkv[1], qkv[2]
    q = q * scale
    attn = q @ jnp.swapaxes(k, -2, -1)                                      # (B_, H, N, N)

    rel_bias = params["rel_pos_table"][rel_pos_index.reshape(-1)]
    rel_bias = rel_bias.reshape(N, N, num_heads).transpose(2, 0, 1)
    attn = attn + rel_bias[None]

    if mask is not None:
        nW = mask.shape[0]
        attn = attn.reshape(B_ // nW, nW, num_heads, N, N)
        attn = attn + mask[None, :, None, :, :]
        attn = attn.reshape(-1, num_heads, N, N)

    attn = jax.nn.softmax(attn, axis=-1)
    out = attn @ v                                                           # (B_, H, N, hd)
    out = jnp.swapaxes(out, 1, 2).reshape(B_, N, C)
    return out @ params["wproj"].T + params["bproj"]


if __name__ == "__main__":
    dim = 32
    window_size = (4, 4)
    num_heads = 4
    batch = 2
    num_windows = 4
    N = window_size[0] * window_size[1]
    B_ = batch * num_windows

    key = jax.random.PRNGKey(0)
    kp, kx, km = jax.random.split(key, 3)

    params = init_params(kp, dim, window_size, num_heads)
    rel_pos_index = jnp.asarray(make_relative_position_index(window_size))

    x = jax.random.normal(kx, (B_, N, dim), dtype=jnp.float32)
    # synthetic 0/-100 additive mask like shifted-window attention masks
    mask = jnp.where(jax.random.uniform(km, (num_windows, N, N)) > 0.5, 0.0, -100.0)
    mask = mask.astype(jnp.float32)

    # mask=None path
    out_nomask = window_attention(x, params, rel_pos_index, window_size, num_heads, mask=None)
    jax.block_until_ready(out_nomask)
    ref_nomask = window_attention_ref(x, params, rel_pos_index, window_size, num_heads, mask=None)
    np.testing.assert_allclose(np.asarray(out_nomask), np.asarray(ref_nomask),
                               rtol=2e-2, atol=2e-2)   # bf16 MXU operands, f32 accumulation

    # mask path
    out_mask = window_attention(x, params, rel_pos_index, window_size, num_heads, mask=mask)
    jax.block_until_ready(out_mask)
    ref_mask = window_attention_ref(x, params, rel_pos_index, window_size, num_heads, mask=mask)
    np.testing.assert_allclose(np.asarray(out_mask), np.asarray(ref_mask),
                               rtol=2e-2, atol=2e-2)

    print("KERNEL_OK")
</pallas_src>

<mosaic_0001>
module attributes {stable_mosaic.version = 11 : i64} {
  func.func @_window_attention_kernel(%arg0: i32, %arg1: memref<1x4x16x16xf32, #tpu.memory_space<vmem>>, %arg2: memref<8x16x32xbf16, #tpu.memory_space<vmem>>, %arg3: memref<32x96xbf16, #tpu.memory_space<vmem>>, %arg4: memref<1x96xf32, #tpu.memory_space<vmem>>, %arg5: memref<32x32xbf16, #tpu.memory_space<vmem>>, %arg6: memref<1x32xf32, #tpu.memory_space<vmem>>, %arg7: memref<8x16x32xf32, #tpu.memory_space<vmem>>) attributes {dimension_semantics = [#tpu.dimension_semantics<parallel>], iteration_bounds = array<i64: 1>, scalar_prefetch = 0 : i64, scratch_operands = 0 : i64, tpu.core_type = #tpu.core_type<tc>, window_params = [{pipeline_mode = #tpu.pipeline_mode<synchronous>, transform_indices = @transform_0, window_bounds = array<i64: 1, 4, 16, 16>}, {transform_indices = @transform_1, window_bounds = array<i64: 8, 16, 32>}, {pipeline_mode = #tpu.pipeline_mode<synchronous>, transform_indices = @transform_2, window_bounds = array<i64: 32, 96>}, {pipeline_mode = #tpu.pipeline_mode<synchronous>, transform_indices = @transform_3, window_bounds = array<i64: 1, 96>}, {pipeline_mode = #tpu.pipeline_mode<synchronous>, transform_indices = @transform_4, window_bounds = array<i64: 32, 32>}, {pipeline_mode = #tpu.pipeline_mode<synchronous>, transform_indices = @transform_5, window_bounds = array<i64: 1, 32>}, {transform_indices = @transform_6, window_bounds = array<i64: 8, 16, 32>}]} {
    %c0 = arith.constant 0 : index
    %c0_0 = arith.constant 0 : index
    %c0_1 = arith.constant 0 : index
    %0 = vector.load %arg2[%c0, %c0_0, %c0_1] : memref<8x16x32xbf16, #tpu.memory_space<vmem>>, vector<8x16x32xbf16>
    %1 = vector.shape_cast %0 : vector<8x16x32xbf16> to vector<128x32xbf16>
    %c0_2 = arith.constant 0 : index
    %c0_3 = arith.constant 0 : index
    %2 = vector.load %arg3[%c0_2, %c0_3] : memref<32x96xbf16, #tpu.memory_space<vmem>>, vector<32x96xbf16>
    %cst = arith.constant dense<0.000000e+00> : vector<128x96xf32>
    %3 = tpu.matmul %1, %2, %cst {dimension_numbers = #tpu.dot_dimension_numbers<[1], [0], [0], [1], [0, 0, 1, 1], [], []>} : vector<128x32xbf16>, vector<32x96xbf16>, vector<128x96xf32> -> vector<128x96xf32>
    %c0_4 = arith.constant 0 : index
    %c0_5 = arith.constant 0 : index
    %4 = vector.load %arg4[%c0_4, %c0_5] : memref<1x96xf32, #tpu.memory_space<vmem>>, vector<1x96xf32>
    %5 = vector.broadcast %4 : vector<1x96xf32> to vector<128x96xf32>
    %6 = arith.addf %3, %5 : vector<128x96xf32>
    %c0_6 = arith.constant 0 : index
    %c0_7 = arith.constant 0 : index
    %c0_8 = arith.constant 0 : index
    %c0_9 = arith.constant 0 : index
    %7 = vector.load %arg1[%c0_6, %c0_7, %c0_8, %c0_9] : memref<1x4x16x16xf32, #tpu.memory_space<vmem>>, vector<1x4x16x16xf32>
    %8 = vector.extract_strided_slice %6 {offsets = [0, 0], sizes = [128, 8], strides = [1, 1]} : vector<128x96xf32> to vector<128x8xf32>
    %9 = vector.shape_cast %8 : vector<128x8xf32> to vector<8x16x8xf32>
    %10 = vector.extract_strided_slice %6 {offsets = [0, 32], sizes = [128, 8], strides = [1, 1]} : vector<128x96xf32> to vector<128x8xf32>
    %11 = vector.shape_cast %10 : vector<128x8xf32> to vector<8x16x8xf32>
    %12 = vector.extract_strided_slice %6 {offsets = [0, 64], sizes = [128, 8], strides = [1, 1]} : vector<128x96xf32> to vector<128x8xf32>
    %13 = vector.shape_cast %12 : vector<128x8xf32> to vector<8x16x8xf32>
    %14 = arith.truncf %9 : vector<8x16x8xf32> to vector<8x16x8xbf16>
    %15 = arith.truncf %11 : vector<8x16x8xf32> to vector<8x16x8xbf16>
    "tpu.trace_start"() <{level = 10 : i32, message = "bqd,bkd->bqk"}> : () -> ()
    %cst_10 = arith.constant dense<0.000000e+00> : vector<8x16x16xf32>
    %16 = tpu.matmul %14, %15, %cst_10 {dimension_numbers = #tpu.dot_dimension_numbers<[2], [2], [1], [1], [0, 0, 0, 1, 1, 1], [0], [0]>} : vector<8x16x8xbf16>, vector<8x16x8xbf16>, vector<8x16x16xf32> -> vector<8x16x16xf32>
    "tpu.trace_stop"() : () -> ()
    %17 = vector.extract_strided_slice %7 {offsets = [0, 0, 0, 0], sizes = [1, 1, 16, 16], strides = [1, 1, 1, 1]} : vector<1x4x16x16xf32> to vector<1x1x16x16xf32>
    %18 = vector.shape_cast %17 : vector<1x1x16x16xf32> to vector<1x16x16xf32>
    %19 = vector.broadcast %18 : vector<1x16x16xf32> to vector<8x16x16xf32>
    %20 = arith.addf %16, %19 : vector<8x16x16xf32>
    %cst_11 = arith.constant dense<0xFF800000> : vector<8x16xf32>
    %21 = vector.multi_reduction <maximumf>, %20, %cst_11 [2] : vector<8x16x16xf32> to vector<8x16xf32>
    %22 = vector.shape_cast %21 : vector<8x16xf32> to vector<8x16x1xf32>
    %23 = vector.broadcast %22 : vector<8x16x1xf32> to vector<8x16x16xf32>
    %24 = arith.subf %20, %23 : vector<8x16x16xf32>
    %25 = math.exp %24 : vector<8x16x16xf32>
    %cst_12 = arith.constant dense<0.000000e+00> : vector<8x16xf32>
    %26 = vector.multi_reduction <add>, %25, %cst_12 [2] : vector<8x16x16xf32> to vector<8x16xf32>
    %27 = vector.shape_cast %26 : vector<8x16xf32> to vector<8x16x1xf32>
    %28 = tpu.reciprocal %27 {approx = true} : vector<8x16x1xf32> -> vector<8x16x1xf32>
    %29 = vector.broadcast %28 : vector<8x16x1xf32> to vector<8x16x16xf32>
    %30 = arith.mulf %25, %29 : vector<8x16x16xf32>
    %31 = arith.truncf %30 : vector<8x16x16xf32> to vector<8x16x16xbf16>
    %32 = arith.truncf %13 : vector<8x16x8xf32> to vector<8x16x8xbf16>
    "tpu.trace_start"() <{level = 10 : i32, message = "bqk,bkd->bqd"}> : () -> ()
    %cst_13 = arith.constant dense<0.000000e+00> : vector<8x16x8xf32>
    %33 = tpu.matmul %31, %32, %cst_13 {dimension_numbers = #tpu.dot_dimension_numbers<[2], [1], [1], [2], [0, 0, 0, 1, 1, 2], [0], [0]>} : vector<8x16x16xbf16>, vector<8x16x8xbf16>, vector<8x16x8xf32> -> vector<8x16x8xf32>
    "tpu.trace_stop"() : () -> ()
    %34 = vector.shape_cast %33 : vector<8x16x8xf32> to vector<128x8xf32>
    %35 = arith.truncf %34 : vector<128x8xf32> to vector<128x8xbf16>
    %36 = vector.extract_strided_slice %6 {offsets = [0, 8], sizes = [128, 8], strides = [1, 1]} : vector<128x96xf32> to vector<128x8xf32>
    %37 = vector.shape_cast %36 : vector<128x8xf32> to vector<8x16x8xf32>
    %38 = vector.extract_strided_slice %6 {offsets = [0, 40], sizes = [128, 8], strides = [1, 1]} : vector<128x96xf32> to vector<128x8xf32>
    %39 = vector.shape_cast %38 : vector<128x8xf32> to vector<8x16x8xf32>
    %40 = vector.extract_strided_slice %6 {offsets = [0, 72], sizes = [128, 8], strides = [1, 1]} : vector<128x96xf32> to vector<128x8xf32>
    %41 = vector.shape_cast %40 : vector<128x8xf32> to vector<8x16x8xf32>
    %42 = arith.truncf %37 : vector<8x16x8xf32> to vector<8x16x8xbf16>
    %43 = arith.truncf %39 : vector<8x16x8xf32> to vector<8x16x8xbf16>
    "tpu.trace_start"() <{level = 10 : i32, message = "bqd,bkd->bqk"}> : () -> ()
    %cst_14 = arith.constant dense<0.000000e+00> : vector<8x16x16xf32>
    %44 = tpu.matmul %42, %43, %cst_14 {dimension_numbers = #tpu.dot_dimension_numbers<[2], [2], [1], [1], [0, 0, 0, 1, 1, 1], [0], [0]>} : vector<8x16x8xbf16>, vector<8x16x8xbf16>, vector<8x16x16xf32> -> vector<8x16x16xf32>
    "tpu.trace_stop"() : () -> ()
    %45 = vector.extract_strided_slice %7 {offsets = [0, 1, 0, 0], sizes = [1, 1, 16, 16], strides = [1, 1, 1, 1]} : vector<1x4x16x16xf32> to vector<1x1x16x16xf32>
    %46 = vector.shape_cast %45 : vector<1x1x16x16xf32> to vector<1x16x16xf32>
    %47 = vector.broadcast %46 : vector<1x16x16xf32> to vector<8x16x16xf32>
    %48 = arith.addf %44, %47 : vector<8x16x16xf32>
    %cst_15 = arith.constant dense<0xFF800000> : vector<8x16xf32>
    %49 = vector.multi_reduction <maximumf>, %48, %cst_15 [2] : vector<8x16x16xf32> to vector<8x16xf32>
    %50 = vector.shape_cast %49 : vector<8x16xf32> to vector<8x16x1xf32>
    %51 = vector.broadcast %50 : vector<8x16x1xf32> to vector<8x16x16xf32>
    %52 = arith.subf %48, %51 : vector<8x16x16xf32>
    %53 = math.exp %52 : vector<8x16x16xf32>
    %cst_16 = arith.constant dense<0.000000e+00> : vector<8x16xf32>
    %54 = vector.multi_reduction <add>, %53, %cst_16 [2] : vector<8x16x16xf32> to vector<8x16xf32>
    %55 = vector.shape_cast %54 : vector<8x16xf32> to vector<8x16x1xf32>
    %56 = tpu.reciprocal %55 {approx = true} : vector<8x16x1xf32> -> vector<8x16x1xf32>
    %57 = vector.broadcast %56 : vector<8x16x1xf32> to vector<8x16x16xf32>
    %58 = arith.mulf %53, %57 : vector<8x16x16xf32>
    %59 = arith.truncf %58 : vector<8x16x16xf32> to vector<8x16x16xbf16>
    %60 = arith.truncf %41 : vector<8x16x8xf32> to vector<8x16x8xbf16>
    "tpu.trace_start"() <{level = 10 : i32, message = "bqk,bkd->bqd"}> : () -> ()
    %cst_17 = arith.constant dense<0.000000e+00> : vector<8x16x8xf32>
    %61 = tpu.matmul %59, %60, %cst_17 {dimension_numbers = #tpu.dot_dimension_numbers<[2], [1], [1], [2], [0, 0, 0, 1, 1, 2], [0], [0]>} : vector<8x16x16xbf16>, vector<8x16x8xbf16>, vector<8x16x8xf32> -> vector<8x16x8xf32>
    "tpu.trace_stop"() : () -> ()
    %62 = vector.shape_cast %61 : vector<8x16x8xf32> to vector<128x8xf32>
    %63 = arith.truncf %62 : vector<128x8xf32> to vector<128x8xbf16>
    %64 = vector.extract_strided_slice %6 {offsets = [0, 16], sizes = [128, 8], strides = [1, 1]} : vector<128x96xf32> to vector<128x8xf32>
    %65 = vector.shape_cast %64 : vector<128x8xf32> to vector<8x16x8xf32>
    %66 = vector.extract_strided_slice %6 {offsets = [0, 48], sizes = [128, 8], strides = [1, 1]} : vector<128x96xf32> to vector<128x8xf32>
    %67 = vector.shape_cast %66 : vector<128x8xf32> to vector<8x16x8xf32>
    %68 = vector.extract_strided_slice %6 {offsets = [0, 80], sizes = [128, 8], strides = [1, 1]} : vector<128x96xf32> to vector<128x8xf32>
    %69 = vector.shape_cast %68 : vector<128x8xf32> to vector<8x16x8xf32>
    %70 = arith.truncf %65 : vector<8x16x8xf32> to vector<8x16x8xbf16>
    %71 = arith.truncf %67 : vector<8x16x8xf32> to vector<8x16x8xbf16>
    "tpu.trace_start"() <{level = 10 : i32, message = "bqd,bkd->bqk"}> : () -> ()
    %cst_18 = arith.constant dense<0.000000e+00> : vector<8x16x16xf32>
    %72 = tpu.matmul %70, %71, %cst_18 {dimension_numbers = #tpu.dot_dimension_numbers<[2], [2], [1], [1], [0, 0, 0, 1, 1, 1], [0], [0]>} : vector<8x16x8xbf16>, vector<8x16x8xbf16>, vector<8x16x16xf32> -> vector<8x16x16xf32>
    "tpu.trace_stop"() : () -> ()
    %73 = vector.extract_strided_slice %7 {offsets = [0, 2, 0, 0], sizes = [1, 1, 16, 16], strides = [1, 1, 1, 1]} : vector<1x4x16x16xf32> to vector<1x1x16x16xf32>
    %74 = vector.shape_cast %73 : vector<1x1x16x16xf32> to vector<1x16x16xf32>
    %75 = vector.broadcast %74 : vector<1x16x16xf32> to vector<8x16x16xf32>
    %76 = arith.addf %72, %75 : vector<8x16x16xf32>
    %cst_19 = arith.constant dense<0xFF800000> : vector<8x16xf32>
    %77 = vector.multi_reduction <maximumf>, %76, %cst_19 [2] : vector<8x16x16xf32> to vector<8x16xf32>
    %78 = vector.shape_cast %77 : vector<8x16xf32> to vector<8x16x1xf32>
    %79 = vector.broadcast %78 : vector<8x16x1xf32> to vector<8x16x16xf32>
    %80 = arith.subf %76, %79 : vector<8x16x16xf32>
    %81 = math.exp %80 : vector<8x16x16xf32>
    %cst_20 = arith.constant dense<0.000000e+00> : vector<8x16xf32>
    %82 = vector.multi_reduction <add>, %81, %cst_20 [2] : vector<8x16x16xf32> to vector<8x16xf32>
    %83 = vector.shape_cast %82 : vector<8x16xf32> to vector<8x16x1xf32>
    %84 = tpu.reciprocal %83 {approx = true} : vector<8x16x1xf32> -> vector<8x16x1xf32>
    %85 = vector.broadcast %84 : vector<8x16x1xf32> to vector<8x16x16xf32>
    %86 = arith.mulf %81, %85 : vector<8x16x16xf32>
    %87 = arith.truncf %86 : vector<8x16x16xf32> to vector<8x16x16xbf16>
    %88 = arith.truncf %69 : vector<8x16x8xf32> to vector<8x16x8xbf16>
    "tpu.trace_start"() <{level = 10 : i32, message = "bqk,bkd->bqd"}> : () -> ()
    %cst_21 = arith.constant dense<0.000000e+00> : vector<8x16x8xf32>
    %89 = tpu.matmul %87, %88, %cst_21 {dimension_numbers = #tpu.dot_dimension_numbers<[2], [1], [1], [2], [0, 0, 0, 1, 1, 2], [0], [0]>} : vector<8x16x16xbf16>, vector<8x16x8xbf16>, vector<8x16x8xf32> -> vector<8x16x8xf32>
    "tpu.trace_stop"() : () -> ()
    %90 = vector.shape_cast %89 : vector<8x16x8xf32> to vector<128x8xf32>
    %91 = arith.truncf %90 : vector<128x8xf32> to vector<128x8xbf16>
    %92 = vector.extract_strided_slice %6 {offsets = [0, 24], sizes = [128, 8], strides = [1, 1]} : vector<128x96xf32> to vector<128x8xf32>
    %93 = vector.shape_cast %92 : vector<128x8xf32> to vector<8x16x8xf32>
    %94 = vector.extract_strided_slice %6 {offsets = [0, 56], sizes = [128, 8], strides = [1, 1]} : vector<128x96xf32> to vector<128x8xf32>
    %95 = vector.shape_cast %94 : vector<128x8xf32> to vector<8x16x8xf32>
    %96 = vector.extract_strided_slice %6 {offsets = [0, 88], sizes = [128, 8], strides = [1, 1]} : vector<128x96xf32> to vector<128x8xf32>
    %97 = vector.shape_cast %96 : vector<128x8xf32> to vector<8x16x8xf32>
    %98 = arith.truncf %93 : vector<8x16x8xf32> to vector<8x16x8xbf16>
    %99 = arith.truncf %95 : vector<8x16x8xf32> to vector<8x16x8xbf16>
    "tpu.trace_start"() <{level = 10 : i32, message = "bqd,bkd->bqk"}> : () -> ()
    %cst_22 = arith.constant dense<0.000000e+00> : vector<8x16x16xf32>
    %100 = tpu.matmul %98, %99, %cst_22 {dimension_numbers = #tpu.dot_dimension_numbers<[2], [2], [1], [1], [0, 0, 0, 1, 1, 1], [0], [0]>} : vector<8x16x8xbf16>, vector<8x16x8xbf16>, vector<8x16x16xf32> -> vector<8x16x16xf32>
    "tpu.trace_stop"() : () -> ()
    %101 = vector.extract_strided_slice %7 {offsets = [0, 3, 0, 0], sizes = [1, 1, 16, 16], strides = [1, 1, 1, 1]} : vector<1x4x16x16xf32> to vector<1x1x16x16xf32>
    %102 = vector.shape_cast %101 : vector<1x1x16x16xf32> to vector<1x16x16xf32>
    %103 = vector.broadcast %102 : vector<1x16x16xf32> to vector<8x16x16xf32>
    %104 = arith.addf %100, %103 : vector<8x16x16xf32>
    %cst_23 = arith.constant dense<0xFF800000> : vector<8x16xf32>
    %105 = vector.multi_reduction <maximumf>, %104, %cst_23 [2] : vector<8x16x16xf32> to vector<8x16xf32>
    %106 = vector.shape_cast %105 : vector<8x16xf32> to vector<8x16x1xf32>
    %107 = vector.broadcast %106 : vector<8x16x1xf32> to vector<8x16x16xf32>
    %108 = arith.subf %104, %107 : vector<8x16x16xf32>
    %109 = math.exp %108 : vector<8x16x16xf32>
    %cst_24 = arith.constant dense<0.000000e+00> : vector<8x16xf32>
    %110 = vector.multi_reduction <add>, %109, %cst_24 [2] : vector<8x16x16xf32> to vector<8x16xf32>
    %111 = vector.shape_cast %110 : vector<8x16xf32> to vector<8x16x1xf32>
    %112 = tpu.reciprocal %111 {approx = true} : vector<8x16x1xf32> -> vector<8x16x1xf32>
    %113 = vector.broadcast %112 : vector<8x16x1xf32> to vector<8x16x16xf32>
    %114 = arith.mulf %109, %113 : vector<8x16x16xf32>
    %115 = arith.truncf %114 : vector<8x16x16xf32> to vector<8x16x16xbf16>
    %116 = arith.truncf %97 : vector<8x16x8xf32> to vector<8x16x8xbf16>
    "tpu.trace_start"() <{level = 10 : i32, message = "bqk,bkd->bqd"}> : () -> ()
    %cst_25 = arith.constant dense<0.000000e+00> : vector<8x16x8xf32>
    %117 = tpu.matmul %115, %116, %cst_25 {dimension_numbers = #tpu.dot_dimension_numbers<[2], [1], [1], [2], [0, 0, 0, 1, 1, 2], [0], [0]>} : vector<8x16x16xbf16>, vector<8x16x8xbf16>, vector<8x16x8xf32> -> vector<8x16x8xf32>
    "tpu.trace_stop"() : () -> ()
    %118 = vector.shape_cast %117 : vector<8x16x8xf32> to vector<128x8xf32>
    %119 = arith.truncf %118 : vector<128x8xf32> to vector<128x8xbf16>
    %120 = tpu.concatenate %35, %63, %91, %119 in 1 : vector<128x8xbf16>, vector<128x8xbf16>, vector<128x8xbf16>, vector<128x8xbf16> -> vector<128x32xbf16>
    %c0_26 = arith.constant 0 : index
    %c0_27 = arith.constant 0 : index
    %121 = vector.load %arg5[%c0_26, %c0_27] : memref<32x32xbf16, #tpu.memory_space<vmem>>, vector<32x32xbf16>
    %cst_28 = arith.constant dense<0.000000e+00> : vector<128x32xf32>
    %122 = tpu.matmul %120, %121, %cst_28 {dimension_numbers = #tpu.dot_dimension_numbers<[1], [0], [0], [1], [0, 0, 1, 1], [], []>} : vector<128x32xbf16>, vector<32x32xbf16>, vector<128x32xf32> -> vector<128x32xf32>
    %c0_29 = arith.constant 0 : index
    %c0_30 = arith.constant 0 : index
    %123 = vector.load %arg6[%c0_29, %c0_30] : memref<1x32xf32, #tpu.memory_space<vmem>>, vector<1x32xf32>
    %124 = vector.broadcast %123 : vector<1x32xf32> to vector<128x32xf32>
    %125 = arith.addf %122, %124 : vector<128x32xf32>
    %126 = vector.shape_cast %125 : vector<128x32xf32> to vector<8x16x32xf32>
    %c0_31 = arith.constant 0 : index
    %c0_32 = arith.constant 0 : index
    %c0_33 = arith.constant 0 : index
    %127 = vector.load %arg7[%c0_31, %c0_32, %c0_33] : memref<8x16x32xf32, #tpu.memory_space<vmem>>, vector<8x16x32xf32>
    tpu.vector_store %arg7[%c0_31, %c0_32, %c0_33], %126 {strides = array<i32>} : memref<8x16x32xf32, #tpu.memory_space<vmem>>, vector<8x16x32xf32>,
    return
  }
  func.func @transform_0(%arg0: i32) -> (i32, i32, i32, i32) {
    %c0_i32 = arith.constant 0 : i32
    %c0_i32_0 = arith.constant 0 : i32
    %c0_i32_1 = arith.constant 0 : i32
    %c0_i32_2 = arith.constant 0 : i32
    %c0_i32_3 = arith.constant 0 : i32
    return %c0_i32, %c0_i32_0, %c0_i32_1, %c0_i32_2 : i32, i32, i32, i32
  }
  func.func @transform_1(%arg0: i32) -> (i32, i32, i32) {
    %c0_i32 = arith.constant 0 : i32
    %c0_i32_0 = arith.constant 0 : i32
    %c0_i32_1 = arith.constant 0 : i32
    return %arg0, %c0_i32, %c0_i32_0 : i32, i32, i32
  }
  func.func @transform_2(%arg0: i32) -> (i32, i32) {
    %c0_i32 = arith.constant 0 : i32
    %c0_i32_0 = arith.constant 0 : i32
    %c0_i32_1 = arith.constant 0 : i32
    return %c0_i32, %c0_i32_0 : i32, i32
  }
  func.func @transform_3(%arg0: i32) -> (i32, i32) {
    %c0_i32 = arith.constant 0 : i32
    %c0_i32_0 = arith.constant 0 : i32
    %c0_i32_1 = arith.constant 0 : i32
    return %c0_i32, %c0_i32_0 : i32, i32
  }
  func.func @transform_4(%arg0: i32) -> (i32, i32) {
    %c0_i32 = arith.constant 0 : i32
    %c0_i32_0 = arith.constant 0 : i32
    %c0_i32_1 = arith.constant 0 : i32
    return %c0_i32, %c0_i32_0 : i32, i32
  }
  func.func @transform_5(%arg0: i32) -> (i32, i32) {
    %c0_i32 = arith.constant 0 : i32
    %c0_i32_0 = arith.constant 0 : i32
    %c0_i32_1 = arith.constant 0 : i32
    return %c0_i32, %c0_i32_0 : i32, i32
  }
  func.func @transform_6(%arg0: i32) -> (i32, i32, i32) {
    %c0_i32 = arith.constant 0 : i32
    %c0_i32_0 = arith.constant 0 : i32
    %c0_i32_1 = arith.constant 0 : i32
    return %arg0, %c0_i32, %c0_i32_0 : i32, i32, i32
  }
}

</mosaic_0001>

<llo_original>
// kernel: tpu_custom_call.1
$region0: #{tpu_custom_call.1}
  #allocation0 [shape = 'u32[]', space=smem, size = 0x4, offset = 0x4, fixed_abs, tag = 'smem constant byte address 0x4 - core index']
  #allocation1 [shape = 'u32[144,128]{1,0:T(1,128)}', space=vmem, size = 0x12000, scoped, tag = 'internal scratch']
  %s0 = inlined_call_operand.hbm [shape: f32[1,4,16,16], index: 0, kind: input, shape index: {}]
  %s1 = inlined_call_operand.hbm [shape: bf16[8,16,32], index: 1, kind: input, shape index: {}]
  %s2 = inlined_call_operand.hbm [shape: bf16[32,96], index: 2, kind: input, shape index: {}]
  %s3 = inlined_call_operand.vmem [shape: f32[1,96], index: 3, kind: input, shape index: {}]
  %s4 = inlined_call_operand.hbm [shape: bf16[32,32], index: 4, kind: input, shape index: {}]
  %s5 = inlined_call_operand.vmem [shape: f32[1,32], index: 5, kind: input, shape index: {}]
  %s6 = inlined_call_operand.hbm [shape: f32[8,16,32], index: 6, kind: output, shape index: {}]
  %s7 = sld [smem:[#allocation0]]
  $region50: #{tpu_custom_call.1} parent=0
    _
  %s9 = ssub.s32 1, %s7
  %s10 = scalar_select 0, %s9, %s7
  $region1: #{tpu_custom_call.1} parent=0
    #allocation2 [shape = 'u8[32768]{0}', space=vmem, size = 0x8000, scoped, tag = 'input window, operand 0, single buffered']
    #allocation3 [shape = 's32[1]{0}', space=sflag, size = 0x4, scoped, tag = 'scoped memory for tpu_custom_call.1']
    #allocation4 [shape = 's32[1]{0}', space=sflag, size = 0x4, scoped, tag = 'scoped memory for tpu_custom_call.1']
    #allocation5 [shape = 'u8[32768]{0}', space=vmem, size = 0x8000, scoped, tag = 'input window, operand 1, single buffered']
    #allocation6 [shape = 's32[1]{0}', space=sflag, size = 0x4, scoped, tag = 'scoped memory for tpu_custom_call.1']
    #allocation7 [shape = 'u8[8192]{0}', space=vmem, size = 0x2000, scoped, tag = 'input window, operand 2, single buffered']
    #allocation8 [shape = 'u8[8192]{0}', space=vmem, size = 0x2000, scoped, tag = 'input window, operand 4, single buffered']
    #allocation9 [shape = 's32[1]{0}', space=sflag, size = 0x4, scoped, tag = 'scoped memory for tpu_custom_call.1']
    #allocation10 [shape = 'u8[65536]{0}', space=vmem, size = 0x10000, scoped, tag = 'output window, operand 0, single buffered']
    %11 = vsyncpa [#allocation3], 0
    %12 = vsyncpa [#allocation6], 0
    %13 = vsyncpa [#allocation9], 0
    %14 = vsyncpa [#allocation4], 0
    // Predicated region
    $region2: #{tpu_custom_call.1} parent=1 // pred_check
      _
    $region3: #{tpu_custom_call.1} parent=1 // pred_check_branch
      %16 = sbr.rel (0) target = $region5
    $region4: #{tpu_custom_call.1} parent=1 // pred_region
      %s18 = ssub.s32 1024, 1024
      %19 = vsyncadd [#allocation3], %s18
      %s20 = sshll.u32 [#allocation2], 4
      %s21 = int_to_ptr.vmem [resolvable:$true] %s20
      %26 = dma.hbm_to_vmem [thread:$0]  %s0, 1024, %s21, [#allocation3], 128, 128, 8
    $region5: #{tpu_custom_call.1} parent=1 // pred_fallthru
      _
    // Predicated region
    $region6: #{tpu_custom_call.1} parent=1 // pred_check
      _
    $region7: #{tpu_custom_call.1} parent=1 // pred_check_branch
      %28 = sbr.rel (0) target = $region9
    $region8: #{tpu_custom_call.1} parent=1 // pred_region
      %s30 = ssub.s32 1024, 1024
      %31 = vsyncadd [#allocation6], %s30
      %s32 = sshll.u32 [#allocation5], 4
      %s33 = int_to_ptr.vmem [resolvable:$true] %s32
      %38 = dma.hbm_to_vmem [thread:$0]  %s1, 1024, %s33, [#allocation6], 64, 64, 4
    $region9: #{tpu_custom_call.1} parent=1 // pred_fallthru
      _
    // Predicated region
    $region10: #{tpu_custom_call.1} parent=1 // pred_check
      _
    $region11: #{tpu_custom_call.1} parent=1 // pred_check_branch
      %40 = sbr.rel (0) target = $region13
    $region12: #{tpu_custom_call.1} parent=1 // pred_region
      %s42 = ssub.s32 256, 256
      %43 = vsyncadd [#allocation6], %s42
      %s44 = sshll.u32 [#allocation7], 4
      %s45 = int_to_ptr.vmem [resolvable:$true] %s44
      %50 = dma.hbm_to_vmem [thread:$0]  %s2, 256, %s45, [#allocation6], 64, 64, 4
    $region13: #{tpu_custom_call.1} parent=1 // pred_fallthru
      _
    // Predicated region
    $region14: #{tpu_custom_call.1} parent=1 // pred_check
      _
    $region15: #{tpu_custom_call.1} parent=1 // pred_check_branch
      %52 = sbr.rel (0) target = $region17
    $region16: #{tpu_custom_call.1} parent=1 // pred_region
      _
    $region17: #{tpu_custom_call.1} parent=1 // pred_fallthru
      _
    // Predicated region
    $region18: #{tpu_custom_call.1} parent=1 // pred_check
      _
    $region19: #{tpu_custom_call.1} parent=1 // pred_check_branch
      %54 = sbr.rel (0) target = $region21
    $region20: #{tpu_custom_call.1} parent=1 // pred_region
      %s56 = ssub.s32 256, 256
      %57 = vsyncadd [#allocation9], %s56
      %s58 = sshll.u32 [#allocation8], 4
      %s59 = int_to_ptr.vmem [resolvable:$true] %s58
      %64 = dma.hbm_to_vmem [thread:$0]  %s4, 256, %s59, [#allocation9], 64, 64, 4
    $region21: #{tpu_custom_call.1} parent=1 // pred_fallthru
      _
    // Predicated region
    $region22: #{tpu_custom_call.1} parent=1 // pred_check
      _
    $region23: #{tpu_custom_call.1} parent=1 // pred_check_branch
      %66 = sbr.rel (0) target = $region25
    $region24: #{tpu_custom_call.1} parent=1 // pred_region
      _
    $region25: #{tpu_custom_call.1} parent=1 // pred_fallthru
      _
    // Predicated region
    $region26: #{tpu_custom_call.1} parent=1 // pred_check
      _
    $region27: #{tpu_custom_call.1} parent=1 // pred_check_branch
      %68 = sbr.rel (0) target = $region29
    $region28: #{tpu_custom_call.1} parent=1 // pred_region
      %69 = dma.done [#allocation3], 1024
    $region29: #{tpu_custom_call.1} parent=1 // pred_fallthru
      _
    // Predicated region
    $region30: #{tpu_custom_call.1} parent=1 // pred_check
      _
    $region31: #{tpu_custom_call.1} parent=1 // pred_check_branch
      %71 = sbr.rel (0) target = $region33
    $region32: #{tpu_custom_call.1} parent=1 // pred_region
      %72 = dma.done [#allocation6], 1024
    $region33: #{tpu_custom_call.1} parent=1 // pred_fallthru
      _
    // Predicated region
    $region34: #{tpu_custom_call.1} parent=1 // pred_check
      _
    $region35: #{tpu_custom_call.1} parent=1 // pred_check_branch
      %74 = sbr.rel (0) target = $region37
    $region36: #{tpu_custom_call.1} parent=1 // pred_region
      %75 = dma.done [#allocation6], 256
    $region37: #{tpu_custom_call.1} parent=1 // pred_fallthru
      _
    // Predicated region
    $region38: #{tpu_custom_call.1} parent=1 // pred_check
      _
    $region39: #{tpu_custom_call.1} parent=1 // pred_check_branch
      %77 = sbr.rel (0) target = $region41
    $region40: #{tpu_custom_call.1} parent=1 // pred_region
      %78 = dma.done [#allocation9], 256
    $region41: #{tpu_custom_call.1} parent=1 // pred_fallthru
      _
    %v80 = vld [vmem:[#allocation5] sm:$0xf]
    %v81 = vld [vmem:[#allocation5 + $0x4] sm:$0xf]
    %v82 = vld [vmem:[#allocation5 + $0x8] sm:$0xf]
    %v83 = vld [vmem:[#allocation5 + $0xc] sm:$0xf]
    %v84 = vld [vmem:[#allocation5 + $0x10] sm:$0xf]
    %v85 = vld [vmem:[#allocation5 + $0x14] sm:$0xf]
    %v86 = vld [vmem:[#allocation5 + $0x18] sm:$0xf]
    %v87 = vld [vmem:[#allocation5 + $0x1c] sm:$0xf]
    %v88 = vld [vmem:[#allocation5 + $0x20] sm:$0xf]
    %v89 = vld [vmem:[#allocation5 + $0x24] sm:$0xf]
    %v90 = vld [vmem:[#allocation5 + $0x28] sm:$0xf]
    %v91 = vld [vmem:[#allocation5 + $0x2c] sm:$0xf]
    %v92 = vld [vmem:[#allocation5 + $0x30] sm:$0xf]
    %v93 = vld [vmem:[#allocation5 + $0x34] sm:$0xf]
    %v94 = vld [vmem:[#allocation5 + $0x38] sm:$0xf]
    %v95 = vld [vmem:[#allocation5 + $0x3c] sm:$0xf]
    %v96 = vld [vmem:[#allocation7] sm:$0xf]
    %v97 = vld [vmem:[#allocation7 + $0x4] sm:$0xf]
    %v98 = vld [vmem:[#allocation7 + $0x8] sm:$0xf]
    %v99 = vld [vmem:[#allocation7 + $0xc] sm:$0xf]
    %v100 = vld [vmem:[%s3] sm:$0x1]
    %v102 = vlaneseq
    %v103 = vshrl.u32 %v102, 7
    %v104 = vsub.s32 0, %v103
    %v105 = vrot.slane %v100, %v104
    %v123 = vunpack.c.l.b16 %v80
    %v124 = vunpack.c.l.b16 %v81
    %v125 = vunpack.c.l.b16 %v82
    %v126 = vunpack.c.l.b16 %v83
    %v127 = vunpack.c.l.b16 %v84
    %v128 = vunpack.c.l.b16 %v85
    %v129 = vunpack.c.l.b16 %v86
    %v130 = vunpack.c.l.b16 %v87
    %v131 = vunpack.c.l.b16 %v88
    %v132 = vunpack.c.l.b16 %v89
    %v133 = vunpack.c.l.b16 %v90
    %v134 = vunpack.c.l.b16 %v91
    %v135 = vunpack.c.l.b16 %v92
    %v136 = vunpack.c.l.b16 %v93
    %v137 = vunpack.c.l.b16 %v94
    %v138 = vunpack.c.l.b16 %v95
    %v139 = vpack.c.b16 %v124, %v123
    %v140 = vpack.c.b16 %v126, %v125
    %v141 = vpack.c.b16 %v128, %v127
    %v142 = vpack.c.b16 %v130, %v129
    %v143 = vpack.c.b16 %v132, %v131
    %v144 = vpack.c.b16 %v134, %v133
    %v145 = vpack.c.b16 %v136, %v135
    %v146 = vpack.c.b16 %v138, %v137
    %v151 = vunpack.c.l.b16 %v96
    %v152 = vunpack.c.l.b16 %v97
    %v153 = vunpack.c.l.b16 %v98
    %v154 = vunpack.c.l.b16 %v99
    %v155 = vpack.c.b16 %v152, %v151
    %v156 = vpack.c.b16 %v154, %v153
    %vm159 = vcmask 261120
    %v161 = vsel %vm159, %v139, 0
    %v164 = vsel %vm159, %v140, 0
    %v167 = vsel %vm159, %v141, 0
    %v170 = vsel %vm159, %v142, 0
    %v173 = vsel %vm159, %v143, 0
    %v176 = vsel %vm159, %v144, 0
    %v179 = vsel %vm159, %v145, 0
    %v182 = vsel %vm159, %v146, 0
    %184 = vmatprep.subr.bf16.mxu0 0
    %185 = vmatpush1.bf16.msra.mxu0 %v155
    %186 = vmatprep.subr.bf16.mxu0 0
    %187 = vmatpush1.bf16.msra.mxu0 %v156
    %188 = vmatprep.subr.bf16.mxu0 0
    %189 = vmatpush1.bf16.msra.mxu0 0
    %190 = vmatprep.subr.bf16.mxu0 0
    %191 = vmatpush1.bf16.msra.mxu0 0
    %192 = vmatprep.subr.bf16.mxu0 0
    %193 = vmatpush1.bf16.msra.mxu0 0
    %194 = vmatprep.subr.bf16.mxu0 0
    %195 = vmatpush1.bf16.msra.mxu0 0
    %196 = vmatprep.subr.bf16.mxu0 0
    %197 = vmatpush1.bf16.msra.mxu0 0
    %198 = vmatprep.subr.bf16.mxu0 0
    %199 = vmatpush1.bf16.msra.mxu0 0
    %200 = vmatprep.subr.bf16.mxu0 0
    %201 = vmatpush1.bf16.msra.mxu0 0
    %202 = vmatprep.subr.bf16.mxu0 0
    %203 = vmatpush1.bf16.msra.mxu0 0
    %204 = vmatprep.subr.bf16.mxu0 0
    %205 = vmatpush1.bf16.msra.mxu0 0
    %206 = vmatprep.subr.bf16.mxu0 0
    %207 = vmatpush1.bf16.msra.mxu0 0
    %208 = vmatprep.subr.bf16.mxu0 0
    %209 = vmatpush1.bf16.msra.mxu0 0
    %210 = vmatprep.subr.bf16.mxu0 0
    %211 = vmatpush1.bf16.msra.mxu0 0
    %212 = vmatprep.subr.bf16.mxu0 0
    %213 = vmatpush1.bf16.msra.mxu0 0
    %214 = vmatprep.subr.bf16.mxu0 0
    %215 = vmatpush1.bf16.msra.mxu0 0
    %216 = vmatprep.mubr.bf16.mxu0 0
    %217 = vmatmul.mubr.bf16.gmra.mrb[0].mxu0 %v161
    %v218 = vpop.f32.mrb[0].mxu0
    %v219 = vadd.f32 %v105, %v218
    %v220 = vpop.f32.mrb[0].mxu0
    %v221 = vpop.f32.mrb[0].mxu0
    %v222 = vadd.f32 %v105, %v221
    %v223 = vpop.f32.mrb[0].mxu0
    %224 = vmatprep.mubr.bf16.mxu0 0
    %225 = vmatmul.mubr.bf16.gmra.mrb[0].mxu0 %v164
    %v226 = vpop.f32.mrb[0].mxu0
    %v227 = vadd.f32 %v105, %v226
    %v228 = vpop.f32.mrb[0].mxu0
    %v229 = vpop.f32.mrb[0].mxu0
    %v230 = vadd.f32 %v105, %v229
    %v231 = vpop.f32.mrb[0].mxu0
    %232 = vmatprep.mubr.bf16.mxu0 0
    %233 = vmatmul.mubr.bf16.gmra.mrb[0].mxu0 %v167
    %v234 = vpop.f32.mrb[0].mxu0
    %v235 = vadd.f32 %v105, %v234
    %v236 = vpop.f32.mrb[0].mxu0
    %v237 = vpop.f32.mrb[0].mxu0
    %v238 = vadd.f32 %v105, %v237
    %v239 = vpop.f32.mrb[0].mxu0
    %240 = vmatprep.mubr.bf16.mxu0 0
    %241 = vmatmul.mubr.bf16.gmra.mrb[0].mxu0 %v170
    %v242 = vpop.f32.mrb[0].mxu0
    %v243 = vadd.f32 %v105, %v242
    %v244 = vpop.f32.mrb[0].mxu0
    %v245 = vpop.f32.mrb[0].mxu0
    %v246 = vadd.f32 %v105, %v245
    %v247 = vpop.f32.mrb[0].mxu0
    %248 = vmatprep.mubr.bf16.mxu0 0
    %249 = vmatmul.mubr.bf16.gmra.mrb[0].mxu0 %v173
    %v250 = vpop.f32.mrb[0].mxu0
    %v251 = vadd.f32 %v105, %v250
    %v252 = vpop.f32.mrb[0].mxu0
    %v253 = vpop.f32.mrb[0].mxu0
    %v254 = vadd.f32 %v105, %v253
    %v255 = vpop.f32.mrb[0].mxu0
    %256 = vmatprep.mubr.bf16.mxu0 0
    %257 = vmatmul.mubr.bf16.gmra.mrb[0].mxu0 %v176
    %v258 = vpop.f32.mrb[0].mxu0
    %v259 = vadd.f32 %v105, %v258
    %v260 = vpop.f32.mrb[0].mxu0
    %v261 = vpop.f32.mrb[0].mxu0
    %v262 = vadd.f32 %v105, %v261
    %v263 = vpop.f32.mrb[0].mxu0
    %264 = vmatprep.mubr.bf16.mxu0 0
    %265 = vmatmul.mubr.bf16.gmra.mrb[0].mxu0 %v179
    %v266 = vpop.f32.mrb[0].mxu0
    %v267 = vadd.f32 %v105, %v266
    %v268 = vpop.f32.mrb[0].mxu0
    %v269 = vpop.f32.mrb[0].mxu0
    %v270 = vadd.f32 %v105, %v269
    %v271 = vpop.f32.mrb[0].mxu0
    %272 = vmatprep.mubr.bf16.mxu0 0
    %273 = vmatmul.mubr.bf16.gmra.mrb[0].mxu0 %v182
    %v274 = vpop.f32.mrb[0].mxu0
    %v275 = vadd.f32 %v105, %v274
    %v276 = vpop.f32.mrb[0].mxu0
    %v277 = vpop.f32.mrb[0].mxu0
    %v278 = vadd.f32 %v105, %v277
    %v279 = vpop.f32.mrb[0].mxu0
    %280 = vdwg.mxu0
    %v281 = vld [vmem:[#allocation2] sm:$0xff]
    %v282 = vld [vmem:[#allocation2 + $0x8] sm:$0xff]
    %v283 = vld [vmem:[#allocation2 + $0x10] sm:$0xff]
    %v284 = vld [vmem:[#allocation2 + $0x18] sm:$0xff]
    %v285 = vld [vmem:[#allocation2 + $0x20] sm:$0xff]
    %v286 = vld [vmem:[#allocation2 + $0x28] sm:$0xff]
    %v287 = vld [vmem:[#allocation2 + $0x30] sm:$0xff]
    %v288 = vld [vmem:[#allocation2 + $0x38] sm:$0xff]
    %v289 = vpack.c.bf16 %v222, %v219
    %v290 = vpack.c.bf16 %v230, %v227
    %v291 = vpack.c.bf16 %v238, %v235
    %v292 = vpack.c.bf16 %v246, %v243
    %v293 = vpack.c.bf16 %v254, %v251
    %v294 = vpack.c.bf16 %v262, %v259
    %v295 = vpack.c.bf16 %v270, %v267
    %v296 = vpack.c.bf16 %v278, %v275
    %298 = vrot.lane.b32.xlu0 %v289, 96
    %v299 = vpop.permute.xlu0 %298
    %vm300 = vcmask 64512
    %v302 = vsel %vm300, %v289, 0
    %v305 = vsel %vm300, %v299, 0
    %307 = vmatprep.subr.bf16.mxu0 0
    %308 = vmatpush1.bf16.xpose.msra.mxu0 %v305
    %309 = vmatprep.subr.bf16.mxu0 0
    %310 = vmatpush1.bf16.xpose.msra.mxu0 0
    %311 = vmatprep.subr.bf16.mxu0 0
    %312 = vmatpush1.bf16.xpose.msra.mxu0 0
    %313 = vmatprep.subr.bf16.mxu0 0
    %314 = vmatpush1.bf16.xpose.msra.mxu0 0
    %315 = vmatprep.subr.bf16.mxu0 0
    %316 = vmatpush1.bf16.xpose.msra.mxu0 0
    %317 = vmatprep.subr.bf16.mxu0 0
    %318 = vmatpush1.bf16.xpose.msra.mxu0 0
    %319 = vmatprep.subr.bf16.mxu0 0
    %320 = vmatpush1.bf16.xpose.msra.mxu0 0
    %321 = vmatprep.subr.bf16.mxu0 0
    %322 = vmatpush1.bf16.xpose.msra.mxu0 0
    %323 = vmatprep.subr.bf16.mxu0 0
    %324 = vmatpush1.bf16.xpose.msra.mxu0 0
    %325 = vmatprep.subr.bf16.mxu0 0
    %326 = vmatpush1.bf16.xpose.msra.mxu0 0
    %327 = vmatprep.subr.bf16.mxu0 0
    %328 = vmatpush1.bf16.xpose.msra.mxu0 0
    %329 = vmatprep.subr.bf16.mxu0 0
    %330 = vmatpush1.bf16.xpose.msra.mxu0 0
    %331 = vmatprep.subr.bf16.mxu0 0
    %332 = vmatpush1.bf16.xpose.msra.mxu0 0
    %333 = vmatprep.subr.bf16.mxu0 0
    %334 = vmatpush1.bf16.xpose.msra.mxu0 0
    %335 = vmatprep.subr.bf16.mxu0 0
    %336 = vmatpush1.bf16.xpose.msra.mxu0 0
    %337 = vmatprep.subr.bf16.mxu0 0
    %338 = vmatpush1.bf16.xpose.msra.mxu0 0
    %339 = vmatprep.mubr.bf16.mxu0 0
    %340 = vmatmul.mubr.bf16.gmra.mrb[0].mxu0 %v302
    %v341 = vpop.f32.mrb[0].mxu0
    %v342 = vadd.f32 %v281, %v341
    %v343 = vpop.f32.mrb[0].mxu0
    %v344 = vpop.f32.mrb[0].mxu0
    %v345 = vadd.f32 %v282, %v344
    %v346 = vpop.f32.mrb[0].mxu0
    %347 = vdwg.mxu0
    %349 = vrot.lane.b32.xlu0 %v290, 96
    %v350 = vpop.permute.xlu0 %349
    %v352 = vsel %vm300, %v290, 0
    %v355 = vsel %vm300, %v350, 0
    %357 = vmatprep.subr.bf16.mxu0 0
    %358 = vmatpush1.bf16.xpose.msra.mxu0 %v355
    %359 = vmatprep.subr.bf16.mxu0 0
    %360 = vmatpush1.bf16.xpose.msra.mxu0 0
    %361 = vmatprep.subr.bf16.mxu0 0
    %362 = vmatpush1.bf16.xpose.msra.mxu0 0
    %363 = vmatprep.subr.bf16.mxu0 0
    %364 = vmatpush1.bf16.xpose.msra.mxu0 0
    %365 = vmatprep.subr.bf16.mxu0 0
    %366 = vmatpush1.bf16.xpose.msra.mxu0 0
    %367 = vmatprep.subr.bf16.mxu0 0
    %368 = vmatpush1.bf16.xpose.msra.mxu0 0
    %369 = vmatprep.subr.bf16.mxu0 0
    %370 = vmatpush1.bf16.xpose.msra.mxu0 0
    %371 = vmatprep.subr.bf16.mxu0 0
    %372 = vmatpush1.bf16.xpose.msra.mxu0 0
    %373 = vmatprep.subr.bf16.mxu0 0
    %374 = vmatpush1.bf16.xpose.msra.mxu0 0
    %375 = vmatprep.subr.bf16.mxu0 0
    %376 = vmatpush1.bf16.xpose.msra.mxu0 0
    %377 = vmatprep.subr.bf16.mxu0 0
    %378 = vmatpush1.bf16.xpose.msra.mxu0 0
    %379 = vmatprep.subr.bf16.mxu0 0
    %380 = vmatpush1.bf16.xpose.msra.mxu0 0
    %381 = vmatprep.subr.bf16.mxu0 0
    %382 = vmatpush1.bf16.xpose.msra.mxu0 0
    %383 = vmatprep.subr.bf16.mxu0 0
    %384 = vmatpush1.bf16.xpose.msra.mxu0 0
    %385 = vmatprep.subr.bf16.mxu0 0
    %386 = vmatpush1.bf16.xpose.msra.mxu0 0
    %387 = vmatprep.subr.bf16.mxu0 0
    %388 = vmatpush1.bf16.xpose.msra.mxu0 0
    %389 = vmatprep.mubr.bf16.mxu0 0
    %390 = vmatmul.mubr.bf16.gmra.mrb[0].mxu0 %v352
    %v391 = vpop.f32.mrb[0].mxu0
    %v392 = vadd.f32 %v281, %v391
    %v393 = vpop.f32.mrb[0].mxu0
    %v394 = vpop.f32.mrb[0].mxu0
    %v395 = vadd.f32 %v282, %v394
    %v396 = vpop.f32.mrb[0].mxu0
    %397 = vdwg.mxu0
    %399 = vrot.lane.b32.xlu0 %v291, 96
    %v400 = vpop.permute.xlu0 %399
    %v402 = vsel %vm300, %v291, 0
    %v405 = vsel %vm300, %v400, 0
    %407 = vmatprep.subr.bf16.mxu0 0
    %408 = vmatpush1.bf16.xpose.msra.mxu0 %v405
    %409 = vmatprep.subr.bf16.mxu0 0
    %410 = vmatpush1.bf16.xpose.msra.mxu0 0
    %411 = vmatprep.subr.bf16.mxu0 0
    %412 = vmatpush1.bf16.xpose.msra.mxu0 0
    %413 = vmatprep.subr.bf16.mxu0 0
    %414 = vmatpush1.bf16.xpose.msra.mxu0 0
    %415 = vmatprep.subr.bf16.mxu0 0
    %416 = vmatpush1.bf16.xpose.msra.mxu0 0
    %417 = vmatprep.subr.bf16.mxu0 0
    %418 = vmatpush1.bf16.xpose.msra.mxu0 0
    %419 = vmatprep.subr.bf16.mxu0 0
    %420 = vmatpush1.bf16.xpose.msra.mxu0 0
    %421 = vmatprep.subr.bf16.mxu0 0
    %422 = vmatpush1.bf16.xpose.msra.mxu0 0
    %423 = vmatprep.subr.bf16.mxu0 0
    %424 = vmatpush1.bf16.xpose.msra.mxu0 0
    %425 = vmatprep.subr.bf16.mxu0 0
    %426 = vmatpush1.bf16.xpose.msra.mxu0 0
    %427 = vmatprep.subr.bf16.mxu0 0
    %428 = vmatpush1.bf16.xpose.msra.mxu0 0
    %429 = vmatprep.subr.bf16.mxu0 0
    %430 = vmatpush1.bf16.xpose.msra.mxu0 0
    %431 = vmatprep.subr.bf16.mxu0 0
    %432 = vmatpush1.bf16.xpose.msra.mxu0 0
    %433 = vmatprep.subr.bf16.mxu0 0
    %434 = vmatpush1.bf16.xpose.msra.mxu0 0
    %435 = vmatprep.subr.bf16.mxu0 0
    %436 = vmatpush1.bf16.xpose.msra.mxu0 0
    %437 = vmatprep.subr.bf16.mxu0 0
    %438 = vmatpush1.bf16.xpose.msra.mxu0 0
    %439 = vmatprep.mubr.bf16.mxu0 0
    %440 = vmatmul.mubr.bf16.gmra.mrb[0].mxu0 %v402
    %v441 = vpop.f32.mrb[0].mxu0
    %v442 = vadd.f32 %v281, %v441
    %v443 = vpop.f32.mrb[0].mxu0
    %v444 = vpop.f32.mrb[0].mxu0
    %v445 = vadd.f32 %v282, %v444
    %v446 = vpop.f32.mrb[0].mxu0
    %447 = vdwg.mxu0
    %449 = vrot.lane.b32.xlu0 %v292, 96
    %v450 = vpop.permute.xlu0 %449
    %v452 = vsel %vm300, %v292, 0
    %v455 = vsel %vm300, %v450, 0
    %457 = vmatprep.subr.bf16.mxu0 0
    %458 = vmatpush1.bf16.xpose.msra.mxu0 %v455
    %459 = vmatprep.subr.bf16.mxu0 0
    %460 = vmatpush1.bf16.xpose.msra.mxu0 0
    %461 = vmatprep.subr.bf16.mxu0 0
    %462 = vmatpush1.bf16.xpose.msra.mxu0 0
    %463 = vmatprep.subr.bf16.mxu0 0
    %464 = vmatpush1.bf16.xpose.msra.mxu0 0
    %465 = vmatprep.subr.bf16.mxu0 0
    %466 = vmatpush1.bf16.xpose.msra.mxu0 0
    %467 = vmatprep.subr.bf16.mxu0 0
    %468 = vmatpush1.bf16.xpose.msra.mxu0 0
    %469 = vmatprep.subr.bf16.mxu0 0
    %470 = vmatpush1.bf16.xpose.msra.mxu0 0
    %471 = vmatprep.subr.bf16.mxu0 0
    %472 = vmatpush1.bf16.xpose.msra.mxu0 0
    %473 = vmatprep.subr.bf16.mxu0 0
    %474 = vmatpush1.bf16.xpose.msra.mxu0 0
    %475 = vmatprep.subr.bf16.mxu0 0
    %476 = vmatpush1.bf16.xpose.msra.mxu0 0
    %477 = vmatprep.subr.bf16.mxu0 0
    %478 = vmatpush1.bf16.xpose.msra.mxu0 0
    %479 = vmatprep.subr.bf16.mxu0 0
    %480 = vmatpush1.bf16.xpose.msra.mxu0 0
    %481 = vmatprep.subr.bf16.mxu0 0
    %482 = vmatpush1.bf16.xpose.msra.mxu0 0
    %483 = vmatprep.subr.bf16.mxu0 0
    %484 = vmatpush1.bf16.xpose.msra.mxu0 0
    %485 = vmatprep.subr.bf16.mxu0 0
    %486 = vmatpush1.bf16.xpose.msra.mxu0 0
    %487 = vmatprep.subr.bf16.mxu0 0
    %488 = vmatpush1.bf16.xpose.msra.mxu0 0
    %489 = vmatprep.mubr.bf16.mxu0 0
    %490 = vmatmul.mubr.bf16.gmra.mrb[0].mxu0 %v452
    %v491 = vpop.f32.mrb[0].mxu0
    %v492 = vadd.f32 %v281, %v491
    %v493 = vpop.f32.mrb[0].mxu0
    %v494 = vpop.f32.mrb[0].mxu0
    %v495 = vadd.f32 %v282, %v494
    %v496 = vpop.f32.mrb[0].mxu0
    %497 = vdwg.mxu0
    %499 = vrot.lane.b32.xlu0 %v293, 96
    %v500 = vpop.permute.xlu0 %499
    %v502 = vsel %vm300, %v293, 0
    %v505 = vsel %vm300, %v500, 0
    %507 = vmatprep.subr.bf16.mxu0 0
    %508 = vmatpush1.bf16.xpose.msra.mxu0 %v505
    %509 = vmatprep.subr.bf16.mxu0 0
    %510 = vmatpush1.bf16.xpose.msra.mxu0 0
    %511 = vmatprep.subr.bf16.mxu0 0
    %512 = vmatpush1.bf16.xpose.msra.mxu0 0
    %513 = vmatprep.subr.bf16.mxu0 0
    %514 = vmatpush1.bf16.xpose.msra.mxu0 0
    %515 = vmatprep.subr.bf16.mxu0 0
    %516 = vmatpush1.bf16.xpose.msra.mxu0 0
    %517 = vmatprep.subr.bf16.mxu0 0
    %518 = vmatpush1.bf16.xpose.msra.mxu0 0
    %519 = vmatprep.subr.bf16.mxu0 0
    %520 = vmatpush1.bf16.xpose.msra.mxu0 0
    %521 = vmatprep.subr.bf16.mxu0 0
    %522 = vmatpush1.bf16.xpose.msra.mxu0 0
    %523 = vmatprep.subr.bf16.mxu0 0
    %524 = vmatpush1.bf16.xpose.msra.mxu0 0
    %525 = vmatprep.subr.bf16.mxu0 0
    %526 = vmatpush1.bf16.xpose.msra.mxu0 0
    %527 = vmatprep.subr.bf16.mxu0 0
    %528 = vmatpush1.bf16.xpose.msra.mxu0 0
    %529 = vmatprep.subr.bf16.mxu0 0
    %530 = vmatpush1.bf16.xpose.msra.mxu0 0
    %531 = vmatprep.subr.bf16.mxu0 0
    %532 = vmatpush1.bf16.xpose.msra.mxu0 0
    %533 = vmatprep.subr.bf16.mxu0 0
    %534 = vmatpush1.bf16.xpose.msra.mxu0 0
    %535 = vmatprep.subr.bf16.mxu0 0
    %536 = vmatpush1.bf16.xpose.msra.mxu0 0
    %537 = vmatprep.subr.bf16.mxu0 0
    %538 = vmatpush1.bf16.xpose.msra.mxu0 0
    %539 = vmatprep.mubr.bf16.mxu0 0
    %540 = vmatmul.mubr.bf16.gmra.mrb[0].mxu0 %v502
    %v541 = vpop.f32.mrb[0].mxu0
    %v542 = vadd.f32 %v281, %v541
    %v543 = vpop.f32.mrb[0].mxu0
    %v544 = vpop.f32.mrb[0].mxu0
    %v545 = vadd.f32 %v282, %v544
    %v546 = vpop.f32.mrb[0].mxu0
    %547 = vdwg.mxu0
    %549 = vrot.lane.b32.xlu0 %v294, 96
    %v550 = vpop.permute.xlu0 %549
    %v552 = vsel %vm300, %v294, 0
    %v555 = vsel %vm300, %v550, 0
    %557 = vmatprep.subr.bf16.mxu0 0
    %558 = vmatpush1.bf16.xpose.msra.mxu0 %v555
    %559 = vmatprep.subr.bf16.mxu0 0
    %560 = vmatpush1.bf16.xpose.msra.mxu0 0
    %561 = vmatprep.subr.bf16.mxu0 0
    %562 = vmatpush1.bf16.xpose.msra.mxu0 0
    %563 = vmatprep.subr.bf16.mxu0 0
    %564 = vmatpush1.bf16.xpose.msra.mxu0 0
    %565 = vmatprep.subr.bf16.mxu0 0
    %566 = vmatpush1.bf16.xpose.msra.mxu0 0
    %567 = vmatprep.subr.bf16.mxu0 0
    %568 = vmatpush1.bf16.xpose.msra.mxu0 0
    %569 = vmatprep.subr.bf16.mxu0 0
    %570 = vmatpush1.bf16.xpose.msra.mxu0 0
    %571 = vmatprep.subr.bf16.mxu0 0
    %572 = vmatpush1.bf16.xpose.msra.mxu0 0
    %573 = vmatprep.subr.bf16.mxu0 0
    %574 = vmatpush1.bf16.xpose.msra.mxu0 0
    %575 = vmatprep.subr.bf16.mxu0 0
    %576 = vmatpush1.bf16.xpose.msra.mxu0 0
    %577 = vmatprep.subr.bf16.mxu0 0
    %578 = vmatpush1.bf16.xpose.msra.mxu0 0
    %579 = vmatprep.subr.bf16.mxu0 0
    %580 = vmatpush1.bf16.xpose.msra.mxu0 0
    %581 = vmatprep.subr.bf16.mxu0 0
    %582 = vmatpush1.bf16.xpose.msra.mxu0 0
    %583 = vmatprep.subr.bf16.mxu0 0
    %584 = vmatpush1.bf16.xpose.msra.mxu0 0
    %585 = vmatprep.subr.bf16.mxu0 0
    %586 = vmatpush1.bf16.xpose.msra.mxu0 0
    %587 = vmatprep.subr.bf16.mxu0 0
    %588 = vmatpush1.bf16.xpose.msra.mxu0 0
    %589 = vmatprep.mubr.bf16.mxu0 0
    %590 = vmatmul.mubr.bf16.gmra.mrb[0].mxu0 %v552
    %v591 = vpop.f32.mrb[0].mxu0
    %v592 = vadd.f32 %v281, %v591
    %v593 = vpop.f32.mrb[0].mxu0
    %v594 = vpop.f32.mrb[0].mxu0
    %v595 = vadd.f32 %v282, %v594
    %v596 = vpop.f32.mrb[0].mxu0
    %597 = vdwg.mxu0
    %599 = vrot.lane.b32.xlu0 %v295, 96
    %v600 = vpop.permute.xlu0 %599
    %v602 = vsel %vm300, %v295, 0
    %v605 = vsel %vm300, %v600, 0
    %607 = vmatprep.subr.bf16.mxu0 0
    %608 = vmatpush1.bf16.xpose.msra.mxu0 %v605
    %609 = vmatprep.subr.bf16.mxu0 0
    %610 = vmatpush1.bf16.xpose.msra.mxu0 0
    %611 = vmatprep.subr.bf16.mxu0 0
    %612 = vmatpush1.bf16.xpose.msra.mxu0 0
    %613 = vmatprep.subr.bf16.mxu0 0
    %614 = vmatpush1.bf16.xpose.msra.mxu0 0
    %615 = vmatprep.subr.bf16.mxu0 0
    %616 = vmatpush1.bf16.xpose.msra.mxu0 0
    %617 = vmatprep.subr.bf16.mxu0 0
    %618 = vmatpush1.bf16.xpose.msra.mxu0 0
    %619 = vmatprep.subr.bf16.mxu0 0
    %620 = vmatpush1.bf16.xpose.msra.mxu0 0
    %621 = vmatprep.subr.bf16.mxu0 0
    %622 = vmatpush1.bf16.xpose.msra.mxu0 0
    %623 = vmatprep.subr.bf16.mxu0 0
    %624 = vmatpush1.bf16.xpose.msra.mxu0 0
    %625 = vmatprep.subr.bf16.mxu0 0
    %626 = vmatpush1.bf16.xpose.msra.mxu0 0
    %627 = vmatprep.subr.bf16.mxu0 0
    %628 = vmatpush1.bf16.xpose.msra.mxu0 0
    %629 = vmatprep.subr.bf16.mxu0 0
    %630 = vmatpush1.bf16.xpose.msra.mxu0 0
    %631 = vmatprep.subr.bf16.mxu0 0
    %632 = vmatpush1.bf16.xpose.msra.mxu0 0
    %633 = vmatprep.subr.bf16.mxu0 0
    %634 = vmatpush1.bf16.xpose.msra.mxu0 0
    %635 = vmatprep.subr.bf16.mxu0 0
    %636 = vmatpush1.bf16.xpose.msra.mxu0 0
    %637 = vmatprep.subr.bf16.mxu0 0
    %638 = vmatpush1.bf16.xpose.msra.mxu0 0
    %639 = vmatprep.mubr.bf16.mxu0 0
    %640 = vmatmul.mubr.bf16.gmra.mrb[0].mxu0 %v602
    %v641 = vpop.f32.mrb[0].mxu0
    %v642 = vadd.f32 %v281, %v641
    %v643 = vpop.f32.mrb[0].mxu0
    %v644 = vpop.f32.mrb[0].mxu0
    %v645 = vadd.f32 %v282, %v644
    %v646 = vpop.f32.mrb[0].mxu0
    %647 = vdwg.mxu0
    %649 = vrot.lane.b32.xlu0 %v296, 96
    %v650 = vpop.permute.xlu0 %649
    %v652 = vsel %vm300, %v296, 0
    %v655 = vsel %vm300, %v650, 0
    %657 = vmatprep.subr.bf16.mxu0 0
    %658 = vmatpush1.bf16.xpose.msra.mxu0 %v655
    %659 = vmatprep.subr.bf16.mxu0 0
    %660 = vmatpush1.bf16.xpose.msra.mxu0 0
    %661 = vmatprep.subr.bf16.mxu0 0
    %662 = vmatpush1.bf16.xpose.msra.mxu0 0
    %663 = vmatprep.subr.bf16.mxu0 0
    %664 = vmatpush1.bf16.xpose.msra.mxu0 0
    %665 = vmatprep.subr.bf16.mxu0 0
    %666 = vmatpush1.bf16.xpose.msra.mxu0 0
    %667 = vmatprep.subr.bf16.mxu0 0
    %668 = vmatpush1.bf16.xpose.msra.mxu0 0
    %669 = vmatprep.subr.bf16.mxu0 0
    %670 = vmatpush1.bf16.xpose.msra.mxu0 0
    %671 = vmatprep.subr.bf16.mxu0 0
    %672 = vmatpush1.bf16.xpose.msra.mxu0 0
    %673 = vmatprep.subr.bf16.mxu0 0
    %674 = vmatpush1.bf16.xpose.msra.mxu0 0
    %675 = vmatprep.subr.bf16.mxu0 0
    %676 = vmatpush1.bf16.xpose.msra.mxu0 0
    %677 = vmatprep.subr.bf16.mxu0 0
    %678 = vmatpush1.bf16.xpose.msra.mxu0 0
    %679 = vmatprep.subr.bf16.mxu0 0
    %680 = vmatpush1.bf16.xpose.msra.mxu0 0
    %681 = vmatprep.subr.bf16.mxu0 0
    %682 = vmatpush1.bf16.xpose.msra.mxu0 0
    %683 = vmatprep.subr.bf16.mxu0 0
    %684 = vmatpush1.bf16.xpose.msra.mxu0 0
    %685 = vmatprep.subr.bf16.mxu0 0
    %686 = vmatpush1.bf16.xpose.msra.mxu0 0
    %687 = vmatprep.subr.bf16.mxu0 0
    %688 = vmatpush1.bf16.xpose.msra.mxu0 0
    %689 = vmatprep.mubr.bf16.mxu0 0
    %690 = vmatmul.mubr.bf16.gmra.mrb[0].mxu0 %v652
    %v691 = vpop.f32.mrb[0].mxu0
    %v692 = vadd.f32 %v281, %v691
    %v693 = vpop.f32.mrb[0].mxu0
    %v694 = vpop.f32.mrb[0].mxu0
    %v695 = vadd.f32 %v282, %v694
    %v696 = vpop.f32.mrb[0].mxu0
    %697 = vdwg.mxu0
    %vm698 = vcmask 130048
    %v699 = vsel %vm698, %v342, -inf
    %700 = vmax.xlane.f32.xlu0 %v699
    %v701 = vpop.xlane.xlu0 %700
    %v702 = vsel %vm698, %v345, -inf
    %703 = vmax.xlane.f32.xlu0 %v702
    %v704 = vpop.xlane.xlu0 %703
    %v705 = vsel %vm698, %v392, -inf
    %706 = vmax.xlane.f32.xlu0 %v705
    %v707 = vpop.xlane.xlu0 %706
    %v708 = vsel %vm698, %v395, -inf
    %709 = vmax.xlane.f32.xlu0 %v708
    %v710 = vpop.xlane.xlu0 %709
    %v711 = vsel %vm698, %v442, -inf
    %712 = vmax.xlane.f32.xlu0 %v711
    %v713 = vpop.xlane.xlu0 %712
    %v714 = vsel %vm698, %v445, -inf
    %715 = vmax.xlane.f32.xlu0 %v714
    %v716 = vpop.xlane.xlu0 %715
    %v717 = vsel %vm698, %v492, -inf
    %718 = vmax.xlane.f32.xlu0 %v717
    %v719 = vpop.xlane.xlu0 %718
    %v720 = vsel %vm698, %v495, -inf
    %721 = vmax.xlane.f32.xlu0 %v720
    %v722 = vpop.xlane.xlu0 %721
    %v723 = vsel %vm698, %v542, -inf
    %724 = vmax.xlane.f32.xlu0 %v723
    %v725 = vpop.xlane.xlu0 %724
    %v726 = vsel %vm698, %v545, -inf
    %727 = vmax.xlane.f32.xlu0 %v726
    %v728 = vpop.xlane.xlu0 %727
    %v729 = vsel %vm698, %v592, -inf
    %730 = vmax.xlane.f32.xlu0 %v729
    %v731 = vpop.xlane.xlu0 %730
    %v732 = vsel %vm698, %v595, -inf
    %733 = vmax.xlane.f32.xlu0 %v732
    %v734 = vpop.xlane.xlu0 %733
    %v735 = vsel %vm698, %v642, -inf
    %736 = vmax.xlane.f32.xlu0 %v735
    %v737 = vpop.xlane.xlu0 %736
    %v738 = vsel %vm698, %v645, -inf
    %739 = vmax.xlane.f32.xlu0 %v738
    %v740 = vpop.xlane.xlu0 %739
    %v741 = vsel %vm698, %v692, -inf
    %742 = vmax.xlane.f32.xlu0 %v741
    %v743 = vpop.xlane.xlu0 %742
    %v744 = vsel %vm698, %v695, -inf
    %745 = vmax.xlane.f32.xlu0 %v744
    %v746 = vpop.xlane.xlu0 %745
    %v747 = vsub.f32 %v342, %v701
    %v748 = vsub.f32 %v345, %v704
    %v749 = vsub.f32 %v392, %v707
    %v750 = vsub.f32 %v395, %v710
    %v751 = vsub.f32 %v442, %v713
    %v752 = vsub.f32 %v445, %v716
    %v753 = vsub.f32 %v492, %v719
    %v754 = vsub.f32 %v495, %v722
    %v755 = vsub.f32 %v542, %v725
    %v756 = vsub.f32 %v545, %v728
    %v757 = vsub.f32 %v592, %v731
    %v758 = vsub.f32 %v595, %v734
    %v759 = vsub.f32 %v642, %v737
    %v760 = vsub.f32 %v645, %v740
    %v761 = vsub.f32 %v692, %v743
    %v762 = vsub.f32 %v695, %v746
    %v763 = vmul.f32 %v747, 1.442695
    %v764 = vpow.pop %v763
    %v765 = vmul.f32 %v748, 1.442695
    %v766 = vpow.pop %v765
    %v767 = vmul.f32 %v749, 1.442695
    %v768 = vpow.pop %v767
    %v769 = vmul.f32 %v750, 1.442695
    %v770 = vpow.pop %v769
    %v771 = vmul.f32 %v751, 1.442695
    %v772 = vpow.pop %v771
    %v773 = vmul.f32 %v752, 1.442695
    %v774 = vpow.pop %v773
    %v775 = vmul.f32 %v753, 1.442695
    %v776 = vpow.pop %v775
    %v777 = vmul.f32 %v754, 1.442695
    %v778 = vpow.pop %v777
    %v779 = vmul.f32 %v755, 1.442695
    %v780 = vpow.pop %v779
    %v781 = vmul.f32 %v756, 1.442695
    %v782 = vpow.pop %v781
    %v783 = vmul.f32 %v757, 1.442695
    %v784 = vpow.pop %v783
    %v785 = vmul.f32 %v758, 1.442695
    %v786 = vpow.pop %v785
    %v787 = vmul.f32 %v759, 1.442695
    %v788 = vpow.pop %v787
    %v789 = vmul.f32 %v760, 1.442695
    %v790 = vpow.pop %v789
    %v791 = vmul.f32 %v761, 1.442695
    %v792 = vpow.pop %v791
    %v793 = vmul.f32 %v762, 1.442695
    %v794 = vpow.pop %v793
    %v795 = vsel %vm698, %v764, 0.0
    %796 = vadd.xlane.f32.xlu0 %v795
    %v797 = vpop.xlane.xlu0 %796
    %v798 = vsel %vm698, %v766, 0.0
    %799 = vadd.xlane.f32.xlu0 %v798
    %v800 = vpop.xlane.xlu0 %799
    %v801 = vsel %vm698, %v768, 0.0
    %802 = vadd.xlane.f32.xlu0 %v801
    %v803 = vpop.xlane.xlu0 %802
    %v804 = vsel %vm698, %v770, 0.0
    %805 = vadd.xlane.f32.xlu0 %v804
    %v806 = vpop.xlane.xlu0 %805
    %v807 = vsel %vm698, %v772, 0.0
    %808 = vadd.xlane.f32.xlu0 %v807
    %v809 = vpop.xlane.xlu0 %808
    %v810 = vsel %vm698, %v774, 0.0
    %811 = vadd.xlane.f32.xlu0 %v810
    %v812 = vpop.xlane.xlu0 %811
    %v813 = vsel %vm698, %v776, 0.0
    %814 = vadd.xlane.f32.xlu0 %v813
    %v815 = vpop.xlane.xlu0 %814
    %v816 = vsel %vm698, %v778, 0.0
    %817 = vadd.xlane.f32.xlu0 %v816
    %v818 = vpop.xlane.xlu0 %817
    %v819 = vsel %vm698, %v780, 0.0
    %820 = vadd.xlane.f32.xlu0 %v819
    %v821 = vpop.xlane.xlu0 %820
    %v822 = vsel %vm698, %v782, 0.0
    %823 = vadd.xlane.f32.xlu0 %v822
    %v824 = vpop.xlane.xlu0 %823
    %v825 = vsel %vm698, %v784, 0.0
    %826 = vadd.xlane.f32.xlu0 %v825
    %v827 = vpop.xlane.xlu0 %826
    %v828 = vsel %vm698, %v786, 0.0
    %829 = vadd.xlane.f32.xlu0 %v828
    %v830 = vpop.xlane.xlu0 %829
    %v831 = vsel %vm698, %v788, 0.0
    %832 = vadd.xlane.f32.xlu0 %v831
    %v833 = vpop.xlane.xlu0 %832
    %v834 = vsel %vm698, %v790, 0.0
    %835 = vadd.xlane.f32.xlu0 %v834
    %v836 = vpop.xlane.xlu0 %835
    %v837 = vsel %vm698, %v792, 0.0
    %838 = vadd.xlane.f32.xlu0 %v837
    %v839 = vpop.xlane.xlu0 %838
    %v840 = vsel %vm698, %v794, 0.0
    %841 = vadd.xlane.f32.xlu0 %v840
    %v842 = vpop.xlane.xlu0 %841
    %v843 = vrcp.pop %v797
    %v844 = vrcp.pop %v800
    %v845 = vrcp.pop %v803
    %v846 = vrcp.pop %v806
    %v847 = vrcp.pop %v809
    %v848 = vrcp.pop %v812
    %v849 = vrcp.pop %v815
    %v850 = vrcp.pop %v818
    %v851 = vrcp.pop %v821
    %v852 = vrcp.pop %v824
    %v853 = vrcp.pop %v827
    %v854 = vrcp.pop %v830
    %v855 = vrcp.pop %v833
    %v856 = vrcp.pop %v836
    %v857 = vrcp.pop %v839
    %v858 = vrcp.pop %v842
    %v859 = vmul.f32 %v764, %v843
    %v860 = vmul.f32 %v766, %v844
    %v861 = vmul.f32 %v768, %v845
    %v862 = vmul.f32 %v770, %v846
    %v863 = vmul.f32 %v772, %v847
    %v864 = vmul.f32 %v774, %v848
    %v865 = vmul.f32 %v776, %v849
    %v866 = vmul.f32 %v778, %v850
    %v867 = vmul.f32 %v780, %v851
    %v868 = vmul.f32 %v782, %v852
    %v869 = vmul.f32 %v784, %v853
    %v870 = vmul.f32 %v786, %v854
    %v871 = vmul.f32 %v788, %v855
    %v872 = vmul.f32 %v790, %v856
    %v873 = vmul.f32 %v792, %v857
    %v874 = vmul.f32 %v794, %v858
    %v875 = vpack.c.bf16 %v860, %v859
    %v876 = vpack.c.bf16 %v862, %v861
    %v877 = vpack.c.bf16 %v864, %v863
    %v878 = vpack.c.bf16 %v866, %v865
    %v879 = vpack.c.bf16 %v868, %v867
    %v880 = vpack.c.bf16 %v870, %v869
    %v881 = vpack.c.bf16 %v872, %v871
    %v882 = vpack.c.bf16 %v874, %v873
    %883 = vrot.lane.b32.xlu0 %v289, 64
    %v884 = vpop.permute.xlu0 %883
    %v887 = vsel %vm698, %v875, 0
    %889 = vmatprep.subr.bf16.mxu0 0
    %890 = vmatpush1.bf16.msra.mxu0 %v884
    %891 = vmatprep.subr.bf16.mxu0 0
    %892 = vmatpush1.bf16.msra.mxu0 0
    %893 = vmatprep.subr.bf16.mxu0 0
    %894 = vmatpush1.bf16.msra.mxu0 0
    %895 = vmatprep.subr.bf16.mxu0 0
    %896 = vmatpush1.bf16.msra.mxu0 0
    %897 = vmatprep.subr.bf16.mxu0 0
    %898 = vmatpush1.bf16.msra.mxu0 0
    %899 = vmatprep.subr.bf16.mxu0 0
    %900 = vmatpush1.bf16.msra.mxu0 0
    %901 = vmatprep.subr.bf16.mxu0 0
    %902 = vmatpush1.bf16.msra.mxu0 0
    %903 = vmatprep.subr.bf16.mxu0 0
    %904 = vmatpush1.bf16.msra.mxu0 0
    %905 = vmatprep.subr.bf16.mxu0 0
    %906 = vmatpush1.bf16.msra.mxu0 0
    %907 = vmatprep.subr.bf16.mxu0 0
    %908 = vmatpush1.bf16.msra.mxu0 0
    %909 = vmatprep.subr.bf16.mxu0 0
    %910 = vmatpush1.bf16.msra.mxu0 0
    %911 = vmatprep.subr.bf16.mxu0 0
    %912 = vmatpush1.bf16.msra.mxu0 0
    %913 = vmatprep.subr.bf16.mxu0 0
    %914 = vmatpush1.bf16.msra.mxu0 0
    %915 = vmatprep.subr.bf16.mxu0 0
    %916 = vmatpush1.bf16.msra.mxu0 0
    %917 = vmatprep.subr.bf16.mxu0 0
    %918 = vmatpush1.bf16.msra.mxu0 0
    %919 = vmatprep.subr.bf16.mxu0 0
    %920 = vmatpush1.bf16.msra.mxu0 0
    %921 = vmatprep.mubr.bf16.mxu0 0
    %922 = vmatmul.mubr.bf16.gmra.mrb[0].mxu0 %v887
    %v923 = vpop.f32.mrb[0].mxu0
    %v924 = vadd.f32 0.0, %v923
    %v925 = vpop.f32.mrb[0].mxu0
    %v926 = vpop.f32.mrb[0].mxu0
    %v927 = vadd.f32 0.0, %v926
    %v928 = vpop.f32.mrb[0].mxu0
    %929 = vdwg.mxu0
    %930 = vrot.lane.b32.xlu0 %v290, 64
    %v931 = vpop.permute.xlu0 %930
    %v934 = vsel %vm698, %v876, 0
    %936 = vmatprep.subr.bf16.mxu0 0
    %937 = vmatpush1.bf16.msra.mxu0 %v931
    %938 = vmatprep.subr.bf16.mxu0 0
    %939 = vmatpush1.bf16.msra.mxu0 0
    %940 = vmatprep.subr.bf16.mxu0 0
    %941 = vmatpush1.bf16.msra.mxu0 0
    %942 = vmatprep.subr.bf16.mxu0 0
    %943 = vmatpush1.bf16.msra.mxu0 0
    %944 = vmatprep.subr.bf16.mxu0 0
    %945 = vmatpush1.bf16.msra.mxu0 0
    %946 = vmatprep.subr.bf16.mxu0 0
    %947 = vmatpush1.bf16.msra.mxu0 0
    %948 = vmatprep.subr.bf16.mxu0 0
    %949 = vmatpush1.bf16.msra.mxu0 0
    %950 = vmatprep.subr.bf16.mxu0 0
    %951 = vmatpush1.bf16.msra.mxu0 0
    %952 = vmatprep.subr.bf16.mxu0 0
    %953 = vmatpush1.bf16.msra.mxu0 0
    %954 = vmatprep.subr.bf16.mxu0 0
    %955 = vmatpush1.bf16.msra.mxu0 0
    %956 = vmatprep.subr.bf16.mxu0 0
    %957 = vmatpush1.bf16.msra.mxu0 0
    %958 = vmatprep.subr.bf16.mxu0 0
    %959 = vmatpush1.bf16.msra.mxu0 0
    %960 = vmatprep.subr.bf16.mxu0 0
    %961 = vmatpush1.bf16.msra.mxu0 0
    %962 = vmatprep.subr.bf16.mxu0 0
    %963 = vmatpush1.bf16.msra.mxu0 0
    %964 = vmatprep.subr.bf16.mxu0 0
    %965 = vmatpush1.bf16.msra.mxu0 0
    %966 = vmatprep.subr.bf16.mxu0 0
    %967 = vmatpush1.bf16.msra.mxu0 0
    %968 = vmatprep.mubr.bf16.mxu0 0
    %969 = vmatmul.mubr.bf16.gmra.mrb[0].mxu0 %v934
    %v970 = vpop.f32.mrb[0].mxu0
    %v971 = vadd.f32 0.0, %v970
    %v972 = vpop.f32.mrb[0].mxu0
    %v973 = vpop.f32.mrb[0].mxu0
    %v974 = vadd.f32 0.0, %v973
    %v975 = vpop.f32.mrb[0].mxu0
    %976 = vdwg.mxu0
    %977 = vrot.lane.b32.xlu0 %v291, 64
    %v978 = vpop.permute.xlu0 %977
    %v981 = vsel %vm698, %v877, 0
    %983 = vmatprep.subr.bf16.mxu0 0
    %984 = vmatpush1.bf16.msra.mxu0 %v978
    %985 = vmatprep.subr.bf16.mxu0 0
    %986 = vmatpush1.bf16.msra.mxu0 0
    %987 = vmatprep.subr.bf16.mxu0 0
    %988 = vmatpush1.bf16.msra.mxu0 0
    %989 = vmatprep.subr.bf16.mxu0 0
    %990 = vmatpush1.bf16.msra.mxu0 0
    %991 = vmatprep.subr.bf16.mxu0 0
    %992 = vmatpush1.bf16.msra.mxu0 0
    %993 = vmatprep.subr.bf16.mxu0 0
    %994 = vmatpush1.bf16.msra.mxu0 0
    %995 = vmatprep.subr.bf16.mxu0 0
    %996 = vmatpush1.bf16.msra.mxu0 0
    %997 = vmatprep.subr.bf16.mxu0 0
    %998 = vmatpush1.bf16.msra.mxu0 0
    %999 = vmatprep.subr.bf16.mxu0 0
    %1000 = vmatpush1.bf16.msra.mxu0 0
    %1001 = vmatprep.subr.bf16.mxu0 0
    %1002 = vmatpush1.bf16.msra.mxu0 0
    %1003 = vmatprep.subr.bf16.mxu0 0
    %1004 = vmatpush1.bf16.msra.mxu0 0
    %1005 = vmatprep.subr.bf16.mxu0 0
    %1006 = vmatpush1.bf16.msra.mxu0 0
    %1007 = vmatprep.subr.bf16.mxu0 0
    %1008 = vmatpush1.bf16.msra.mxu0 0
    %1009 = vmatprep.subr.bf16.mxu0 0
    %1010 = vmatpush1.bf16.msra.mxu0 0
    %1011 = vmatprep.subr.bf16.mxu0 0
    %1012 = vmatpush1.bf16.msra.mxu0 0
    %1013 = vmatprep.subr.bf16.mxu0 0
    %1014 = vmatpush1.bf16.msra.mxu0 0
    %1015 = vmatprep.mubr.bf16.mxu0 0
    %1016 = vmatmul.mubr.bf16.gmra.mrb[0].mxu0 %v981
    %v1017 = vpop.f32.mrb[0].mxu0
    %v1018 = vadd.f32 0.0, %v1017
    %v1019 = vpop.f32.mrb[0].mxu0
    %v1020 = vpop.f32.mrb[0].mxu0
    %v1021 = vadd.f32 0.0, %v1020
    %v1022 = vpop.f32.mrb[0].mxu0
    %1023 = vdwg.mxu0
    %1024 = vrot.lane.b32.xlu0 %v292, 64
    %v1025 = vpop.permute.xlu0 %1024
    %v1028 = vsel %vm698, %v878, 0
    %1030 = vmatprep.subr.bf16.mxu0 0
    %1031 = vmatpush1.bf16.msra.mxu0 %v1025
    %1032 = vmatprep.subr.bf16.mxu0 0
    %1033 = vmatpush1.bf16.msra.mxu0 0
    %1034 = vmatprep.subr.bf16.mxu0 0
    %1035 = vmatpush1.bf16.msra.mxu0 0
    %1036 = vmatprep.subr.bf16.mxu0 0
    %1037 = vmatpush1.bf16.msra.mxu0 0
    %1038 = vmatprep.subr.bf16.mxu0 0
    %1039 = vmatpush1.bf16.msra.mxu0 0
    %1040 = vmatprep.subr.bf16.mxu0 0
    %1041 = vmatpush1.bf16.msra.mxu0 0
    %1042 = vmatprep.subr.bf16.mxu0 0
    %1043 = vmatpush1.bf16.msra.mxu0 0
    %1044 = vmatprep.subr.bf16.mxu0 0
    %1045 = vmatpush1.bf16.msra.mxu0 0
    %1046 = vmatprep.subr.bf16.mxu0 0
    %1047 = vmatpush1.bf16.msra.mxu0 0
    %1048 = vmatprep.subr.bf16.mxu0 0
    %1049 = vmatpush1.bf16.msra.mxu0 0
    %1050 = vmatprep.subr.bf16.mxu0 0
    %1051 = vmatpush1.bf16.msra.mxu0 0
    %1052 = vmatprep.subr.bf16.mxu0 0
    %1053 = vmatpush1.bf16.msra.mxu0 0
    %1054 = vmatprep.subr.bf16.mxu0 0
    %1055 = vmatpush1.bf16.msra.mxu0 0
    %1056 = vmatprep.subr.bf16.mxu0 0
    %1057 = vmatpush1.bf16.msra.mxu0 0
    %1058 = vmatprep.subr.bf16.mxu0 0
    %1059 = vmatpush1.bf16.msra.mxu0 0
    %1060 = vmatprep.subr.bf16.mxu0 0
    %1061 = vmatpush1.bf16.msra.mxu0 0
    %1062 = vmatprep.mubr.bf16.mxu0 0
    %1063 = vmatmul.mubr.bf16.gmra.mrb[0].mxu0 %v1028
    %v1064 = vpop.f32.mrb[0].mxu0
    %v1065 = vadd.f32 0.0, %v1064
    %v1066 = vpop.f32.mrb[0].mxu0
    %v1067 = vpop.f32.mrb[0].mxu0
    %v1068 = vadd.f32 0.0, %v1067
    %v1069 = vpop.f32.mrb[0].mxu0
    %1070 = vdwg.mxu0
    %1071 = vrot.lane.b32.xlu0 %v293, 64
    %v1072 = vpop.permute.xlu0 %1071
    %v1075 = vsel %vm698, %v879, 0
    %1077 = vmatprep.subr.bf16.mxu0 0
    %1078 = vmatpush1.bf16.msra.mxu0 %v1072
    %1079 = vmatprep.subr.bf16.mxu0 0
    %1080 = vmatpush1.bf16.msra.mxu0 0
    %1081 = vmatprep.subr.bf16.mxu0 0
    %1082 = vmatpush1.bf16.msra.mxu0 0
    %1083 = vmatprep.subr.bf16.mxu0 0
    %1084 = vmatpush1.bf16.msra.mxu0 0
    %1085 = vmatprep.subr.bf16.mxu0 0
    %1086 = vmatpush1.bf16.msra.mxu0 0
    %1087 = vmatprep.subr.bf16.mxu0 0
    %1088 = vmatpush1.bf16.msra.mxu0 0
    %1089 = vmatprep.subr.bf16.mxu0 0
    %1090 = vmatpush1.bf16.msra.mxu0 0
    %1091 = vmatprep.subr.bf16.mxu0 0
    %1092 = vmatpush1.bf16.msra.mxu0 0
    %1093 = vmatprep.subr.bf16.mxu0 0
    %1094 = vmatpush1.bf16.msra.mxu0 0
    %1095 = vmatprep.subr.bf16.mxu0 0
    %1096 = vmatpush1.bf16.msra.mxu0 0
    %1097 = vmatprep.subr.bf16.mxu0 0
    %1098 = vmatpush1.bf16.msra.mxu0 0
    %1099 = vmatprep.subr.bf16.mxu0 0
    %1100 = vmatpush1.bf16.msra.mxu0 0
    %1101 = vmatprep.subr.bf16.mxu0 0
    %1102 = vmatpush1.bf16.msra.mxu0 0
    %1103 = vmatprep.subr.bf16.mxu0 0
    %1104 = vmatpush1.bf16.msra.mxu0 0
    %1105 = vmatprep.subr.bf16.mxu0 0
    %1106 = vmatpush1.bf16.msra.mxu0 0
    %1107 = vmatprep.subr.bf16.mxu0 0
    %1108 = vmatpush1.bf16.msra.mxu0 0
    %1109 = vmatprep.mubr.bf16.mxu0 0
    %1110 = vmatmul.mubr.bf16.gmra.mrb[0].mxu0 %v1075
    %v1111 = vpop.f32.mrb[0].mxu0
    %v1112 = vadd.f32 0.0, %v1111
    %v1113 = vpop.f32.mrb[0].mxu0
    %v1114 = vpop.f32.mrb[0].mxu0
    %v1115 = vadd.f32 0.0, %v1114
    %v1116 = vpop.f32.mrb[0].mxu0
    %1117 = vdwg.mxu0
    %1118 = vrot.lane.b32.xlu0 %v294, 64
    %v1119 = vpop.permute.xlu0 %1118
    %v1122 = vsel %vm698, %v880, 0
    %1124 = vmatprep.subr.bf16.mxu0 0
    %1125 = vmatpush1.bf16.msra.mxu0 %v1119
    %1126 = vmatprep.subr.bf16.mxu0 0
    %1127 = vmatpush1.bf16.msra.mxu0 0
    %1128 = vmatprep.subr.bf16.mxu0 0
    %1129 = vmatpush1.bf16.msra.mxu0 0
    %1130 = vmatprep.subr.bf16.mxu0 0
    %1131 = vmatpush1.bf16.msra.mxu0 0
    %1132 = vmatprep.subr.bf16.mxu0 0
    %1133 = vmatpush1.bf16.msra.mxu0 0
    %1134 = vmatprep.subr.bf16.mxu0 0
    %1135 = vmatpush1.bf16.msra.mxu0 0
    %1136 = vmatprep.subr.bf16.mxu0 0
    %1137 = vmatpush1.bf16.msra.mxu0 0
    %1138 = vmatprep.subr.bf16.mxu0 0
    %1139 = vmatpush1.bf16.msra.mxu0 0
    %1140 = vmatprep.subr.bf16.mxu0 0
    %1141 = vmatpush1.bf16.msra.mxu0 0
    %1142 = vmatprep.subr.bf16.mxu0 0
    %1143 = vmatpush1.bf16.msra.mxu0 0
    %1144 = vmatprep.subr.bf16.mxu0 0
    %1145 = vmatpush1.bf16.msra.mxu0 0
    %1146 = vmatprep.subr.bf16.mxu0 0
    %1147 = vmatpush1.bf16.msra.mxu0 0
    %1148 = vmatprep.subr.bf16.mxu0 0
    %1149 = vmatpush1.bf16.msra.mxu0 0
    %1150 = vmatprep.subr.bf16.mxu0 0
    %1151 = vmatpush1.bf16.msra.mxu0 0
    %1152 = vmatprep.subr.bf16.mxu0 0
    %1153 = vmatpush1.bf16.msra.mxu0 0
    %1154 = vmatprep.subr.bf16.mxu0 0
    %1155 = vmatpush1.bf16.msra.mxu0 0
    %1156 = vmatprep.mubr.bf16.mxu0 0
    %1157 = vmatmul.mubr.bf16.gmra.mrb[0].mxu0 %v1122
    %v1158 = vpop.f32.mrb[0].mxu0
    %v1159 = vadd.f32 0.0, %v1158
    %v1160 = vpop.f32.mrb[0].mxu0
    %v1161 = vpop.f32.mrb[0].mxu0
    %v1162 = vadd.f32 0.0, %v1161
    %v1163 = vpop.f32.mrb[0].mxu0
    %1164 = vdwg.mxu0
    %1165 = vrot.lane.b32.xlu0 %v295, 64
    %v1166 = vpop.permute.xlu0 %1165
    %v1169 = vsel %vm698, %v881, 0
    %1171 = vmatprep.subr.bf16.mxu0 0
    %1172 = vmatpush1.bf16.msra.mxu0 %v1166
    %1173 = vmatprep.subr.bf16.mxu0 0
    %1174 = vmatpush1.bf16.msra.mxu0 0
    %1175 = vmatprep.subr.bf16.mxu0 0
    %1176 = vmatpush1.bf16.msra.mxu0 0
    %1177 = vmatprep.subr.bf16.mxu0 0
    %1178 = vmatpush1.bf16.msra.mxu0 0
    %1179 = vmatprep.subr.bf16.mxu0 0
    %1180 = vmatpush1.bf16.msra.mxu0 0
    %1181 = vmatprep.subr.bf16.mxu0 0
    %1182 = vmatpush1.bf16.msra.mxu0 0
    %1183 = vmatprep.subr.bf16.mxu0 0
    %1184 = vmatpush1.bf16.msra.mxu0 0
    %1185 = vmatprep.subr.bf16.mxu0 0
    %1186 = vmatpush1.bf16.msra.mxu0 0
    %1187 = vmatprep.subr.bf16.mxu0 0
    %1188 = vmatpush1.bf16.msra.mxu0 0
    %1189 = vmatprep.subr.bf16.mxu0 0
    %1190 = vmatpush1.bf16.msra.mxu0 0
    %1191 = vmatprep.subr.bf16.mxu0 0
    %1192 = vmatpush1.bf16.msra.mxu0 0
    %1193 = vmatprep.subr.bf16.mxu0 0
    %1194 = vmatpush1.bf16.msra.mxu0 0
    %1195 = vmatprep.subr.bf16.mxu0 0
    %1196 = vmatpush1.bf16.msra.mxu0 0
    %1197 = vmatprep.subr.bf16.mxu0 0
    %1198 = vmatpush1.bf16.msra.mxu0 0
    %1199 = vmatprep.subr.bf16.mxu0 0
    %1200 = vmatpush1.bf16.msra.mxu0 0
    %1201 = vmatprep.subr.bf16.mxu0 0
    %1202 = vmatpush1.bf16.msra.mxu0 0
    %1203 = vmatprep.mubr.bf16.mxu0 0
    %1204 = vmatmul.mubr.bf16.gmra.mrb[0].mxu0 %v1169
    %v1205 = vpop.f32.mrb[0].mxu0
    %v1206 = vadd.f32 0.0, %v1205
    %v1207 = vpop.f32.mrb[0].mxu0
    %v1208 = vpop.f32.mrb[0].mxu0
    %v1209 = vadd.f32 0.0, %v1208
    %v1210 = vpop.f32.mrb[0].mxu0
    %1211 = vdwg.mxu0
    %1212 = vrot.lane.b32.xlu0 %v296, 64
    %v1213 = vpop.permute.xlu0 %1212
    %v1216 = vsel %vm698, %v882, 0
    %1218 = vmatprep.subr.bf16.mxu0 0
    %1219 = vmatpush1.bf16.msra.mxu0 %v1213
    %1220 = vmatprep.subr.bf16.mxu0 0
    %1221 = vmatpush1.bf16.msra.mxu0 0
    %1222 = vmatprep.subr.bf16.mxu0 0
    %1223 = vmatpush1.bf16.msra.mxu0 0
    %1224 = vmatprep.subr.bf16.mxu0 0
    %1225 = vmatpush1.bf16.msra.mxu0 0
    %1226 = vmatprep.subr.bf16.mxu0 0
    %1227 = vmatpush1.bf16.msra.mxu0 0
    %1228 = vmatprep.subr.bf16.mxu0 0
    %1229 = vmatpush1.bf16.msra.mxu0 0
    %1230 = vmatprep.subr.bf16.mxu0 0
    %1231 = vmatpush1.bf16.msra.mxu0 0
    %1232 = vmatprep.subr.bf16.mxu0 0
    %1233 = vmatpush1.bf16.msra.mxu0 0
    %1234 = vmatprep.subr.bf16.mxu0 0
    %1235 = vmatpush1.bf16.msra.mxu0 0
    %1236 = vmatprep.subr.bf16.mxu0 0
    %1237 = vmatpush1.bf16.msra.mxu0 0
    %1238 = vmatprep.subr.bf16.mxu0 0
    %1239 = vmatpush1.bf16.msra.mxu0 0
    %1240 = vmatprep.subr.bf16.mxu0 0
    %1241 = vmatpush1.bf16.msra.mxu0 0
    %1242 = vmatprep.subr.bf16.mxu0 0
    %1243 = vmatpush1.bf16.msra.mxu0 0
    %1244 = vmatprep.subr.bf16.mxu0 0
    %1245 = vmatpush1.bf16.msra.mxu0 0
    %1246 = vmatprep.subr.bf16.mxu0 0
    %1247 = vmatpush1.bf16.msra.mxu0 0
    %1248 = vmatprep.subr.bf16.mxu0 0
    %1249 = vmatpush1.bf16.msra.mxu0 0
    %1250 = vmatprep.mubr.bf16.mxu0 0
    %1251 = vmatmul.mubr.bf16.gmra.mrb[0].mxu0 %v1216
    %v1252 = vpop.f32.mrb[0].mxu0
    %v1253 = vadd.f32 0.0, %v1252
    %v1254 = vpop.f32.mrb[0].mxu0
    %v1255 = vpop.f32.mrb[0].mxu0
    %v1256 = vadd.f32 0.0, %v1255
    %v1257 = vpop.f32.mrb[0].mxu0
    %1258 = vdwg.mxu0
    %v1259 = vpack.c.bf16 %v927, %v924
    %v1260 = vpack.c.bf16 %v974, %v971
    %v1261 = vpack.c.bf16 %v1021, %v1018
    %v1262 = vpack.c.bf16 %v1068, %v1065
    %v1263 = vpack.c.bf16 %v1115, %v1112
    %v1264 = vpack.c.bf16 %v1162, %v1159
    %v1265 = vpack.c.bf16 %v1209, %v1206
    %v1266 = vpack.c.bf16 %v1256, %v1253
    %1267 = vrot.lane.b32.xlu0 %v289, 120
    %v1268 = vpop.permute.xlu0 %1267
    %1269 = vrot.lane.b32.xlu0 %v289, 88
    %v1270 = vpop.permute.xlu0 %1269
    %v1272 = vsel %vm300, %v1268, 0
    %v1275 = vsel %vm300, %v1270, 0
    %1277 = vmatprep.subr.bf16.mxu0 0
    %1278 = vmatpush1.bf16.xpose.msra.mxu0 %v1275
    %1279 = vmatprep.subr.bf16.mxu0 0
    %1280 = vmatpush1.bf16.xpose.msra.mxu0 0
    %1281 = vmatprep.subr.bf16.mxu0 0
    %1282 = vmatpush1.bf16.xpose.msra.mxu0 0
    %1283 = vmatprep.subr.bf16.mxu0 0
    %1284 = vmatpush1.bf16.xpose.msra.mxu0 0
    %1285 = vmatprep.subr.bf16.mxu0 0
    %1286 = vmatpush1.bf16.xpose.msra.mxu0 0
    %1287 = vmatprep.subr.bf16.mxu0 0
    %1288 = vmatpush1.bf16.xpose.msra.mxu0 0
    %1289 = vmatprep.subr.bf16.mxu0 0
    %1290 = vmatpush1.bf16.xpose.msra.mxu0 0
    %1291 = vmatprep.subr.bf16.mxu0 0
    %1292 = vmatpush1.bf16.xpose.msra.mxu0 0
    %1293 = vmatprep.subr.bf16.mxu0 0
    %1294 = vmatpush1.bf16.xpose.msra.mxu0 0
    %1295 = vmatprep.subr.bf16.mxu0 0
    %1296 = vmatpush1.bf16.xpose.msra.mxu0 0
    %1297 = vmatprep.subr.bf16.mxu0 0
    %1298 = vmatpush1.bf16.xpose.msra.mxu0 0
    %1299 = vmatprep.subr.bf16.mxu0 0
    %1300 = vmatpush1.bf16.xpose.msra.mxu0 0
    %1301 = vmatprep.subr.bf16.mxu0 0
    %1302 = vmatpush1.bf16.xpose.msra.mxu0 0
    %1303 = vmatprep.subr.bf16.mxu0 0
    %1304 = vmatpush1.bf16.xpose.msra.mxu0 0
    %1305 = vmatprep.subr.bf16.mxu0 0
    %1306 = vmatpush1.bf16.xpose.msra.mxu0 0
    %1307 = vmatprep.subr.bf16.mxu0 0
    %1308 = vmatpush1.bf16.xpose.msra.mxu0 0
    %1309 = vmatprep.mubr.bf16.mxu0 0
    %1310 = vmatmul.mubr.bf16.gmra.mrb[0].mxu0 %v1272
    %v1311 = vpop.f32.mrb[0].mxu0
    %v1312 = vadd.f32 %v283, %v1311
    %v1313 = vpop.f32.mrb[0].mxu0
    %v1314 = vpop.f32.mrb[0].mxu0
    %v1315 = vadd.f32 %v284, %v1314
    %v1316 = vpop.f32.mrb[0].mxu0
    %1317 = vdwg.mxu0
    %1318 = vrot.lane.b32.xlu0 %v290, 120
    %v1319 = vpop.permute.xlu0 %1318
    %1320 = vrot.lane.b32.xlu0 %v290, 88
    %v1321 = vpop.permute.xlu0 %1320
    %v1323 = vsel %vm300, %v1319, 0
    %v1326 = vsel %vm300, %v1321, 0
    %1328 = vmatprep.subr.bf16.mxu0 0
    %1329 = vmatpush1.bf16.xpose.msra.mxu0 %v1326
    %1330 = vmatprep.subr.bf16.mxu0 0
    %1331 = vmatpush1.bf16.xpose.msra.mxu0 0
    %1332 = vmatprep.subr.bf16.mxu0 0
    %1333 = vmatpush1.bf16.xpose.msra.mxu0 0
    %1334 = vmatprep.subr.bf16.mxu0 0
    %1335 = vmatpush1.bf16.xpose.msra.mxu0 0
    %1336 = vmatprep.subr.bf16.mxu0 0
    %1337 = vmatpush1.bf16.xpose.msra.mxu0 0
    %1338 = vmatprep.subr.bf16.mxu0 0
    %1339 = vmatpush1.bf16.xpose.msra.mxu0 0
    %1340 = vmatprep.subr.bf16.mxu0 0
    %1341 = vmatpush1.bf16.xpose.msra.mxu0 0
    %1342 = vmatprep.subr.bf16.mxu0 0
    %1343 = vmatpush1.bf16.xpose.msra.mxu0 0
    %1344 = vmatprep.subr.bf16.mxu0 0
    %1345 = vmatpush1.bf16.xpose.msra.mxu0 0
    %1346 = vmatprep.subr.bf16.mxu0 0
    %1347 = vmatpush1.bf16.xpose.msra.mxu0 0
    %1348 = vmatprep.subr.bf16.mxu0 0
    %1349 = vmatpush1.bf16.xpose.msra.mxu0 0
    %1350 = vmatprep.subr.bf16.mxu0 0
    %1351 = vmatpush1.bf16.xpose.msra.mxu0 0
    %1352 = vmatprep.subr.bf16.mxu0 0
    %1353 = vmatpush1.bf16.xpose.msra.mxu0 0
    %1354 = vmatprep.subr.bf16.mxu0 0
    %1355 = vmatpush1.bf16.xpose.msra.mxu0 0
    %1356 = vmatprep.subr.bf16.mxu0 0
    %1357 = vmatpush1.bf16.xpose.msra.mxu0 0
    %1358 = vmatprep.subr.bf16.mxu0 0
    %1359 = vmatpush1.bf16.xpose.msra.mxu0 0
    %1360 = vmatprep.mubr.bf16.mxu0 0
    %1361 = vmatmul.mubr.bf16.gmra.mrb[0].mxu0 %v1323
    %v1362 = vpop.f32.mrb[0].mxu0
    %v1363 = vadd.f32 %v283, %v1362
    %v1364 = vpop.f32.mrb[0].mxu0
    %v1365 = vpop.f32.mrb[0].mxu0
    %v1366 = vadd.f32 %v284, %v1365
    %v1367 = vpop.f32.mrb[0].mxu0
    %1368 = vdwg.mxu0
    %1369 = vrot.lane.b32.xlu0 %v291, 120
    %v1370 = vpop.permute.xlu0 %1369
    %1371 = vrot.lane.b32.xlu0 %v291, 88
    %v1372 = vpop.permute.xlu0 %1371
    %v1374 = vsel %vm300, %v1370, 0
    %v1377 = vsel %vm300, %v1372, 0
    %1379 = vmatprep.subr.bf16.mxu0 0
    %1380 = vmatpush1.bf16.xpose.msra.mxu0 %v1377
    %1381 = vmatprep.subr.bf16.mxu0 0
    %1382 = vmatpush1.bf16.xpose.msra.mxu0 0
    %1383 = vmatprep.subr.bf16.mxu0 0
    %1384 = vmatpush1.bf16.xpose.msra.mxu0 0
    %1385 = vmatprep.subr.bf16.mxu0 0
    %1386 = vmatpush1.bf16.xpose.msra.mxu0 0
    %1387 = vmatprep.subr.bf16.mxu0 0
    %1388 = vmatpush1.bf16.xpose.msra.mxu0 0
    %1389 = vmatprep.subr.bf16.mxu0 0
    %1390 = vmatpush1.bf16.xpose.msra.mxu0 0
    %1391 = vmatprep.subr.bf16.mxu0 0
    %1392 = vmatpush1.bf16.xpose.msra.mxu0 0
    %1393 = vmatprep.subr.bf16.mxu0 0
    %1394 = vmatpush1.bf16.xpose.msra.mxu0 0
    %1395 = vmatprep.subr.bf16.mxu0 0
    %1396 = vmatpush1.bf16.xpose.msra.mxu0 0
    %1397 = vmatprep.subr.bf16.mxu0 0
    %1398 = vmatpush1.bf16.xpose.msra.mxu0 0
    %1399 = vmatprep.subr.bf16.mxu0 0
    %1400 = vmatpush1.bf16.xpose.msra.mxu0 0
    %1401 = vmatprep.subr.bf16.mxu0 0
    %1402 = vmatpush1.bf16.xpose.msra.mxu0 0
    %1403 = vmatprep.subr.bf16.mxu0 0
    %1404 = vmatpush1.bf16.xpose.msra.mxu0 0
    %1405 = vmatprep.subr.bf16.mxu0 0
    %1406 = vmatpush1.bf16.xpose.msra.mxu0 0
    %1407 = vmatprep.subr.bf16.mxu0 0
    %1408 = vmatpush1.bf16.xpose.msra.mxu0 0
    %1409 = vmatprep.subr.bf16.mxu0 0
    %1410 = vmatpush1.bf16.xpose.msra.mxu0 0
    %1411 = vmatprep.mubr.bf16.mxu0 0
    %1412 = vmatmul.mubr.bf16.gmra.mrb[0].mxu0 %v1374
    %v1413 = vpop.f32.mrb[0].mxu0
    %v1414 = vadd.f32 %v283, %v1413
    %v1415 = vpop.f32.mrb[0].mxu0
    %v1416 = vpop.f32.mrb[0].mxu0
    %v1417 = vadd.f32 %v284, %v1416
    %v1418 = vpop.f32.mrb[0].mxu0
    %1419 = vdwg.mxu0
    %1420 = vrot.lane.b32.xlu0 %v292, 120
    %v1421 = vpop.permute.xlu0 %1420
    %1422 = vrot.lane.b32.xlu0 %v292, 88
    %v1423 = vpop.permute.xlu0 %1422
    %v1425 = vsel %vm300, %v1421, 0
    %v1428 = vsel %vm300, %v1423, 0
    %1430 = vmatprep.subr.bf16.mxu0 0
    %1431 = vmatpush1.bf16.xpose.msra.mxu0 %v1428
    %1432 = vmatprep.subr.bf16.mxu0 0
    %1433 = vmatpush1.bf16.xpose.msra.mxu0 0
    %1434 = vmatprep.subr.bf16.mxu0 0
    %1435 = vmatpush1.bf16.xpose.msra.mxu0 0
    %1436 = vmatprep.subr.bf16.mxu0 0
    %1437 = vmatpush1.bf16.xpose.msra.mxu0 0
    %1438 = vmatprep.subr.bf16.mxu0 0
    %1439 = vmatpush1.bf16.xpose.msra.mxu0 0
    %1440 = vmatprep.subr.bf16.mxu0 0
    %1441 = vmatpush1.bf16.xpose.msra.mxu0 0
    %1442 = vmatprep.subr.bf16.mxu0 0
    %1443 = vmatpush1.bf16.xpose.msra.mxu0 0
    %1444 = vmatprep.subr.bf16.mxu0 0
    %1445 = vmatpush1.bf16.xpose.msra.mxu0 0
    %1446 = vmatprep.subr.bf16.mxu0 0
    %1447 = vmatpush1.bf16.xpose.msra.mxu0 0
    %1448 = vmatprep.subr.bf16.mxu0 0
    %1449 = vmatpush1.bf16.xpose.msra.mxu0 0
    %1450 = vmatprep.subr.bf16.mxu0 0
    %1451 = vmatpush1.bf16.xpose.msra.mxu0 0
    %1452 = vmatprep.subr.bf16.mxu0 0
    %1453 = vmatpush1.bf16.xpose.msra.mxu0 0
    %1454 = vmatprep.subr.bf16.mxu0 0
    %1455 = vmatpush1.bf16.xpose.msra.mxu0 0
    %1456 = vmatprep.subr.bf16.mxu0 0
    %1457 = vmatpush1.bf16.xpose.msra.mxu0 0
    %1458 = vmatprep.subr.bf16.mxu0 0
    %1459 = vmatpush1.bf16.xpose.msra.mxu0 0
    %1460 = vmatprep.subr.bf16.mxu0 0
    %1461 = vmatpush1.bf16.xpose.msra.mxu0 0
    %1462 = vmatprep.mubr.bf16.mxu0 0
    %1463 = vmatmul.mubr.bf16.gmra.mrb[0].mxu0 %v1425
    %v1464 = vpop.f32.mrb[0].mxu0
    %v1465 = vadd.f32 %v283, %v1464
    %v1466 = vpop.f32.mrb[0].mxu0
    %v1467 = vpop.f32.mrb[0].mxu0
    %v1468 = vadd.f32 %v284, %v1467
    %v1469 = vpop.f32.mrb[0].mxu0
    %1470 = vdwg.mxu0
    %1471 = vrot.lane.b32.xlu0 %v293, 120
    %v1472 = vpop.permute.xlu0 %1471
    %1473 = vrot.lane.b32.xlu0 %v293, 88
    %v1474 = vpop.permute.xlu0 %1473
    %v1476 = vsel %vm300, %v1472, 0
    %v1479 = vsel %vm300, %v1474, 0
    %1481 = vmatprep.subr.bf16.mxu0 0
    %1482 = vmatpush1.bf16.xpose.msra.mxu0 %v1479
    %1483 = vmatprep.subr.bf16.mxu0 0
    %1484 = vmatpush1.bf16.xpose.msra.mxu0 0
    %1485 = vmatprep.subr.bf16.mxu0 0
    %1486 = vmatpush1.bf16.xpose.msra.mxu0 0
    %1487 = vmatprep.subr.bf16.mxu0 0
    %1488 = vmatpush1.bf16.xpose.msra.mxu0 0
    %1489 = vmatprep.subr.bf16.mxu0 0
    %1490 = vmatpush1.bf16.xpose.msra.mxu0 0
    %1491 = vmatprep.subr.bf16.mxu0 0
    %1492 = vmatpush1.bf16.xpose.msra.mxu0 0
    %1493 = vmatprep.subr.bf16.mxu0 0
    %1494 = vmatpush1.bf16.xpose.msra.mxu0 0
    %1495 = vmatprep.subr.bf16.mxu0 0
    %1496 = vmatpush1.bf16.xpose.msra.mxu0 0
    %1497 = vmatprep.subr.bf16.mxu0 0
    %1498 = vmatpush1.bf16.xpose.msra.mxu0 0
    %1499 = vmatprep.subr.bf16.mxu0 0
    %1500 = vmatpush1.bf16.xpose.msra.mxu0 0
    %1501 = vmatprep.subr.bf16.mxu0 0
    %1502 = vmatpush1.bf16.xpose.msra.mxu0 0
    %1503 = vmatprep.subr.bf16.mxu0 0
    %1504 = vmatpush1.bf16.xpose.msra.mxu0 0
    %1505 = vmatprep.subr.bf16.mxu0 0
    %1506 = vmatpush1.bf16.xpose.msra.mxu0 0
    %1507 = vmatprep.subr.bf16.mxu0 0
    %1508 = vmatpush1.bf16.xpose.msra.mxu0 0
    %1509 = vmatprep.subr.bf16.mxu0 0
    %1510 = vmatpush1.bf16.xpose.msra.mxu0 0
    %1511 = vmatprep.subr.bf16.mxu0 0
    %1512 = vmatpush1.bf16.xpose.msra.mxu0 0
    %1513 = vmatprep.mubr.bf16.mxu0 0
    %1514 = vmatmul.mubr.bf16.gmra.mrb[0].mxu0 %v1476
    %v1515 = vpop.f32.mrb[0].mxu0
    %v1516 = vadd.f32 %v283, %v1515
    %v1517 = vpop.f32.mrb[0].mxu0
    %v1518 = vpop.f32.mrb[0].mxu0
    %v1519 = vadd.f32 %v284, %v1518
    %v1520 = vpop.f32.mrb[0].mxu0
    %1521 = vdwg.mxu0
    %1522 = vrot.lane.b32.xlu0 %v294, 120
    %v1523 = vpop.permute.xlu0 %1522
    %1524 = vrot.lane.b32.xlu0 %v294, 88
    %v1525 = vpop.permute.xlu0 %1524
    %v1527 = vsel %vm300, %v1523, 0
    %v1530 = vsel %vm300, %v1525, 0
    %1532 = vmatprep.subr.bf16.mxu0 0
    %1533 = vmatpush1.bf16.xpose.msra.mxu0 %v1530
    %1534 = vmatprep.subr.bf16.mxu0 0
    %1535 = vmatpush1.bf16.xpose.msra.mxu0 0
    %1536 = vmatprep.subr.bf16.mxu0 0
    %1537 = vmatpush1.bf16.xpose.msra.mxu0 0
    %1538 = vmatprep.subr.bf16.mxu0 0
    %1539 = vmatpush1.bf16.xpose.msra.mxu0 0
    %1540 = vmatprep.subr.bf16.mxu0 0
    %1541 = vmatpush1.bf16.xpose.msra.mxu0 0
    %1542 = vmatprep.subr.bf16.mxu0 0
    %1543 = vmatpush1.bf16.xpose.msra.mxu0 0
    %1544 = vmatprep.subr.bf16.mxu0 0
    %1545 = vmatpush1.bf16.xpose.msra.mxu0 0
    %1546 = vmatprep.subr.bf16.mxu0 0
    %1547 = vmatpush1.bf16.xpose.msra.mxu0 0
    %1548 = vmatprep.subr.bf16.mxu0 0
    %1549 = vmatpush1.bf16.xpose.msra.mxu0 0
    %1550 = vmatprep.subr.bf16.mxu0 0
    %1551 = vmatpush1.bf16.xpose.msra.mxu0 0
    %1552 = vmatprep.subr.bf16.mxu0 0
    %1553 = vmatpush1.bf16.xpose.msra.mxu0 0
    %1554 = vmatprep.subr.bf16.mxu0 0
    %1555 = vmatpush1.bf16.xpose.msra.mxu0 0
    %1556 = vmatprep.subr.bf16.mxu0 0
    %1557 = vmatpush1.bf16.xpose.msra.mxu0 0
    %1558 = vmatprep.subr.bf16.mxu0 0
    %1559 = vmatpush1.bf16.xpose.msra.mxu0 0
    %1560 = vmatprep.subr.bf16.mxu0 0
    %1561 = vmatpush1.bf16.xpose.msra.mxu0 0
    %1562 = vmatprep.subr.bf16.mxu0 0
    %1563 = vmatpush1.bf16.xpose.msra.mxu0 0
    %1564 = vmatprep.mubr.bf16.mxu0 0
    %1565 = vmatmul.mubr.bf16.gmra.mrb[0].mxu0 %v1527
    %v1566 = vpop.f32.mrb[0].mxu0
    %v1567 = vadd.f32 %v283, %v1566
    %v1568 = vpop.f32.mrb[0].mxu0
    %v1569 = vpop.f32.mrb[0].mxu0
    %v1570 = vadd.f32 %v284, %v1569
    %v1571 = vpop.f32.mrb[0].mxu0
    %1572 = vdwg.mxu0
    %1573 = vrot.lane.b32.xlu0 %v295, 120
    %v1574 = vpop.permute.xlu0 %1573
    %1575 = vrot.lane.b32.xlu0 %v295, 88
    %v1576 = vpop.permute.xlu0 %1575
    %v1578 = vsel %vm300, %v1574, 0
    %v1581 = vsel %vm300, %v1576, 0
    %1583 = vmatprep.subr.bf16.mxu0 0
    %1584 = vmatpush1.bf16.xpose.msra.mxu0 %v1581
    %1585 = vmatprep.subr.bf16.mxu0 0
    %1586 = vmatpush1.bf16.xpose.msra.mxu0 0
    %1587 = vmatprep.subr.bf16.mxu0 0
    %1588 = vmatpush1.bf16.xpose.msra.mxu0 0
    %1589 = vmatprep.subr.bf16.mxu0 0
    %1590 = vmatpush1.bf16.xpose.msra.mxu0 0
    %1591 = vmatprep.subr.bf16.mxu0 0
    %1592 = vmatpush1.bf16.xpose.msra.mxu0 0
    %1593 = vmatprep.subr.bf16.mxu0 0
    %1594 = vmatpush1.bf16.xpose.msra.mxu0 0
    %1595 = vmatprep.subr.bf16.mxu0 0
    %1596 = vmatpush1.bf16.xpose.msra.mxu0 0
    %1597 = vmatprep.subr.bf16.mxu0 0
    %1598 = vmatpush1.bf16.xpose.msra.mxu0 0
    %1599 = vmatprep.subr.bf16.mxu0 0
    %1600 = vmatpush1.bf16.xpose.msra.mxu0 0
    %1601 = vmatprep.subr.bf16.mxu0 0
    %1602 = vmatpush1.bf16.xpose.msra.mxu0 0
    %1603 = vmatprep.subr.bf16.mxu0 0
    %1604 = vmatpush1.bf16.xpose.msra.mxu0 0
    %1605 = vmatprep.subr.bf16.mxu0 0
    %1606 = vmatpush1.bf16.xpose.msra.mxu0 0
    %1607 = vmatprep.subr.bf16.mxu0 0
    %1608 = vmatpush1.bf16.xpose.msra.mxu0 0
    %1609 = vmatprep.subr.bf16.mxu0 0
    %1610 = vmatpush1.bf16.xpose.msra.mxu0 0
    %1611 = vmatprep.subr.bf16.mxu0 0
    %1612 = vmatpush1.bf16.xpose.msra.mxu0 0
    %1613 = vmatprep.subr.bf16.mxu0 0
    %1614 = vmatpush1.bf16.xpose.msra.mxu0 0
    %1615 = vmatprep.mubr.bf16.mxu0 0
    %1616 = vmatmul.mubr.bf16.gmra.mrb[0].mxu0 %v1578
    %v1617 = vpop.f32.mrb[0].mxu0
    %v1618 = vadd.f32 %v283, %v1617
    %v1619 = vpop.f32.mrb[0].mxu0
    %v1620 = vpop.f32.mrb[0].mxu0
    %v1621 = vadd.f32 %v284, %v1620
    %v1622 = vpop.f32.mrb[0].mxu0
    %1623 = vdwg.mxu0
    %1624 = vrot.lane.b32.xlu0 %v296, 120
    %v1625 = vpop.permute.xlu0 %1624
    %1626 = vrot.lane.b32.xlu0 %v296, 88
    %v1627 = vpop.permute.xlu0 %1626
    %v1629 = vsel %vm300, %v1625, 0
    %v1632 = vsel %vm300, %v1627, 0
    %1634 = vmatprep.subr.bf16.mxu0 0
    %1635 = vmatpush1.bf16.xpose.msra.mxu0 %v1632
    %1636 = vmatprep.subr.bf16.mxu0 0
    %1637 = vmatpush1.bf16.xpose.msra.mxu0 0
    %1638 = vmatprep.subr.bf16.mxu0 0
    %1639 = vmatpush1.bf16.xpose.msra.mxu0 0
    %1640 = vmatprep.subr.bf16.mxu0 0
    %1641 = vmatpush1.bf16.xpose.msra.mxu0 0
    %1642 = vmatprep.subr.bf16.mxu0 0
    %1643 = vmatpush1.bf16.xpose.msra.mxu0 0
    %1644 = vmatprep.subr.bf16.mxu0 0
    %1645 = vmatpush1.bf16.xpose.msra.mxu0 0
    %1646 = vmatprep.subr.bf16.mxu0 0
    %1647 = vmatpush1.bf16.xpose.msra.mxu0 0
    %1648 = vmatprep.subr.bf16.mxu0 0
    %1649 = vmatpush1.bf16.xpose.msra.mxu0 0
    %1650 = vmatprep.subr.bf16.mxu0 0
    %1651 = vmatpush1.bf16.xpose.msra.mxu0 0
    %1652 = vmatprep.subr.bf16.mxu0 0
    %1653 = vmatpush1.bf16.xpose.msra.mxu0 0
    %1654 = vmatprep.subr.bf16.mxu0 0
    %1655 = vmatpush1.bf16.xpose.msra.mxu0 0
    %1656 = vmatprep.subr.bf16.mxu0 0
    %1657 = vmatpush1.bf16.xpose.msra.mxu0 0
    %1658 = vmatprep.subr.bf16.mxu0 0
    %1659 = vmatpush1.bf16.xpose.msra.mxu0 0
    %1660 = vmatprep.subr.bf16.mxu0 0
    %1661 = vmatpush1.bf16.xpose.msra.mxu0 0
    %1662 = vmatprep.subr.bf16.mxu0 0
    %1663 = vmatpush1.bf16.xpose.msra.mxu0 0
    %1664 = vmatprep.subr.bf16.mxu0 0
    %1665 = vmatpush1.bf16.xpose.msra.mxu0 0
    %1666 = vmatprep.mubr.bf16.mxu0 0
    %1667 = vmatmul.mubr.bf16.gmra.mrb[0].mxu0 %v1629
    %v1668 = vpop.f32.mrb[0].mxu0
    %v1669 = vadd.f32 %v283, %v1668
    %v1670 = vpop.f32.mrb[0].mxu0
    %v1671 = vpop.f32.mrb[0].mxu0
    %v1672 = vadd.f32 %v284, %v1671
    %v1673 = vpop.f32.mrb[0].mxu0
    %1674 = vdwg.mxu0
    %v1675 = vsel %vm698, %v1312, -inf
    %1676 = vmax.xlane.f32.xlu0 %v1675
    %v1677 = vpop.xlane.xlu0 %1676
    %v1678 = vsel %vm698, %v1315, -inf
    %1679 = vmax.xlane.f32.xlu0 %v1678
    %v1680 = vpop.xlane.xlu0 %1679
    %v1681 = vsel %vm698, %v1363, -inf
    %1682 = vmax.xlane.f32.xlu0 %v1681
    %v1683 = vpop.xlane.xlu0 %1682
    %v1684 = vsel %vm698, %v1366, -inf
    %1685 = vmax.xlane.f32.xlu0 %v1684
    %v1686 = vpop.xlane.xlu0 %1685
    %v1687 = vsel %vm698, %v1414, -inf
    %1688 = vmax.xlane.f32.xlu0 %v1687
    %v1689 = vpop.xlane.xlu0 %1688
    %v1690 = vsel %vm698, %v1417, -inf
    %1691 = vmax.xlane.f32.xlu0 %v1690
    %v1692 = vpop.xlane.xlu0 %1691
    %v1693 = vsel %vm698, %v1465, -inf
    %1694 = vmax.xlane.f32.xlu0 %v1693
    %v1695 = vpop.xlane.xlu0 %1694
    %v1696 = vsel %vm698, %v1468, -inf
    %1697 = vmax.xlane.f32.xlu0 %v1696
    %v1698 = vpop.xlane.xlu0 %1697
    %v1699 = vsel %vm698, %v1516, -inf
    %1700 = vmax.xlane.f32.xlu0 %v1699
    %v1701 = vpop.xlane.xlu0 %1700
    %v1702 = vsel %vm698, %v1519, -inf
    %1703 = vmax.xlane.f32.xlu0 %v1702
    %v1704 = vpop.xlane.xlu0 %1703
    %v1705 = vsel %vm698, %v1567, -inf
    %1706 = vmax.xlane.f32.xlu0 %v1705
    %v1707 = vpop.xlane.xlu0 %1706
    %v1708 = vsel %vm698, %v1570, -inf
    %1709 = vmax.xlane.f32.xlu0 %v1708
    %v1710 = vpop.xlane.xlu0 %1709
    %v1711 = vsel %vm698, %v1618, -inf
    %1712 = vmax.xlane.f32.xlu0 %v1711
    %v1713 = vpop.xlane.xlu0 %1712
    %v1714 = vsel %vm698, %v1621, -inf
    %1715 = vmax.xlane.f32.xlu0 %v1714
    %v1716 = vpop.xlane.xlu0 %1715
    %v1717 = vsel %vm698, %v1669, -inf
    %1718 = vmax.xlane.f32.xlu0 %v1717
    %v1719 = vpop.xlane.xlu0 %1718
    %v1720 = vsel %vm698, %v1672, -inf
    %1721 = vmax.xlane.f32.xlu0 %v1720
    %v1722 = vpop.xlane.xlu0 %1721
    %v1723 = vsub.f32 %v1312, %v1677
    %v1724 = vsub.f32 %v1315, %v1680
    %v1725 = vsub.f32 %v1363, %v1683
    %v1726 = vsub.f32 %v1366, %v1686
    %v1727 = vsub.f32 %v1414, %v1689
    %v1728 = vsub.f32 %v1417, %v1692
    %v1729 = vsub.f32 %v1465, %v1695
    %v1730 = vsub.f32 %v1468, %v1698
    %v1731 = vsub.f32 %v1516, %v1701
    %v1732 = vsub.f32 %v1519, %v1704
    %v1733 = vsub.f32 %v1567, %v1707
    %v1734 = vsub.f32 %v1570, %v1710
    %v1735 = vsub.f32 %v1618, %v1713
    %v1736 = vsub.f32 %v1621, %v1716
    %v1737 = vsub.f32 %v1669, %v1719
    %v1738 = vsub.f32 %v1672, %v1722
    %v1739 = vmul.f32 %v1723, 1.442695
    %v1740 = vpow.pop %v1739
    %v1741 = vmul.f32 %v1724, 1.442695
    %v1742 = vpow.pop %v1741
    %v1743 = vmul.f32 %v1725, 1.442695
    %v1744 = vpow.pop %v1743
    %v1745 = vmul.f32 %v1726, 1.442695
    %v1746 = vpow.pop %v1745
    %v1747 = vmul.f32 %v1727, 1.442695
    %v1748 = vpow.pop %v1747
    %v1749 = vmul.f32 %v1728, 1.442695
    %v1750 = vpow.pop %v1749
    %v1751 = vmul.f32 %v1729, 1.442695
    %v1752 = vpow.pop %v1751
    %v1753 = vmul.f32 %v1730, 1.442695
    %v1754 = vpow.pop %v1753
    %v1755 = vmul.f32 %v1731, 1.442695
    %v1756 = vpow.pop %v1755
    %v1757 = vmul.f32 %v1732, 1.442695
    %v1758 = vpow.pop %v1757
    %v1759 = vmul.f32 %v1733, 1.442695
    %v1760 = vpow.pop %v1759
    %v1761 = vmul.f32 %v1734, 1.442695
    %v1762 = vpow.pop %v1761
    %v1763 = vmul.f32 %v1735, 1.442695
    %v1764 = vpow.pop %v1763
    %v1765 = vmul.f32 %v1736, 1.442695
    %v1766 = vpow.pop %v1765
    %v1767 = vmul.f32 %v1737, 1.442695
    %v1768 = vpow.pop %v1767
    %v1769 = vmul.f32 %v1738, 1.442695
    %v1770 = vpow.pop %v1769
    %v1771 = vsel %vm698, %v1740, 0.0
    %1772 = vadd.xlane.f32.xlu0 %v1771
    %v1773 = vpop.xlane.xlu0 %1772
    %v1774 = vsel %vm698, %v1742, 0.0
    %1775 = vadd.xlane.f32.xlu0 %v1774
    %v1776 = vpop.xlane.xlu0 %1775
    %v1777 = vsel %vm698, %v1744, 0.0
    %1778 = vadd.xlane.f32.xlu0 %v1777
    %v1779 = vpop.xlane.xlu0 %1778
    %v1780 = vsel %vm698, %v1746, 0.0
    %1781 = vadd.xlane.f32.xlu0 %v1780
    %v1782 = vpop.xlane.xlu0 %1781
    %v1783 = vsel %vm698, %v1748, 0.0
    %1784 = vadd.xlane.f32.xlu0 %v1783
    %v1785 = vpop.xlane.xlu0 %1784
    %v1786 = vsel %vm698, %v1750, 0.0
    %1787 = vadd.xlane.f32.xlu0 %v1786
    %v1788 = vpop.xlane.xlu0 %1787
    %v1789 = vsel %vm698, %v1752, 0.0
    %1790 = vadd.xlane.f32.xlu0 %v1789
    %v1791 = vpop.xlane.xlu0 %1790
    %v1792 = vsel %vm698, %v1754, 0.0
    %1793 = vadd.xlane.f32.xlu0 %v1792
    %v1794 = vpop.xlane.xlu0 %1793
    %v1795 = vsel %vm698, %v1756, 0.0
    %1796 = vadd.xlane.f32.xlu0 %v1795
    %v1797 = vpop.xlane.xlu0 %1796
    %v1798 = vsel %vm698, %v1758, 0.0
    %1799 = vadd.xlane.f32.xlu0 %v1798
    %v1800 = vpop.xlane.xlu0 %1799
    %v1801 = vsel %vm698, %v1760, 0.0
    %1802 = vadd.xlane.f32.xlu0 %v1801
    %v1803 = vpop.xlane.xlu0 %1802
    %v1804 = vsel %vm698, %v1762, 0.0
    %1805 = vadd.xlane.f32.xlu0 %v1804
    %v1806 = vpop.xlane.xlu0 %1805
    %v1807 = vsel %vm698, %v1764, 0.0
    %1808 = vadd.xlane.f32.xlu0 %v1807
    %v1809 = vpop.xlane.xlu0 %1808
    %v1810 = vsel %vm698, %v1766, 0.0
    %1811 = vadd.xlane.f32.xlu0 %v1810
    %v1812 = vpop.xlane.xlu0 %1811
    %v1813 = vsel %vm698, %v1768, 0.0
    %1814 = vadd.xlane.f32.xlu0 %v1813
    %v1815 = vpop.xlane.xlu0 %1814
    %v1816 = vsel %vm698, %v1770, 0.0
    %1817 = vadd.xlane.f32.xlu0 %v1816
    %v1818 = vpop.xlane.xlu0 %1817
    %v1819 = vrcp.pop %v1773
    %v1820 = vrcp.pop %v1776
    %v1821 = vrcp.pop %v1779
    %v1822 = vrcp.pop %v1782
    %v1823 = vrcp.pop %v1785
    %v1824 = vrcp.pop %v1788
    %v1825 = vrcp.pop %v1791
    %v1826 = vrcp.pop %v1794
    %v1827 = vrcp.pop %v1797
    %v1828 = vrcp.pop %v1800
    %v1829 = vrcp.pop %v1803
    %v1830 = vrcp.pop %v1806
    %v1831 = vrcp.pop %v1809
    %v1832 = vrcp.pop %v1812
    %v1833 = vrcp.pop %v1815
    %v1834 = vrcp.pop %v1818
    %v1835 = vmul.f32 %v1740, %v1819
    %v1836 = vmul.f32 %v1742, %v1820
    %v1837 = vmul.f32 %v1744, %v1821
    %v1838 = vmul.f32 %v1746, %v1822
    %v1839 = vmul.f32 %v1748, %v1823
    %v1840 = vmul.f32 %v1750, %v1824
    %v1841 = vmul.f32 %v1752, %v1825
    %v1842 = vmul.f32 %v1754, %v1826
    %v1843 = vmul.f32 %v1756, %v1827
    %v1844 = vmul.f32 %v1758, %v1828
    %v1845 = vmul.f32 %v1760, %v1829
    %v1846 = vmul.f32 %v1762, %v1830
    %v1847 = vmul.f32 %v1764, %v1831
    %v1848 = vmul.f32 %v1766, %v1832
    %v1849 = vmul.f32 %v1768, %v1833
    %v1850 = vmul.f32 %v1770, %v1834
    %v1851 = vpack.c.bf16 %v1836, %v1835
    %v1852 = vpack.c.bf16 %v1838, %v1837
    %v1853 = vpack.c.bf16 %v1840, %v1839
    %v1854 = vpack.c.bf16 %v1842, %v1841
    %v1855 = vpack.c.bf16 %v1844, %v1843
    %v1856 = vpack.c.bf16 %v1846, %v1845
    %v1857 = vpack.c.bf16 %v1848, %v1847
    %v1858 = vpack.c.bf16 %v1850, %v1849
    %1859 = vrot.lane.b32.xlu0 %v289, 56
    %v1860 = vpop.permute.xlu0 %1859
    %v1863 = vsel %vm698, %v1851, 0
    %1865 = vmatprep.subr.bf16.mxu0 0
    %1866 = vmatpush1.bf16.msra.mxu0 %v1860
    %1867 = vmatprep.subr.bf16.mxu0 0
    %1868 = vmatpush1.bf16.msra.mxu0 0
    %1869 = vmatprep.subr.bf16.mxu0 0
    %1870 = vmatpush1.bf16.msra.mxu0 0
    %1871 = vmatprep.subr.bf16.mxu0 0
    %1872 = vmatpush1.bf16.msra.mxu0 0
    %1873 = vmatprep.subr.bf16.mxu0 0
    %1874 = vmatpush1.bf16.msra.mxu0 0
    %1875 = vmatprep.subr.bf16.mxu0 0
    %1876 = vmatpush1.bf16.msra.mxu0 0
    %1877 = vmatprep.subr.bf16.mxu0 0
    %1878 = vmatpush1.bf16.msra.mxu0 0
    %1879 = vmatprep.subr.bf16.mxu0 0
    %1880 = vmatpush1.bf16.msra.mxu0 0
    %1881 = vmatprep.subr.bf16.mxu0 0
    %1882 = vmatpush1.bf16.msra.mxu0 0
    %1883 = vmatprep.subr.bf16.mxu0 0
    %1884 = vmatpush1.bf16.msra.mxu0 0
    %1885 = vmatprep.subr.bf16.mxu0 0
    %1886 = vmatpush1.bf16.msra.mxu0 0
    %1887 = vmatprep.subr.bf16.mxu0 0
    %1888 = vmatpush1.bf16.msra.mxu0 0
    %1889 = vmatprep.subr.bf16.mxu0 0
    %1890 = vmatpush1.bf16.msra.mxu0 0
    %1891 = vmatprep.subr.bf16.mxu0 0
    %1892 = vmatpush1.bf16.msra.mxu0 0
    %1893 = vmatprep.subr.bf16.mxu0 0
    %1894 = vmatpush1.bf16.msra.mxu0 0
    %1895 = vmatprep.subr.bf16.mxu0 0
    %1896 = vmatpush1.bf16.msra.mxu0 0
    %1897 = vmatprep.mubr.bf16.mxu0 0
    %1898 = vmatmul.mubr.bf16.gmra.mrb[0].mxu0 %v1863
    %v1899 = vpop.f32.mrb[0].mxu0
    %v1900 = vadd.f32 0.0, %v1899
    %v1901 = vpop.f32.mrb[0].mxu0
    %v1902 = vpop.f32.mrb[0].mxu0
    %v1903 = vadd.f32 0.0, %v1902
    %v1904 = vpop.f32.mrb[0].mxu0
    %1905 = vdwg.mxu0
    %1906 = vrot.lane.b32.xlu0 %v290, 56
    %v1907 = vpop.permute.xlu0 %1906
    %v1910 = vsel %vm698, %v1852, 0
    %1912 = vmatprep.subr.bf16.mxu0 0
    %1913 = vmatpush1.bf16.msra.mxu0 %v1907
    %1914 = vmatprep.subr.bf16.mxu0 0
    %1915 = vmatpush1.bf16.msra.mxu0 0
    %1916 = vmatprep.subr.bf16.mxu0 0
    %1917 = vmatpush1.bf16.msra.mxu0 0
    %1918 = vmatprep.subr.bf16.mxu0 0
    %1919 = vmatpush1.bf16.msra.mxu0 0
    %1920 = vmatprep.subr.bf16.mxu0 0
    %1921 = vmatpush1.bf16.msra.mxu0 0
    %1922 = vmatprep.subr.bf16.mxu0 0
    %1923 = vmatpush1.bf16.msra.mxu0 0
    %1924 = vmatprep.subr.bf16.mxu0 0
    %1925 = vmatpush1.bf16.msra.mxu0 0
    %1926 = vmatprep.subr.bf16.mxu0 0
    %1927 = vmatpush1.bf16.msra.mxu0 0
    %1928 = vmatprep.subr.bf16.mxu0 0
    %1929 = vmatpush1.bf16.msra.mxu0 0
    %1930 = vmatprep.subr.bf16.mxu0 0
    %1931 = vmatpush1.bf16.msra.mxu0 0
    %1932 = vmatprep.subr.bf16.mxu0 0
    %1933 = vmatpush1.bf16.msra.mxu0 0
    %1934 = vmatprep.subr.bf16.mxu0 0
    %1935 = vmatpush1.bf16.msra.mxu0 0
    %1936 = vmatprep.subr.bf16.mxu0 0
    %1937 = vmatpush1.bf16.msra.mxu0 0
    %1938 = vmatprep.subr.bf16.mxu0 0
    %1939 = vmatpush1.bf16.msra.mxu0 0
    %1940 = vmatprep.subr.bf16.mxu0 0
    %1941 = vmatpush1.bf16.msra.mxu0 0
    %1942 = vmatprep.subr.bf16.mxu0 0
    %1943 = vmatpush1.bf16.msra.mxu0 0
    %1944 = vmatprep.mubr.bf16.mxu0 0
    %1945 = vmatmul.mubr.bf16.gmra.mrb[0].mxu0 %v1910
    %v1946 = vpop.f32.mrb[0].mxu0
    %v1947 = vadd.f32 0.0, %v1946
    %v1948 = vpop.f32.mrb[0].mxu0
    %v1949 = vpop.f32.mrb[0].mxu0
    %v1950 = vadd.f32 0.0, %v1949
    %v1951 = vpop.f32.mrb[0].mxu0
    %1952 = vdwg.mxu0
    %1953 = vrot.lane.b32.xlu0 %v291, 56
    %v1954 = vpop.permute.xlu0 %1953
    %v1957 = vsel %vm698, %v1853, 0
    %1959 = vmatprep.subr.bf16.mxu0 0
    %1960 = vmatpush1.bf16.msra.mxu0 %v1954
    %1961 = vmatprep.subr.bf16.mxu0 0
    %1962 = vmatpush1.bf16.msra.mxu0 0
    %1963 = vmatprep.subr.bf16.mxu0 0
    %1964 = vmatpush1.bf16.msra.mxu0 0
    %1965 = vmatprep.subr.bf16.mxu0 0
    %1966 = vmatpush1.bf16.msra.mxu0 0
    %1967 = vmatprep.subr.bf16.mxu0 0
    %1968 = vmatpush1.bf16.msra.mxu0 0
    %1969 = vmatprep.subr.bf16.mxu0 0
    %1970 = vmatpush1.bf16.msra.mxu0 0
    %1971 = vmatprep.subr.bf16.mxu0 0
    %1972 = vmatpush1.bf16.msra.mxu0 0
    %1973 = vmatprep.subr.bf16.mxu0 0
    %1974 = vmatpush1.bf16.msra.mxu0 0
    %1975 = vmatprep.subr.bf16.mxu0 0
    %1976 = vmatpush1.bf16.msra.mxu0 0
    %1977 = vmatprep.subr.bf16.mxu0 0
    %1978 = vmatpush1.bf16.msra.mxu0 0
    %1979 = vmatprep.subr.bf16.mxu0 0
    %1980 = vmatpush1.bf16.msra.mxu0 0
    %1981 = vmatprep.subr.bf16.mxu0 0
    %1982 = vmatpush1.bf16.msra.mxu0 0
    %1983 = vmatprep.subr.bf16.mxu0 0
    %1984 = vmatpush1.bf16.msra.mxu0 0
    %1985 = vmatprep.subr.bf16.mxu0 0
    %1986 = vmatpush1.bf16.msra.mxu0 0
    %1987 = vmatprep.subr.bf16.mxu0 0
    %1988 = vmatpush1.bf16.msra.mxu0 0
    %1989 = vmatprep.subr.bf16.mxu0 0
    %1990 = vmatpush1.bf16.msra.mxu0 0
    %1991 = vmatprep.mubr.bf16.mxu0 0
    %1992 = vmatmul.mubr.bf16.gmra.mrb[0].mxu0 %v1957
    %v1993 = vpop.f32.mrb[0].mxu0
    %v1994 = vadd.f32 0.0, %v1993
    %v1995 = vpop.f32.mrb[0].mxu0
    %v1996 = vpop.f32.mrb[0].mxu0
    %v1997 = vadd.f32 0.0, %v1996
    %v1998 = vpop.f32.mrb[0].mxu0
    %1999 = vdwg.mxu0
    %2000 = vrot.lane.b32.xlu0 %v292, 56
    %v2001 = vpop.permute.xlu0 %2000
    %v2004 = vsel %vm698, %v1854, 0
    %2006 = vmatprep.subr.bf16.mxu0 0
    %2007 = vmatpush1.bf16.msra.mxu0 %v2001
    %2008 = vmatprep.subr.bf16.mxu0 0
    %2009 = vmatpush1.bf16.msra.mxu0 0
    %2010 = vmatprep.subr.bf16.mxu0 0
    %2011 = vmatpush1.bf16.msra.mxu0 0
    %2012 = vmatprep.subr.bf16.mxu0 0
    %2013 = vmatpush1.bf16.msra.mxu0 0
    %2014 = vmatprep.subr.bf16.mxu0 0
    %2015 = vmatpush1.bf16.msra.mxu0 0
    %2016 = vmatprep.subr.bf16.mxu0 0
    %2017 = vmatpush1.bf16.msra.mxu0 0
    %2018 = vmatprep.subr.bf16.mxu0 0
    %2019 = vmatpush1.bf16.msra.mxu0 0
    %2020 = vmatprep.subr.bf16.mxu0 0
    %2021 = vmatpush1.bf16.msra.mxu0 0
    %2022 = vmatprep.subr.bf16.mxu0 0
    %2023 = vmatpush1.bf16.msra.mxu0 0
    %2024 = vmatprep.subr.bf16.mxu0 0
    %2025 = vmatpush1.bf16.msra.mxu0 0
    %2026 = vmatprep.subr.bf16.mxu0 0
    %2027 = vmatpush1.bf16.msra.mxu0 0
    %2028 = vmatprep.subr.bf16.mxu0 0
    %2029 = vmatpush1.bf16.msra.mxu0 0
    %2030 = vmatprep.subr.bf16.mxu0 0
    %2031 = vmatpush1.bf16.msra.mxu0 0
    %2032 = vmatprep.subr.bf16.mxu0 0
    %2033 = vmatpush1.bf16.msra.mxu0 0
    %2034 = vmatprep.subr.bf16.mxu0 0
    %2035 = vmatpush1.bf16.msra.mxu0 0
    %2036 = vmatprep.subr.bf16.mxu0 0
    %2037 = vmatpush1.bf16.msra.mxu0 0
    %2038 = vmatprep.mubr.bf16.mxu0 0
    %2039 = vmatmul.mubr.bf16.gmra.mrb[0].mxu0 %v2004
    %v2040 = vpop.f32.mrb[0].mxu0
    %v2041 = vadd.f32 0.0, %v2040
    %v2042 = vpop.f32.mrb[0].mxu0
    %v2043 = vpop.f32.mrb[0].mxu0
    %v2044 = vadd.f32 0.0, %v2043
    %v2045 = vpop.f32.mrb[0].mxu0
    %2046 = vdwg.mxu0
    %2047 = vrot.lane.b32.xlu0 %v293, 56
    %v2048 = vpop.permute.xlu0 %2047
    %v2051 = vsel %vm698, %v1855, 0
    %2053 = vmatprep.subr.bf16.mxu0 0
    %2054 = vmatpush1.bf16.msra.mxu0 %v2048
    %2055 = vmatprep.subr.bf16.mxu0 0
    %2056 = vmatpush1.bf16.msra.mxu0 0
    %2057 = vmatprep.subr.bf16.mxu0 0
    %2058 = vmatpush1.bf16.msra.mxu0 0
    %2059 = vmatprep.subr.bf16.mxu0 0
    %2060 = vmatpush1.bf16.msra.mxu0 0
    %2061 = vmatprep.subr.bf16.mxu0 0
    %2062 = vmatpush1.bf16.msra.mxu0 0
    %2063 = vmatprep.subr.bf16.mxu0 0
    %2064 = vmatpush1.bf16.msra.mxu0 0
    %2065 = vmatprep.subr.bf16.mxu0 0
    %2066 = vmatpush1.bf16.msra.mxu0 0
    %2067 = vmatprep.subr.bf16.mxu0 0
    %2068 = vmatpush1.bf16.msra.mxu0 0
    %2069 = vmatprep.subr.bf16.mxu0 0
    %2070 = vmatpush1.bf16.msra.mxu0 0
    %2071 = vmatprep.subr.bf16.mxu0 0
    %2072 = vmatpush1.bf16.msra.mxu0 0
    %2073 = vmatprep.subr.bf16.mxu0 0
    %2074 = vmatpush1.bf16.msra.mxu0 0
    %2075 = vmatprep.subr.bf16.mxu0 0
    %2076 = vmatpush1.bf16.msra.mxu0 0
    %2077 = vmatprep.subr.bf16.mxu0 0
    %2078 = vmatpush1.bf16.msra.mxu0 0
    %2079 = vmatprep.subr.bf16.mxu0 0
    %2080 = vmatpush1.bf16.msra.mxu0 0
    %2081 = vmatprep.subr.bf16.mxu0 0
    %2082 = vmatpush1.bf16.msra.mxu0 0
    %2083 = vmatprep.subr.bf16.mxu0 0
    %2084 = vmatpush1.bf16.msra.mxu0 0
    %2085 = vmatprep.mubr.bf16.mxu0 0
    %2086 = vmatmul.mubr.bf16.gmra.mrb[0].mxu0 %v2051
    %v2087 = vpop.f32.mrb[0].mxu0
    %v2088 = vadd.f32 0.0, %v2087
    %v2089 = vpop.f32.mrb[0].mxu0
    %v2090 = vpop.f32.mrb[0].mxu0
    %v2091 = vadd.f32 0.0, %v2090
    %v2092 = vpop.f32.mrb[0].mxu0
    %2093 = vdwg.mxu0
    %2094 = vrot.lane.b32.xlu0 %v294, 56
    %v2095 = vpop.permute.xlu0 %2094
    %v2098 = vsel %vm698, %v1856, 0
    %2100 = vmatprep.subr.bf16.mxu0 0
    %2101 = vmatpush1.bf16.msra.mxu0 %v2095
    %2102 = vmatprep.subr.bf16.mxu0 0
    %2103 = vmatpush1.bf16.msra.mxu0 0
    %2104 = vmatprep.subr.bf16.mxu0 0
    %2105 = vmatpush1.bf16.msra.mxu0 0
    %2106 = vmatprep.subr.bf16.mxu0 0
    %2107 = vmatpush1.bf16.msra.mxu0 0
    %2108 = vmatprep.subr.bf16.mxu0 0
    %2109 = vmatpush1.bf16.msra.mxu0 0
    %2110 = vmatprep.subr.bf16.mxu0 0
    %2111 = vmatpush1.bf16.msra.mxu0 0
    %2112 = vmatprep.subr.bf16.mxu0 0
    %2113 = vmatpush1.bf16.msra.mxu0 0
    %2114 = vmatprep.subr.bf16.mxu0 0
    %2115 = vmatpush1.bf16.msra.mxu0 0
    %2116 = vmatprep.subr.bf16.mxu0 0
    %2117 = vmatpush1.bf16.msra.mxu0 0
    %2118 = vmatprep.subr.bf16.mxu0 0
    %2119 = vmatpush1.bf16.msra.mxu0 0
    %2120 = vmatprep.subr.bf16.mxu0 0
    %2121 = vmatpush1.bf16.msra.mxu0 0
    %2122 = vmatprep.subr.bf16.mxu0 0
    %2123 = vmatpush1.bf16.msra.mxu0 0
    %2124 = vmatprep.subr.bf16.mxu0 0
    %2125 = vmatpush1.bf16.msra.mxu0 0
    %2126 = vmatprep.subr.bf16.mxu0 0
    %2127 = vmatpush1.bf16.msra.mxu0 0
    %2128 = vmatprep.subr.bf16.mxu0 0
    %2129 = vmatpush1.bf16.msra.mxu0 0
    %2130 = vmatprep.subr.bf16.mxu0 0
    %2131 = vmatpush1.bf16.msra.mxu0 0
    %2132 = vmatprep.mubr.bf16.mxu0 0
    %2133 = vmatmul.mubr.bf16.gmra.mrb[0].mxu0 %v2098
    %v2134 = vpop.f32.mrb[0].mxu0
    %v2135 = vadd.f32 0.0, %v2134
    %v2136 = vpop.f32.mrb[0].mxu0
    %v2137 = vpop.f32.mrb[0].mxu0
    %v2138 = vadd.f32 0.0, %v2137
    %v2139 = vpop.f32.mrb[0].mxu0
    %2140 = vdwg.mxu0
    %2141 = vrot.lane.b32.xlu0 %v295, 56
    %v2142 = vpop.permute.xlu0 %2141
    %v2145 = vsel %vm698, %v1857, 0
    %2147 = vmatprep.subr.bf16.mxu0 0
    %2148 = vmatpush1.bf16.msra.mxu0 %v2142
    %2149 = vmatprep.subr.bf16.mxu0 0
    %2150 = vmatpush1.bf16.msra.mxu0 0
    %2151 = vmatprep.subr.bf16.mxu0 0
    %2152 = vmatpush1.bf16.msra.mxu0 0
    %2153 = vmatprep.subr.bf16.mxu0 0
    %2154 = vmatpush1.bf16.msra.mxu0 0
    %2155 = vmatprep.subr.bf16.mxu0 0
    %2156 = vmatpush1.bf16.msra.mxu0 0
    %2157 = vmatprep.subr.bf16.mxu0 0
    %2158 = vmatpush1.bf16.msra.mxu0 0
    %2159 = vmatprep.subr.bf16.mxu0 0
    %2160 = vmatpush1.bf16.msra.mxu0 0
    %2161 = vmatprep.subr.bf16.mxu0 0
    %2162 = vmatpush1.bf16.msra.mxu0 0
    %2163 = vmatprep.subr.bf16.mxu0 0
    %2164 = vmatpush1.bf16.msra.mxu0 0
    %2165 = vmatprep.subr.bf16.mxu0 0
    %2166 = vmatpush1.bf16.msra.mxu0 0
    %2167 = vmatprep.subr.bf16.mxu0 0
    %2168 = vmatpush1.bf16.msra.mxu0 0
    %2169 = vmatprep.subr.bf16.mxu0 0
    %2170 = vmatpush1.bf16.msra.mxu0 0
    %2171 = vmatprep.subr.bf16.mxu0 0
    %2172 = vmatpush1.bf16.msra.mxu0 0
    %2173 = vmatprep.subr.bf16.mxu0 0
    %2174 = vmatpush1.bf16.msra.mxu0 0
    %2175 = vmatprep.subr.bf16.mxu0 0
    %2176 = vmatpush1.bf16.msra.mxu0 0
    %2177 = vmatprep.subr.bf16.mxu0 0
    %2178 = vmatpush1.bf16.msra.mxu0 0
    %2179 = vmatprep.mubr.bf16.mxu0 0
    %2180 = vmatmul.mubr.bf16.gmra.mrb[0].mxu0 %v2145
    %v2181 = vpop.f32.mrb[0].mxu0
    %v2182 = vadd.f32 0.0, %v2181
    %v2183 = vpop.f32.mrb[0].mxu0
    %v2184 = vpop.f32.mrb[0].mxu0
    %v2185 = vadd.f32 0.0, %v2184
    %v2186 = vpop.f32.mrb[0].mxu0
    %2187 = vdwg.mxu0
    %2188 = vrot.lane.b32.xlu0 %v296, 56
    %v2189 = vpop.permute.xlu0 %2188
    %v2192 = vsel %vm698, %v1858, 0
    %2194 = vmatprep.subr.bf16.mxu0 0
    %2195 = vmatpush1.bf16.msra.mxu0 %v2189
    %2196 = vmatprep.subr.bf16.mxu0 0
    %2197 = vmatpush1.bf16.msra.mxu0 0
    %2198 = vmatprep.subr.bf16.mxu0 0
    %2199 = vmatpush1.bf16.msra.mxu0 0
    %2200 = vmatprep.subr.bf16.mxu0 0
    %2201 = vmatpush1.bf16.msra.mxu0 0
    %2202 = vmatprep.subr.bf16.mxu0 0
    %2203 = vmatpush1.bf16.msra.mxu0 0
    %2204 = vmatprep.subr.bf16.mxu0 0
    %2205 = vmatpush1.bf16.msra.mxu0 0
    %2206 = vmatprep.subr.bf16.mxu0 0
    %2207 = vmatpush1.bf16.msra.mxu0 0
    %2208 = vmatprep.subr.bf16.mxu0 0
    %2209 = vmatpush1.bf16.msra.mxu0 0
    %2210 = vmatprep.subr.bf16.mxu0 0
    %2211 = vmatpush1.bf16.msra.mxu0 0
    %2212 = vmatprep.subr.bf16.mxu0 0
    %2213 = vmatpush1.bf16.msra.mxu0 0
    %2214 = vmatprep.subr.bf16.mxu0 0
    %2215 = vmatpush1.bf16.msra.mxu0 0
    %2216 = vmatprep.subr.bf16.mxu0 0
    %2217 = vmatpush1.bf16.msra.mxu0 0
    %2218 = vmatprep.subr.bf16.mxu0 0
    %2219 = vmatpush1.bf16.msra.mxu0 0
    %2220 = vmatprep.subr.bf16.mxu0 0
    %2221 = vmatpush1.bf16.msra.mxu0 0
    %2222 = vmatprep.subr.bf16.mxu0 0
    %2223 = vmatpush1.bf16.msra.mxu0 0
    %2224 = vmatprep.subr.bf16.mxu0 0
    %2225 = vmatpush1.bf16.msra.mxu0 0
    %2226 = vmatprep.mubr.bf16.mxu0 0
    %2227 = vmatmul.mubr.bf16.gmra.mrb[0].mxu0 %v2192
    %v2228 = vpop.f32.mrb[0].mxu0
    %v2229 = vadd.f32 0.0, %v2228
    %v2230 = vpop.f32.mrb[0].mxu0
    %v2231 = vpop.f32.mrb[0].mxu0
    %v2232 = vadd.f32 0.0, %v2231
    %v2233 = vpop.f32.mrb[0].mxu0
    %2234 = vdwg.mxu0
    %v2235 = vpack.c.bf16 %v1903, %v1900
    %v2236 = vpack.c.bf16 %v1950, %v1947
    %v2237 = vpack.c.bf16 %v1997, %v1994
    %v2238 = vpack.c.bf16 %v2044, %v2041
    %v2239 = vpack.c.bf16 %v2091, %v2088
    %v2240 = vpack.c.bf16 %v2138, %v2135
    %v2241 = vpack.c.bf16 %v2185, %v2182
    %v2242 = vpack.c.bf16 %v2232, %v2229
    %2243 = vrot.lane.b32.xlu0 %v289, 112
    %v2244 = vpop.permute.xlu0 %2243
    %2245 = vrot.lane.b32.xlu0 %v289, 80
    %v2246 = vpop.permute.xlu0 %2245
    %v2248 = vsel %vm300, %v2244, 0
    %v2251 = vsel %vm300, %v2246, 0
    %2253 = vmatprep.subr.bf16.mxu0 0
    %2254 = vmatpush1.bf16.xpose.msra.mxu0 %v2251
    %2255 = vmatprep.subr.bf16.mxu0 0
    %2256 = vmatpush1.bf16.xpose.msra.mxu0 0
    %2257 = vmatprep.subr.bf16.mxu0 0
    %2258 = vmatpush1.bf16.xpose.msra.mxu0 0
    %2259 = vmatprep.subr.bf16.mxu0 0
    %2260 = vmatpush1.bf16.xpose.msra.mxu0 0
    %2261 = vmatprep.subr.bf16.mxu0 0
    %2262 = vmatpush1.bf16.xpose.msra.mxu0 0
    %2263 = vmatprep.subr.bf16.mxu0 0
    %2264 = vmatpush1.bf16.xpose.msra.mxu0 0
    %2265 = vmatprep.subr.bf16.mxu0 0
    %2266 = vmatpush1.bf16.xpose.msra.mxu0 0
    %2267 = vmatprep.subr.bf16.mxu0 0
    %2268 = vmatpush1.bf16.xpose.msra.mxu0 0
    %2269 = vmatprep.subr.bf16.mxu0 0
    %2270 = vmatpush1.bf16.xpose.msra.mxu0 0
    %2271 = vmatprep.subr.bf16.mxu0 0
    %2272 = vmatpush1.bf16.xpose.msra.mxu0 0
    %2273 = vmatprep.subr.bf16.mxu0 0
    %2274 = vmatpush1.bf16.xpose.msra.mxu0 0
    %2275 = vmatprep.subr.bf16.mxu0 0
    %2276 = vmatpush1.bf16.xpose.msra.mxu0 0
    %2277 = vmatprep.subr.bf16.mxu0 0
    %2278 = vmatpush1.bf16.xpose.msra.mxu0 0
    %2279 = vmatprep.subr.bf16.mxu0 0
    %2280 = vmatpush1.bf16.xpose.msra.mxu0 0
    %2281 = vmatprep.subr.bf16.mxu0 0
    %2282 = vmatpush1.bf16.xpose.msra.mxu0 0
    %2283 = vmatprep.subr.bf16.mxu0 0
    %2284 = vmatpush1.bf16.xpose.msra.mxu0 0
    %2285 = vmatprep.mubr.bf16.mxu0 0
    %2286 = vmatmul.mubr.bf16.gmra.mrb[0].mxu0 %v2248
    %v2287 = vpop.f32.mrb[0].mxu0
    %v2288 = vadd.f32 %v285, %v2287
    %v2289 = vpop.f32.mrb[0].mxu0
    %v2290 = vpop.f32.mrb[0].mxu0
    %v2291 = vadd.f32 %v286, %v2290
    %v2292 = vpop.f32.mrb[0].mxu0
    %2293 = vdwg.mxu0
    %2294 = vrot.lane.b32.xlu0 %v290, 112
    %v2295 = vpop.permute.xlu0 %2294
    %2296 = vrot.lane.b32.xlu0 %v290, 80
    %v2297 = vpop.permute.xlu0 %2296
    %v2299 = vsel %vm300, %v2295, 0
    %v2302 = vsel %vm300, %v2297, 0
    %2304 = vmatprep.subr.bf16.mxu0 0
    %2305 = vmatpush1.bf16.xpose.msra.mxu0 %v2302
    %2306 = vmatprep.subr.bf16.mxu0 0
    %2307 = vmatpush1.bf16.xpose.msra.mxu0 0
    %2308 = vmatprep.subr.bf16.mxu0 0
    %2309 = vmatpush1.bf16.xpose.msra.mxu0 0
    %2310 = vmatprep.subr.bf16.mxu0 0
    %2311 = vmatpush1.bf16.xpose.msra.mxu0 0
    %2312 = vmatprep.subr.bf16.mxu0 0
    %2313 = vmatpush1.bf16.xpose.msra.mxu0 0
    %2314 = vmatprep.subr.bf16.mxu0 0
    %2315 = vmatpush1.bf16.xpose.msra.mxu0 0
    %2316 = vmatprep.subr.bf16.mxu0 0
    %2317 = vmatpush1.bf16.xpose.msra.mxu0 0
    %2318 = vmatprep.subr.bf16.mxu0 0
    %2319 = vmatpush1.bf16.xpose.msra.mxu0 0
    %2320 = vmatprep.subr.bf16.mxu0 0
    %2321 = vmatpush1.bf16.xpose.msra.mxu0 0
    %2322 = vmatprep.subr.bf16.mxu0 0
    %2323 = vmatpush1.bf16.xpose.msra.mxu0 0
    %2324 = vmatprep.subr.bf16.mxu0 0
    %2325 = vmatpush1.bf16.xpose.msra.mxu0 0
    %2326 = vmatprep.subr.bf16.mxu0 0
    %2327 = vmatpush1.bf16.xpose.msra.mxu0 0
    %2328 = vmatprep.subr.bf16.mxu0 0
    %2329 = vmatpush1.bf16.xpose.msra.mxu0 0
    %2330 = vmatprep.subr.bf16.mxu0 0
    %2331 = vmatpush1.bf16.xpose.msra.mxu0 0
    %2332 = vmatprep.subr.bf16.mxu0 0
    %2333 = vmatpush1.bf16.xpose.msra.mxu0 0
    %2334 = vmatprep.subr.bf16.mxu0 0
    %2335 = vmatpush1.bf16.xpose.msra.mxu0 0
    %2336 = vmatprep.mubr.bf16.mxu0 0
    %2337 = vmatmul.mubr.bf16.gmra.mrb[0].mxu0 %v2299
    %v2338 = vpop.f32.mrb[0].mxu0
    %v2339 = vadd.f32 %v285, %v2338
    %v2340 = vpop.f32.mrb[0].mxu0
    %v2341 = vpop.f32.mrb[0].mxu0
    %v2342 = vadd.f32 %v286, %v2341
    %v2343 = vpop.f32.mrb[0].mxu0
    %2344 = vdwg.mxu0
    %2345 = vrot.lane.b32.xlu0 %v291, 112
    %v2346 = vpop.permute.xlu0 %2345
    %2347 = vrot.lane.b32.xlu0 %v291, 80
    %v2348 = vpop.permute.xlu0 %2347
    %v2350 = vsel %vm300, %v2346, 0
    %v2353 = vsel %vm300, %v2348, 0
    %2355 = vmatprep.subr.bf16.mxu0 0
    %2356 = vmatpush1.bf16.xpose.msra.mxu0 %v2353
    %2357 = vmatprep.subr.bf16.mxu0 0
    %2358 = vmatpush1.bf16.xpose.msra.mxu0 0
    %2359 = vmatprep.subr.bf16.mxu0 0
    %2360 = vmatpush1.bf16.xpose.msra.mxu0 0
    %2361 = vmatprep.subr.bf16.mxu0 0
    %2362 = vmatpush1.bf16.xpose.msra.mxu0 0
    %2363 = vmatprep.subr.bf16.mxu0 0
    %2364 = vmatpush1.bf16.xpose.msra.mxu0 0
    %2365 = vmatprep.subr.bf16.mxu0 0
    %2366 = vmatpush1.bf16.xpose.msra.mxu0 0
    %2367 = vmatprep.subr.bf16.mxu0 0
    %2368 = vmatpush1.bf16.xpose.msra.mxu0 0
    %2369 = vmatprep.subr.bf16.mxu0 0
    %2370 = vmatpush1.bf16.xpose.msra.mxu0 0
    %2371 = vmatprep.subr.bf16.mxu0 0
    %2372 = vmatpush1.bf16.xpose.msra.mxu0 0
    %2373 = vmatprep.subr.bf16.mxu0 0
    %2374 = vmatpush1.bf16.xpose.msra.mxu0 0
    %2375 = vmatprep.subr.bf16.mxu0 0
    %2376 = vmatpush1.bf16.xpose.msra.mxu0 0
    %2377 = vmatprep.subr.bf16.mxu0 0
    %2378 = vmatpush1.bf16.xpose.msra.mxu0 0
    %2379 = vmatprep.subr.bf16.mxu0 0
    %2380 = vmatpush1.bf16.xpose.msra.mxu0 0
    %2381 = vmatprep.subr.bf16.mxu0 0
    %2382 = vmatpush1.bf16.xpose.msra.mxu0 0
    %2383 = vmatprep.subr.bf16.mxu0 0
    %2384 = vmatpush1.bf16.xpose.msra.mxu0 0
    %2385 = vmatprep.subr.bf16.mxu0 0
    %2386 = vmatpush1.bf16.xpose.msra.mxu0 0
    %2387 = vmatprep.mubr.bf16.mxu0 0
    %2388 = vmatmul.mubr.bf16.gmra.mrb[0].mxu0 %v2350
    %v2389 = vpop.f32.mrb[0].mxu0
    %v2390 = vadd.f32 %v285, %v2389
    %v2391 = vpop.f32.mrb[0].mxu0
    %v2392 = vpop.f32.mrb[0].mxu0
    %v2393 = vadd.f32 %v286, %v2392
    %v2394 = vpop.f32.mrb[0].mxu0
    %2395 = vdwg.mxu0
    %2396 = vrot.lane.b32.xlu0 %v292, 112
    %v2397 = vpop.permute.xlu0 %2396
    %2398 = vrot.lane.b32.xlu0 %v292, 80
    %v2399 = vpop.permute.xlu0 %2398
    %v2401 = vsel %vm300, %v2397, 0
    %v2404 = vsel %vm300, %v2399, 0
    %2406 = vmatprep.subr.bf16.mxu0 0
    %2407 = vmatpush1.bf16.xpose.msra.mxu0 %v2404
    %2408 = vmatprep.subr.bf16.mxu0 0
    %2409 = vmatpush1.bf16.xpose.msra.mxu0 0
    %2410 = vmatprep.subr.bf16.mxu0 0
    %2411 = vmatpush1.bf16.xpose.msra.mxu0 0
    %2412 = vmatprep.subr.bf16.mxu0 0
    %2413 = vmatpush1.bf16.xpose.msra.mxu0 0
    %2414 = vmatprep.subr.bf16.mxu0 0
    %2415 = vmatpush1.bf16.xpose.msra.mxu0 0
    %2416 = vmatprep.subr.bf16.mxu0 0
    %2417 = vmatpush1.bf16.xpose.msra.mxu0 0
    %2418 = vmatprep.subr.bf16.mxu0 0
    %2419 = vmatpush1.bf16.xpose.msra.mxu0 0
    %2420 = vmatprep.subr.bf16.mxu0 0
    %2421 = vmatpush1.bf16.xpose.msra.mxu0 0
    %2422 = vmatprep.subr.bf16.mxu0 0
    %2423 = vmatpush1.bf16.xpose.msra.mxu0 0
    %2424 = vmatprep.subr.bf16.mxu0 0
    %2425 = vmatpush1.bf16.xpose.msra.mxu0 0
    %2426 = vmatprep.subr.bf16.mxu0 0
    %2427 = vmatpush1.bf16.xpose.msra.mxu0 0
    %2428 = vmatprep.subr.bf16.mxu0 0
    %2429 = vmatpush1.bf16.xpose.msra.mxu0 0
    %2430 = vmatprep.subr.bf16.mxu0 0
    %2431 = vmatpush1.bf16.xpose.msra.mxu0 0
    %2432 = vmatprep.subr.bf16.mxu0 0
    %2433 = vmatpush1.bf16.xpose.msra.mxu0 0
    %2434 = vmatprep.subr.bf16.mxu0 0
    %2435 = vmatpush1.bf16.xpose.msra.mxu0 0
    %2436 = vmatprep.subr.bf16.mxu0 0
    %2437 = vmatpush1.bf16.xpose.msra.mxu0 0
    %2438 = vmatprep.mubr.bf16.mxu0 0
    %2439 = vmatmul.mubr.bf16.gmra.mrb[0].mxu0 %v2401
    %v2440 = vpop.f32.mrb[0].mxu0
    %v2441 = vadd.f32 %v285, %v2440
    %v2442 = vpop.f32.mrb[0].mxu0
    %v2443 = vpop.f32.mrb[0].mxu0
    %v2444 = vadd.f32 %v286, %v2443
    %v2445 = vpop.f32.mrb[0].mxu0
    %2446 = vdwg.mxu0
    %2447 = vrot.lane.b32.xlu0 %v293, 112
    %v2448 = vpop.permute.xlu0 %2447
    %2449 = vrot.lane.b32.xlu0 %v293, 80
    %v2450 = vpop.permute.xlu0 %2449
    %v2452 = vsel %vm300, %v2448, 0
    %v2455 = vsel %vm300, %v2450, 0
    %2457 = vmatprep.subr.bf16.mxu0 0
    %2458 = vmatpush1.bf16.xpose.msra.mxu0 %v2455
    %2459 = vmatprep.subr.bf16.mxu0 0
    %2460 = vmatpush1.bf16.xpose.msra.mxu0 0
    %2461 = vmatprep.subr.bf16.mxu0 0
    %2462 = vmatpush1.bf16.xpose.msra.mxu0 0
    %2463 = vmatprep.subr.bf16.mxu0 0
    %2464 = vmatpush1.bf16.xpose.msra.mxu0 0
    %2465 = vmatprep.subr.bf16.mxu0 0
    %2466 = vmatpush1.bf16.xpose.msra.mxu0 0
    %2467 = vmatprep.subr.bf16.mxu0 0
    %2468 = vmatpush1.bf16.xpose.msra.mxu0 0
    %2469 = vmatprep.subr.bf16.mxu0 0
    %2470 = vmatpush1.bf16.xpose.msra.mxu0 0
    %2471 = vmatprep.subr.bf16.mxu0 0
    %2472 = vmatpush1.bf16.xpose.msra.mxu0 0
    %2473 = vmatprep.subr.bf16.mxu0 0
    %2474 = vmatpush1.bf16.xpose.msra.mxu0 0
    %2475 = vmatprep.subr.bf16.mxu0 0
    %2476 = vmatpush1.bf16.xpose.msra.mxu0 0
    %2477 = vmatprep.subr.bf16.mxu0 0
    %2478 = vmatpush1.bf16.xpose.msra.mxu0 0
    %2479 = vmatprep.subr.bf16.mxu0 0
    %2480 = vmatpush1.bf16.xpose.msra.mxu0 0
    %2481 = vmatprep.subr.bf16.mxu0 0
    %2482 = vmatpush1.bf16.xpose.msra.mxu0 0
    %2483 = vmatprep.subr.bf16.mxu0 0
    %2484 = vmatpush1.bf16.xpose.msra.mxu0 0
    %2485 = vmatprep.subr.bf16.mxu0 0
    %2486 = vmatpush1.bf16.xpose.msra.mxu0 0
    %2487 = vmatprep.subr.bf16.mxu0 0
    %2488 = vmatpush1.bf16.xpose.msra.mxu0 0
    %2489 = vmatprep.mubr.bf16.mxu0 0
    %2490 = vmatmul.mubr.bf16.gmra.mrb[0].mxu0 %v2452
    %v2491 = vpop.f32.mrb[0].mxu0
    %v2492 = vadd.f32 %v285, %v2491
    %v2493 = vpop.f32.mrb[0].mxu0
    %v2494 = vpop.f32.mrb[0].mxu0
    %v2495 = vadd.f32 %v286, %v2494
    %v2496 = vpop.f32.mrb[0].mxu0
    %2497 = vdwg.mxu0
    %2498 = vrot.lane.b32.xlu0 %v294, 112
    %v2499 = vpop.permute.xlu0 %2498
    %2500 = vrot.lane.b32.xlu0 %v294, 80
    %v2501 = vpop.permute.xlu0 %2500
    %v2503 = vsel %vm300, %v2499, 0
    %v2506 = vsel %vm300, %v2501, 0
    %2508 = vmatprep.subr.bf16.mxu0 0
    %2509 = vmatpush1.bf16.xpose.msra.mxu0 %v2506
    %2510 = vmatprep.subr.bf16.mxu0 0
    %2511 = vmatpush1.bf16.xpose.msra.mxu0 0
    %2512 = vmatprep.subr.bf16.mxu0 0
    %2513 = vmatpush1.bf16.xpose.msra.mxu0 0
    %2514 = vmatprep.subr.bf16.mxu0 0
    %2515 = vmatpush1.bf16.xpose.msra.mxu0 0
    %2516 = vmatprep.subr.bf16.mxu0 0
    %2517 = vmatpush1.bf16.xpose.msra.mxu0 0
    %2518 = vmatprep.subr.bf16.mxu0 0
    %2519 = vmatpush1.bf16.xpose.msra.mxu0 0
    %2520 = vmatprep.subr.bf16.mxu0 0
    %2521 = vmatpush1.bf16.xpose.msra.mxu0 0
    %2522 = vmatprep.subr.bf16.mxu0 0
    %2523 = vmatpush1.bf16.xpose.msra.mxu0 0
    %2524 = vmatprep.subr.bf16.mxu0 0
    %2525 = vmatpush1.bf16.xpose.msra.mxu0 0
    %2526 = vmatprep.subr.bf16.mxu0 0
    %2527 = vmatpush1.bf16.xpose.msra.mxu0 0
    %2528 = vmatprep.subr.bf16.mxu0 0
    %2529 = vmatpush1.bf16.xpose.msra.mxu0 0
    %2530 = vmatprep.subr.bf16.mxu0 0
    %2531 = vmatpush1.bf16.xpose.msra.mxu0 0
    %2532 = vmatprep.subr.bf16.mxu0 0
    %2533 = vmatpush1.bf16.xpose.msra.mxu0 0
    %2534 = vmatprep.subr.bf16.mxu0 0
    %2535 = vmatpush1.bf16.xpose.msra.mxu0 0
    %2536 = vmatprep.subr.bf16.mxu0 0
    %2537 = vmatpush1.bf16.xpose.msra.mxu0 0
    %2538 = vmatprep.subr.bf16.mxu0 0
    %2539 = vmatpush1.bf16.xpose.msra.mxu0 0
    %2540 = vmatprep.mubr.bf16.mxu0 0
    %2541 = vmatmul.mubr.bf16.gmra.mrb[0].mxu0 %v2503
    %v2542 = vpop.f32.mrb[0].mxu0
    %v2543 = vadd.f32 %v285, %v2542
    %v2544 = vpop.f32.mrb[0].mxu0
    %v2545 = vpop.f32.mrb[0].mxu0
    %v2546 = vadd.f32 %v286, %v2545
    %v2547 = vpop.f32.mrb[0].mxu0
    %2548 = vdwg.mxu0
    %2549 = vrot.lane.b32.xlu0 %v295, 112
    %v2550 = vpop.permute.xlu0 %2549
    %2551 = vrot.lane.b32.xlu0 %v295, 80
    %v2552 = vpop.permute.xlu0 %2551
    %v2554 = vsel %vm300, %v2550, 0
    %v2557 = vsel %vm300, %v2552, 0
    %2559 = vmatprep.subr.bf16.mxu0 0
    %2560 = vmatpush1.bf16.xpose.msra.mxu0 %v2557
    %2561 = vmatprep.subr.bf16.mxu0 0
    %2562 = vmatpush1.bf16.xpose.msra.mxu0 0
    %2563 = vmatprep.subr.bf16.mxu0 0
    %2564 = vmatpush1.bf16.xpose.msra.mxu0 0
    %2565 = vmatprep.subr.bf16.mxu0 0
    %2566 = vmatpush1.bf16.xpose.msra.mxu0 0
    %2567 = vmatprep.subr.bf16.mxu0 0
    %2568 = vmatpush1.bf16.xpose.msra.mxu0 0
    %2569 = vmatprep.subr.bf16.mxu0 0
    %2570 = vmatpush1.bf16.xpose.msra.mxu0 0
    %2571 = vmatprep.subr.bf16.mxu0 0
    %2572 = vmatpush1.bf16.xpose.msra.mxu0 0
    %2573 = vmatprep.subr.bf16.mxu0 0
    %2574 = vmatpush1.bf16.xpose.msra.mxu0 0
    %2575 = vmatprep.subr.bf16.mxu0 0
    %2576 = vmatpush1.bf16.xpose.msra.mxu0 0
    %2577 = vmatprep.subr.bf16.mxu0 0
    %2578 = vmatpush1.bf16.xpose.msra.mxu0 0
    %2579 = vmatprep.subr.bf16.mxu0 0
    %2580 = vmatpush1.bf16.xpose.msra.mxu0 0
    %2581 = vmatprep.subr.bf16.mxu0 0
    %2582 = vmatpush1.bf16.xpose.msra.mxu0 0
    %2583 = vmatprep.subr.bf16.mxu0 0
    %2584 = vmatpush1.bf16.xpose.msra.mxu0 0
    %2585 = vmatprep.subr.bf16.mxu0 0
    %2586 = vmatpush1.bf16.xpose.msra.mxu0 0
    %2587 = vmatprep.subr.bf16.mxu0 0
    %2588 = vmatpush1.bf16.xpose.msra.mxu0 0
    %2589 = vmatprep.subr.bf16.mxu0 0
    %2590 = vmatpush1.bf16.xpose.msra.mxu0 0
    %2591 = vmatprep.mubr.bf16.mxu0 0
    %2592 = vmatmul.mubr.bf16.gmra.mrb[0].mxu0 %v2554
    %v2593 = vpop.f32.mrb[0].mxu0
    %v2594 = vadd.f32 %v285, %v2593
    %v2595 = vpop.f32.mrb[0].mxu0
    %v2596 = vpop.f32.mrb[0].mxu0
    %v2597 = vadd.f32 %v286, %v2596
    %v2598 = vpop.f32.mrb[0].mxu0
    %2599 = vdwg.mxu0
    %2600 = vrot.lane.b32.xlu0 %v296, 112
    %v2601 = vpop.permute.xlu0 %2600
    %2602 = vrot.lane.b32.xlu0 %v296, 80
    %v2603 = vpop.permute.xlu0 %2602
    %v2605 = vsel %vm300, %v2601, 0
    %v2608 = vsel %vm300, %v2603, 0
    %2610 = vmatprep.subr.bf16.mxu0 0
    %2611 = vmatpush1.bf16.xpose.msra.mxu0 %v2608
    %2612 = vmatprep.subr.bf16.mxu0 0
    %2613 = vmatpush1.bf16.xpose.msra.mxu0 0
    %2614 = vmatprep.subr.bf16.mxu0 0
    %2615 = vmatpush1.bf16.xpose.msra.mxu0 0
    %2616 = vmatprep.subr.bf16.mxu0 0
    %2617 = vmatpush1.bf16.xpose.msra.mxu0 0
    %2618 = vmatprep.subr.bf16.mxu0 0
    %2619 = vmatpush1.bf16.xpose.msra.mxu0 0
    %2620 = vmatprep.subr.bf16.mxu0 0
    %2621 = vmatpush1.bf16.xpose.msra.mxu0 0
    %2622 = vmatprep.subr.bf16.mxu0 0
    %2623 = vmatpush1.bf16.xpose.msra.mxu0 0
    %2624 = vmatprep.subr.bf16.mxu0 0
    %2625 = vmatpush1.bf16.xpose.msra.mxu0 0
    %2626 = vmatprep.subr.bf16.mxu0 0
    %2627 = vmatpush1.bf16.xpose.msra.mxu0 0
    %2628 = vmatprep.subr.bf16.mxu0 0
    %2629 = vmatpush1.bf16.xpose.msra.mxu0 0
    %2630 = vmatprep.subr.bf16.mxu0 0
    %2631 = vmatpush1.bf16.xpose.msra.mxu0 0
    %2632 = vmatprep.subr.bf16.mxu0 0
    %2633 = vmatpush1.bf16.xpose.msra.mxu0 0
    %2634 = vmatprep.subr.bf16.mxu0 0
    %2635 = vmatpush1.bf16.xpose.msra.mxu0 0
    %2636 = vmatprep.subr.bf16.mxu0 0
    %2637 = vmatpush1.bf16.xpose.msra.mxu0 0
    %2638 = vmatprep.subr.bf16.mxu0 0
    %2639 = vmatpush1.bf16.xpose.msra.mxu0 0
    %2640 = vmatprep.subr.bf16.mxu0 0
    %2641 = vmatpush1.bf16.xpose.msra.mxu0 0
    %2642 = vmatprep.mubr.bf16.mxu0 0
    %2643 = vmatmul.mubr.bf16.gmra.mrb[0].mxu0 %v2605
    %v2644 = vpop.f32.mrb[0].mxu0
    %v2645 = vadd.f32 %v285, %v2644
    %v2646 = vpop.f32.mrb[0].mxu0
    %v2647 = vpop.f32.mrb[0].mxu0
    %v2648 = vadd.f32 %v286, %v2647
    %v2649 = vpop.f32.mrb[0].mxu0
    %2650 = vdwg.mxu0
    %v2651 = vsel %vm698, %v2288, -inf
    %2652 = vmax.xlane.f32.xlu0 %v2651
    %v2653 = vpop.xlane.xlu0 %2652
    %v2654 = vsel %vm698, %v2291, -inf
    %2655 = vmax.xlane.f32.xlu0 %v2654
    %v2656 = vpop.xlane.xlu0 %2655
    %v2657 = vsel %vm698, %v2339, -inf
    %2658 = vmax.xlane.f32.xlu0 %v2657
    %v2659 = vpop.xlane.xlu0 %2658
    %v2660 = vsel %vm698, %v2342, -inf
    %2661 = vmax.xlane.f32.xlu0 %v2660
    %v2662 = vpop.xlane.xlu0 %2661
    %v2663 = vsel %vm698, %v2390, -inf
    %2664 = vmax.xlane.f32.xlu0 %v2663
    %v2665 = vpop.xlane.xlu0 %2664
    %v2666 = vsel %vm698, %v2393, -inf
    %2667 = vmax.xlane.f32.xlu0 %v2666
    %v2668 = vpop.xlane.xlu0 %2667
    %v2669 = vsel %vm698, %v2441, -inf
    %2670 = vmax.xlane.f32.xlu0 %v2669
    %v2671 = vpop.xlane.xlu0 %2670
    %v2672 = vsel %vm698, %v2444, -inf
    %2673 = vmax.xlane.f32.xlu0 %v2672
    %v2674 = vpop.xlane.xlu0 %2673
    %v2675 = vsel %vm698, %v2492, -inf
    %2676 = vmax.xlane.f32.xlu0 %v2675
    %v2677 = vpop.xlane.xlu0 %2676
    %v2678 = vsel %vm698, %v2495, -inf
    %2679 = vmax.xlane.f32.xlu0 %v2678
    %v2680 = vpop.xlane.xlu0 %2679
    %v2681 = vsel %vm698, %v2543, -inf
    %2682 = vmax.xlane.f32.xlu0 %v2681
    %v2683 = vpop.xlane.xlu0 %2682
    %v2684 = vsel %vm698, %v2546, -inf
    %2685 = vmax.xlane.f32.xlu0 %v2684
    %v2686 = vpop.xlane.xlu0 %2685
    %v2687 = vsel %vm698, %v2594, -inf
    %2688 = vmax.xlane.f32.xlu0 %v2687
    %v2689 = vpop.xlane.xlu0 %2688
    %v2690 = vsel %vm698, %v2597, -inf
    %2691 = vmax.xlane.f32.xlu0 %v2690
    %v2692 = vpop.xlane.xlu0 %2691
    %v2693 = vsel %vm698, %v2645, -inf
    %2694 = vmax.xlane.f32.xlu0 %v2693
    %v2695 = vpop.xlane.xlu0 %2694
    %v2696 = vsel %vm698, %v2648, -inf
    %2697 = vmax.xlane.f32.xlu0 %v2696
    %v2698 = vpop.xlane.xlu0 %2697
    %v2699 = vsub.f32 %v2288, %v2653
    %v2700 = vsub.f32 %v2291, %v2656
    %v2701 = vsub.f32 %v2339, %v2659
    %v2702 = vsub.f32 %v2342, %v2662
    %v2703 = vsub.f32 %v2390, %v2665
    %v2704 = vsub.f32 %v2393, %v2668
    %v2705 = vsub.f32 %v2441, %v2671
    %v2706 = vsub.f32 %v2444, %v2674
    %v2707 = vsub.f32 %v2492, %v2677
    %v2708 = vsub.f32 %v2495, %v2680
    %v2709 = vsub.f32 %v2543, %v2683
    %v2710 = vsub.f32 %v2546, %v2686
    %v2711 = vsub.f32 %v2594, %v2689
    %v2712 = vsub.f32 %v2597, %v2692
    %v2713 = vsub.f32 %v2645, %v2695
    %v2714 = vsub.f32 %v2648, %v2698
    %v2715 = vmul.f32 %v2699, 1.442695
    %v2716 = vpow.pop %v2715
    %v2717 = vmul.f32 %v2700, 1.442695
    %v2718 = vpow.pop %v2717
    %v2719 = vmul.f32 %v2701, 1.442695
    %v2720 = vpow.pop %v2719
    %v2721 = vmul.f32 %v2702, 1.442695
    %v2722 = vpow.pop %v2721
    %v2723 = vmul.f32 %v2703, 1.442695
    %v2724 = vpow.pop %v2723
    %v2725 = vmul.f32 %v2704, 1.442695
    %v2726 = vpow.pop %v2725
    %v2727 = vmul.f32 %v2705, 1.442695
    %v2728 = vpow.pop %v2727
    %v2729 = vmul.f32 %v2706, 1.442695
    %v2730 = vpow.pop %v2729
    %v2731 = vmul.f32 %v2707, 1.442695
    %v2732 = vpow.pop %v2731
    %v2733 = vmul.f32 %v2708, 1.442695
    %v2734 = vpow.pop %v2733
    %v2735 = vmul.f32 %v2709, 1.442695
    %v2736 = vpow.pop %v2735
    %v2737 = vmul.f32 %v2710, 1.442695
    %v2738 = vpow.pop %v2737
    %v2739 = vmul.f32 %v2711, 1.442695
    %v2740 = vpow.pop %v2739
    %v2741 = vmul.f32 %v2712, 1.442695
    %v2742 = vpow.pop %v2741
    %v2743 = vmul.f32 %v2713, 1.442695
    %v2744 = vpow.pop %v2743
    %v2745 = vmul.f32 %v2714, 1.442695
    %v2746 = vpow.pop %v2745
    %v2747 = vsel %vm698, %v2716, 0.0
    %2748 = vadd.xlane.f32.xlu0 %v2747
    %v2749 = vpop.xlane.xlu0 %2748
    %v2750 = vsel %vm698, %v2718, 0.0
    %2751 = vadd.xlane.f32.xlu0 %v2750
    %v2752 = vpop.xlane.xlu0 %2751
    %v2753 = vsel %vm698, %v2720, 0.0
    %2754 = vadd.xlane.f32.xlu0 %v2753
    %v2755 = vpop.xlane.xlu0 %2754
    %v2756 = vsel %vm698, %v2722, 0.0
    %2757 = vadd.xlane.f32.xlu0 %v2756
    %v2758 = vpop.xlane.xlu0 %2757
    %v2759 = vsel %vm698, %v2724, 0.0
    %2760 = vadd.xlane.f32.xlu0 %v2759
    %v2761 = vpop.xlane.xlu0 %2760
    %v2762 = vsel %vm698, %v2726, 0.0
    %2763 = vadd.xlane.f32.xlu0 %v2762
    %v2764 = vpop.xlane.xlu0 %2763
    %v2765 = vsel %vm698, %v2728, 0.0
    %2766 = vadd.xlane.f32.xlu0 %v2765
    %v2767 = vpop.xlane.xlu0 %2766
    %v2768 = vsel %vm698, %v2730, 0.0
    %2769 = vadd.xlane.f32.xlu0 %v2768
    %v2770 = vpop.xlane.xlu0 %2769
    %v2771 = vsel %vm698, %v2732, 0.0
    %2772 = vadd.xlane.f32.xlu0 %v2771
    %v2773 = vpop.xlane.xlu0 %2772
    %v2774 = vsel %vm698, %v2734, 0.0
    %2775 = vadd.xlane.f32.xlu0 %v2774
    %v2776 = vpop.xlane.xlu0 %2775
    %v2777 = vsel %vm698, %v2736, 0.0
    %2778 = vadd.xlane.f32.xlu0 %v2777
    %v2779 = vpop.xlane.xlu0 %2778
    %v2780 = vsel %vm698, %v2738, 0.0
    %2781 = vadd.xlane.f32.xlu0 %v2780
    %v2782 = vpop.xlane.xlu0 %2781
    %v2783 = vsel %vm698, %v2740, 0.0
    %2784 = vadd.xlane.f32.xlu0 %v2783
    %v2785 = vpop.xlane.xlu0 %2784
    %v2786 = vsel %vm698, %v2742, 0.0
    %2787 = vadd.xlane.f32.xlu0 %v2786
    %v2788 = vpop.xlane.xlu0 %2787
    %v2789 = vsel %vm698, %v2744, 0.0
    %2790 = vadd.xlane.f32.xlu0 %v2789
    %v2791 = vpop.xlane.xlu0 %2790
    %v2792 = vsel %vm698, %v2746, 0.0
    %2793 = vadd.xlane.f32.xlu0 %v2792
    %v2794 = vpop.xlane.xlu0 %2793
    %v2795 = vrcp.pop %v2749
    %v2796 = vrcp.pop %v2752
    %v2797 = vrcp.pop %v2755
    %v2798 = vrcp.pop %v2758
    %v2799 = vrcp.pop %v2761
    %v2800 = vrcp.pop %v2764
    %v2801 = vrcp.pop %v2767
    %v2802 = vrcp.pop %v2770
    %v2803 = vrcp.pop %v2773
    %v2804 = vrcp.pop %v2776
    %v2805 = vrcp.pop %v2779
    %v2806 = vrcp.pop %v2782
    %v2807 = vrcp.pop %v2785
    %v2808 = vrcp.pop %v2788
    %v2809 = vrcp.pop %v2791
    %v2810 = vrcp.pop %v2794
    %v2811 = vmul.f32 %v2716, %v2795
    %v2812 = vmul.f32 %v2718, %v2796
    %v2813 = vmul.f32 %v2720, %v2797
    %v2814 = vmul.f32 %v2722, %v2798
    %v2815 = vmul.f32 %v2724, %v2799
    %v2816 = vmul.f32 %v2726, %v2800
    %v2817 = vmul.f32 %v2728, %v2801
    %v2818 = vmul.f32 %v2730, %v2802
    %v2819 = vmul.f32 %v2732, %v2803
    %v2820 = vmul.f32 %v2734, %v2804
    %v2821 = vmul.f32 %v2736, %v2805
    %v2822 = vmul.f32 %v2738, %v2806
    %v2823 = vmul.f32 %v2740, %v2807
    %v2824 = vmul.f32 %v2742, %v2808
    %v2825 = vmul.f32 %v2744, %v2809
    %v2826 = vmul.f32 %v2746, %v2810
    %v2827 = vpack.c.bf16 %v2812, %v2811
    %v2828 = vpack.c.bf16 %v2814, %v2813
    %v2829 = vpack.c.bf16 %v2816, %v2815
    %v2830 = vpack.c.bf16 %v2818, %v2817
    %v2831 = vpack.c.bf16 %v2820, %v2819
    %v2832 = vpack.c.bf16 %v2822, %v2821
    %v2833 = vpack.c.bf16 %v2824, %v2823
    %v2834 = vpack.c.bf16 %v2826, %v2825
    %2835 = vrot.lane.b32.xlu0 %v289, 48
    %v2836 = vpop.permute.xlu0 %2835
    %v2839 = vsel %vm698, %v2827, 0
    %2841 = vmatprep.subr.bf16.mxu0 0
    %2842 = vmatpush1.bf16.msra.mxu0 %v2836
    %2843 = vmatprep.subr.bf16.mxu0 0
    %2844 = vmatpush1.bf16.msra.mxu0 0
    %2845 = vmatprep.subr.bf16.mxu0 0
    %2846 = vmatpush1.bf16.msra.mxu0 0
    %2847 = vmatprep.subr.bf16.mxu0 0
    %2848 = vmatpush1.bf16.msra.mxu0 0
    %2849 = vmatprep.subr.bf16.mxu0 0
    %2850 = vmatpush1.bf16.msra.mxu0 0
    %2851 = vmatprep.subr.bf16.mxu0 0
    %2852 = vmatpush1.bf16.msra.mxu0 0
    %2853 = vmatprep.subr.bf16.mxu0 0
    %2854 = vmatpush1.bf16.msra.mxu0 0
    %2855 = vmatprep.subr.bf16.mxu0 0
    %2856 = vmatpush1.bf16.msra.mxu0 0
    %2857 = vmatprep.subr.bf16.mxu0 0
    %2858 = vmatpush1.bf16.msra.mxu0 0
    %2859 = vmatprep.subr.bf16.mxu0 0
    %2860 = vmatpush1.bf16.msra.mxu0 0
    %2861 = vmatprep.subr.bf16.mxu0 0
    %2862 = vmatpush1.bf16.msra.mxu0 0
    %2863 = vmatprep.subr.bf16.mxu0 0
    %2864 = vmatpush1.bf16.msra.mxu0 0
    %2865 = vmatprep.subr.bf16.mxu0 0
    %2866 = vmatpush1.bf16.msra.mxu0 0
    %2867 = vmatprep.subr.bf16.mxu0 0
    %2868 = vmatpush1.bf16.msra.mxu0 0
    %2869 = vmatprep.subr.bf16.mxu0 0
    %2870 = vmatpush1.bf16.msra.mxu0 0
    %2871 = vmatprep.subr.bf16.mxu0 0
    %2872 = vmatpush1.bf16.msra.mxu0 0
    %2873 = vmatprep.mubr.bf16.mxu0 0
    %2874 = vmatmul.mubr.bf16.gmra.mrb[0].mxu0 %v2839
    %v2875 = vpop.f32.mrb[0].mxu0
    %v2876 = vadd.f32 0.0, %v2875
    %v2877 = vpop.f32.mrb[0].mxu0
    %v2878 = vpop.f32.mrb[0].mxu0
    %v2879 = vadd.f32 0.0, %v2878
    %v2880 = vpop.f32.mrb[0].mxu0
    %2881 = vdwg.mxu0
    %2882 = vrot.lane.b32.xlu0 %v290, 48
    %v2883 = vpop.permute.xlu0 %2882
    %v2886 = vsel %vm698, %v2828, 0
    %2888 = vmatprep.subr.bf16.mxu0 0
    %2889 = vmatpush1.bf16.msra.mxu0 %v2883
    %2890 = vmatprep.subr.bf16.mxu0 0
    %2891 = vmatpush1.bf16.msra.mxu0 0
    %2892 = vmatprep.subr.bf16.mxu0 0
    %2893 = vmatpush1.bf16.msra.mxu0 0
    %2894 = vmatprep.subr.bf16.mxu0 0
    %2895 = vmatpush1.bf16.msra.mxu0 0
    %2896 = vmatprep.subr.bf16.mxu0 0
    %2897 = vmatpush1.bf16.msra.mxu0 0
    %2898 = vmatprep.subr.bf16.mxu0 0
    %2899 = vmatpush1.bf16.msra.mxu0 0
    %2900 = vmatprep.subr.bf16.mxu0 0
    %2901 = vmatpush1.bf16.msra.mxu0 0
    %2902 = vmatprep.subr.bf16.mxu0 0
    %2903 = vmatpush1.bf16.msra.mxu0 0
    %2904 = vmatprep.subr.bf16.mxu0 0
    %2905 = vmatpush1.bf16.msra.mxu0 0
    %2906 = vmatprep.subr.bf16.mxu0 0
    %2907 = vmatpush1.bf16.msra.mxu0 0
    %2908 = vmatprep.subr.bf16.mxu0 0
    %2909 = vmatpush1.bf16.msra.mxu0 0
    %2910 = vmatprep.subr.bf16.mxu0 0
    %2911 = vmatpush1.bf16.msra.mxu0 0
    %2912 = vmatprep.subr.bf16.mxu0 0
    %2913 = vmatpush1.bf16.msra.mxu0 0
    %2914 = vmatprep.subr.bf16.mxu0 0
    %2915 = vmatpush1.bf16.msra.mxu0 0
    %2916 = vmatprep.subr.bf16.mxu0 0
    %2917 = vmatpush1.bf16.msra.mxu0 0
    %2918 = vmatprep.subr.bf16.mxu0 0
    %2919 = vmatpush1.bf16.msra.mxu0 0
    %2920 = vmatprep.mubr.bf16.mxu0 0
    %2921 = vmatmul.mubr.bf16.gmra.mrb[0].mxu0 %v2886
    %v2922 = vpop.f32.mrb[0].mxu0
    %v2923 = vadd.f32 0.0, %v2922
    %v2924 = vpop.f32.mrb[0].mxu0
    %v2925 = vpop.f32.mrb[0].mxu0
    %v2926 = vadd.f32 0.0, %v2925
    %v2927 = vpop.f32.mrb[0].mxu0
    %2928 = vdwg.mxu0
    %2929 = vrot.lane.b32.xlu0 %v291, 48
    %v2930 = vpop.permute.xlu0 %2929
    %v2933 = vsel %vm698, %v2829, 0
    %2935 = vmatprep.subr.bf16.mxu0 0
    %2936 = vmatpush1.bf16.msra.mxu0 %v2930
    %2937 = vmatprep.subr.bf16.mxu0 0
    %2938 = vmatpush1.bf16.msra.mxu0 0
    %2939 = vmatprep.subr.bf16.mxu0 0
    %2940 = vmatpush1.bf16.msra.mxu0 0
    %2941 = vmatprep.subr.bf16.mxu0 0
    %2942 = vmatpush1.bf16.msra.mxu0 0
    %2943 = vmatprep.subr.bf16.mxu0 0
    %2944 = vmatpush1.bf16.msra.mxu0 0
    %2945 = vmatprep.subr.bf16.mxu0 0
    %2946 = vmatpush1.bf16.msra.mxu0 0
    %2947 = vmatprep.subr.bf16.mxu0 0
    %2948 = vmatpush1.bf16.msra.mxu0 0
    %2949 = vmatprep.subr.bf16.mxu0 0
    %2950 = vmatpush1.bf16.msra.mxu0 0
    %2951 = vmatprep.subr.bf16.mxu0 0
    %2952 = vmatpush1.bf16.msra.mxu0 0
    %2953 = vmatprep.subr.bf16.mxu0 0
    %2954 = vmatpush1.bf16.msra.mxu0 0
    %2955 = vmatprep.subr.bf16.mxu0 0
    %2956 = vmatpush1.bf16.msra.mxu0 0
    %2957 = vmatprep.subr.bf16.mxu0 0
    %2958 = vmatpush1.bf16.msra.mxu0 0
    %2959 = vmatprep.subr.bf16.mxu0 0
    %2960 = vmatpush1.bf16.msra.mxu0 0
    %2961 = vmatprep.subr.bf16.mxu0 0
    %2962 = vmatpush1.bf16.msra.mxu0 0
    %2963 = vmatprep.subr.bf16.mxu0 0
    %2964 = vmatpush1.bf16.msra.mxu0 0
    %2965 = vmatprep.subr.bf16.mxu0 0
    %2966 = vmatpush1.bf16.msra.mxu0 0
    %2967 = vmatprep.mubr.bf16.mxu0 0
    %2968 = vmatmul.mubr.bf16.gmra.mrb[0].mxu0 %v2933
    %v2969 = vpop.f32.mrb[0].mxu0
    %v2970 = vadd.f32 0.0, %v2969
    %v2971 = vpop.f32.mrb[0].mxu0
    %v2972 = vpop.f32.mrb[0].mxu0
    %v2973 = vadd.f32 0.0, %v2972
    %v2974 = vpop.f32.mrb[0].mxu0
    %2975 = vdwg.mxu0
    %2976 = vrot.lane.b32.xlu0 %v292, 48
    %v2977 = vpop.permute.xlu0 %2976
    %v2980 = vsel %vm698, %v2830, 0
    %2982 = vmatprep.subr.bf16.mxu0 0
    %2983 = vmatpush1.bf16.msra.mxu0 %v2977
    %2984 = vmatprep.subr.bf16.mxu0 0
    %2985 = vmatpush1.bf16.msra.mxu0 0
    %2986 = vmatprep.subr.bf16.mxu0 0
    %2987 = vmatpush1.bf16.msra.mxu0 0
    %2988 = vmatprep.subr.bf16.mxu0 0
    %2989 = vmatpush1.bf16.msra.mxu0 0
    %2990 = vmatprep.subr.bf16.mxu0 0
    %2991 = vmatpush1.bf16.msra.mxu0 0
    %2992 = vmatprep.subr.bf16.mxu0 0
    %2993 = vmatpush1.bf16.msra.mxu0 0
    %2994 = vmatprep.subr.bf16.mxu0 0
    %2995 = vmatpush1.bf16.msra.mxu0 0
    %2996 = vmatprep.subr.bf16.mxu0 0
    %2997 = vmatpush1.bf16.msra.mxu0 0
    %2998 = vmatprep.subr.bf16.mxu0 0
    %2999 = vmatpush1.bf16.msra.mxu0 0
    %3000 = vmatprep.subr.bf16.mxu0 0
    %3001 = vmatpush1.bf16.msra.mxu0 0
    %3002 = vmatprep.subr.bf16.mxu0 0
    %3003 = vmatpush1.bf16.msra.mxu0 0
    %3004 = vmatprep.subr.bf16.mxu0 0
    %3005 = vmatpush1.bf16.msra.mxu0 0
    %3006 = vmatprep.subr.bf16.mxu0 0
    %3007 = vmatpush1.bf16.msra.mxu0 0
    %3008 = vmatprep.subr.bf16.mxu0 0
    %3009 = vmatpush1.bf16.msra.mxu0 0
    %3010 = vmatprep.subr.bf16.mxu0 0
    %3011 = vmatpush1.bf16.msra.mxu0 0
    %3012 = vmatprep.subr.bf16.mxu0 0
    %3013 = vmatpush1.bf16.msra.mxu0 0
    %3014 = vmatprep.mubr.bf16.mxu0 0
    %3015 = vmatmul.mubr.bf16.gmra.mrb[0].mxu0 %v2980
    %v3016 = vpop.f32.mrb[0].mxu0
    %v3017 = vadd.f32 0.0, %v3016
    %v3018 = vpop.f32.mrb[0].mxu0
    %v3019 = vpop.f32.mrb[0].mxu0
    %v3020 = vadd.f32 0.0, %v3019
    %v3021 = vpop.f32.mrb[0].mxu0
    %3022 = vdwg.mxu0
    %3023 = vrot.lane.b32.xlu0 %v293, 48
    %v3024 = vpop.permute.xlu0 %3023
    %v3027 = vsel %vm698, %v2831, 0
    %3029 = vmatprep.subr.bf16.mxu0 0
    %3030 = vmatpush1.bf16.msra.mxu0 %v3024
    %3031 = vmatprep.subr.bf16.mxu0 0
    %3032 = vmatpush1.bf16.msra.mxu0 0
    %3033 = vmatprep.subr.bf16.mxu0 0
    %3034 = vmatpush1.bf16.msra.mxu0 0
    %3035 = vmatprep.subr.bf16.mxu0 0
    %3036 = vmatpush1.bf16.msra.mxu0 0
    %3037 = vmatprep.subr.bf16.mxu0 0
    %3038 = vmatpush1.bf16.msra.mxu0 0
    %3039 = vmatprep.subr.bf16.mxu0 0
    %3040 = vmatpush1.bf16.msra.mxu0 0
    %3041 = vmatprep.subr.bf16.mxu0 0
    %3042 = vmatpush1.bf16.msra.mxu0 0
    %3043 = vmatprep.subr.bf16.mxu0 0
    %3044 = vmatpush1.bf16.msra.mxu0 0
    %3045 = vmatprep.subr.bf16.mxu0 0
    %3046 = vmatpush1.bf16.msra.mxu0 0
    %3047 = vmatprep.subr.bf16.mxu0 0
    %3048 = vmatpush1.bf16.msra.mxu0 0
    %3049 = vmatprep.subr.bf16.mxu0 0
    %3050 = vmatpush1.bf16.msra.mxu0 0
    %3051 = vmatprep.subr.bf16.mxu0 0
    %3052 = vmatpush1.bf16.msra.mxu0 0
    %3053 = vmatprep.subr.bf16.mxu0 0
    %3054 = vmatpush1.bf16.msra.mxu0 0
    %3055 = vmatprep.subr.bf16.mxu0 0
    %3056 = vmatpush1.bf16.msra.mxu0 0
    %3057 = vmatprep.subr.bf16.mxu0 0
    %3058 = vmatpush1.bf16.msra.mxu0 0
    %3059 = vmatprep.subr.bf16.mxu0 0
    %3060 = vmatpush1.bf16.msra.mxu0 0
    %3061 = vmatprep.mubr.bf16.mxu0 0
    %3062 = vmatmul.mubr.bf16.gmra.mrb[0].mxu0 %v3027
    %v3063 = vpop.f32.mrb[0].mxu0
    %v3064 = vadd.f32 0.0, %v3063
    %v3065 = vpop.f32.mrb[0].mxu0
    %v3066 = vpop.f32.mrb[0].mxu0
    %v3067 = vadd.f32 0.0, %v3066
    %v3068 = vpop.f32.mrb[0].mxu0
    %3069 = vdwg.mxu0
    %3070 = vrot.lane.b32.xlu0 %v294, 48
    %v3071 = vpop.permute.xlu0 %3070
    %v3074 = vsel %vm698, %v2832, 0
    %3076 = vmatprep.subr.bf16.mxu0 0
    %3077 = vmatpush1.bf16.msra.mxu0 %v3071
    %3078 = vmatprep.subr.bf16.mxu0 0
    %3079 = vmatpush1.bf16.msra.mxu0 0
    %3080 = vmatprep.subr.bf16.mxu0 0
    %3081 = vmatpush1.bf16.msra.mxu0 0
    %3082 = vmatprep.subr.bf16.mxu0 0
    %3083 = vmatpush1.bf16.msra.mxu0 0
    %3084 = vmatprep.subr.bf16.mxu0 0
    %3085 = vmatpush1.bf16.msra.mxu0 0
    %3086 = vmatprep.subr.bf16.mxu0 0
    %3087 = vmatpush1.bf16.msra.mxu0 0
    %3088 = vmatprep.subr.bf16.mxu0 0
    %3089 = vmatpush1.bf16.msra.mxu0 0
    %3090 = vmatprep.subr.bf16.mxu0 0
    %3091 = vmatpush1.bf16.msra.mxu0 0
    %3092 = vmatprep.subr.bf16.mxu0 0
    %3093 = vmatpush1.bf16.msra.mxu0 0
    %3094 = vmatprep.subr.bf16.mxu0 0
    %3095 = vmatpush1.bf16.msra.mxu0 0
    %3096 = vmatprep.subr.bf16.mxu0 0
    %3097 = vmatpush1.bf16.msra.mxu0 0
    %3098 = vmatprep.subr.bf16.mxu0 0
    %3099 = vmatpush1.bf16.msra.mxu0 0
    %3100 = vmatprep.subr.bf16.mxu0 0
    %3101 = vmatpush1.bf16.msra.mxu0 0
    %3102 = vmatprep.subr.bf16.mxu0 0
    %3103 = vmatpush1.bf16.msra.mxu0 0
    %3104 = vmatprep.subr.bf16.mxu0 0
    %3105 = vmatpush1.bf16.msra.mxu0 0
    %3106 = vmatprep.subr.bf16.mxu0 0
    %3107 = vmatpush1.bf16.msra.mxu0 0
    %3108 = vmatprep.mubr.bf16.mxu0 0
    %3109 = vmatmul.mubr.bf16.gmra.mrb[0].mxu0 %v3074
    %v3110 = vpop.f32.mrb[0].mxu0
    %v3111 = vadd.f32 0.0, %v3110
    %v3112 = vpop.f32.mrb[0].mxu0
    %v3113 = vpop.f32.mrb[0].mxu0
    %v3114 = vadd.f32 0.0, %v3113
    %v3115 = vpop.f32.mrb[0].mxu0
    %3116 = vdwg.mxu0
    %3117 = vrot.lane.b32.xlu0 %v295, 48
    %v3118 = vpop.permute.xlu0 %3117
    %v3121 = vsel %vm698, %v2833, 0
    %3123 = vmatprep.subr.bf16.mxu0 0
    %3124 = vmatpush1.bf16.msra.mxu0 %v3118
    %3125 = vmatprep.subr.bf16.mxu0 0
    %3126 = vmatpush1.bf16.msra.mxu0 0
    %3127 = vmatprep.subr.bf16.mxu0 0
    %3128 = vmatpush1.bf16.msra.mxu0 0
    %3129 = vmatprep.subr.bf16.mxu0 0
    %3130 = vmatpush1.bf16.msra.mxu0 0
    %3131 = vmatprep.subr.bf16.mxu0 0
    %3132 = vmatpush1.bf16.msra.mxu0 0
    %3133 = vmatprep.subr.bf16.mxu0 0
    %3134 = vmatpush1.bf16.msra.mxu0 0
    %3135 = vmatprep.subr.bf16.mxu0 0
    %3136 = vmatpush1.bf16.msra.mxu0 0
    %3137 = vmatprep.subr.bf16.mxu0 0
    %3138 = vmatpush1.bf16.msra.mxu0 0
    %3139 = vmatprep.subr.bf16.mxu0 0
    %3140 = vmatpush1.bf16.msra.mxu0 0
    %3141 = vmatprep.subr.bf16.mxu0 0
    %3142 = vmatpush1.bf16.msra.mxu0 0
    %3143 = vmatprep.subr.bf16.mxu0 0
    %3144 = vmatpush1.bf16.msra.mxu0 0
    %3145 = vmatprep.subr.bf16.mxu0 0
    %3146 = vmatpush1.bf16.msra.mxu0 0
    %3147 = vmatprep.subr.bf16.mxu0 0
    %3148 = vmatpush1.bf16.msra.mxu0 0
    %3149 = vmatprep.subr.bf16.mxu0 0
    %3150 = vmatpush1.bf16.msra.mxu0 0
    %3151 = vmatprep.subr.bf16.mxu0 0
    %3152 = vmatpush1.bf16.msra.mxu0 0
    %3153 = vmatprep.subr.bf16.mxu0 0
    %3154 = vmatpush1.bf16.msra.mxu0 0
    %3155 = vmatprep.mubr.bf16.mxu0 0
    %3156 = vmatmul.mubr.bf16.gmra.mrb[0].mxu0 %v3121
    %v3157 = vpop.f32.mrb[0].mxu0
    %v3158 = vadd.f32 0.0, %v3157
    %v3159 = vpop.f32.mrb[0].mxu0
    %v3160 = vpop.f32.mrb[0].mxu0
    %v3161 = vadd.f32 0.0, %v3160
    %v3162 = vpop.f32.mrb[0].mxu0
    %3163 = vdwg.mxu0
    %3164 = vrot.lane.b32.xlu0 %v296, 48
    %v3165 = vpop.permute.xlu0 %3164
    %v3168 = vsel %vm698, %v2834, 0
    %3170 = vmatprep.subr.bf16.mxu0 0
    %3171 = vmatpush1.bf16.msra.mxu0 %v3165
    %3172 = vmatprep.subr.bf16.mxu0 0
    %3173 = vmatpush1.bf16.msra.mxu0 0
    %3174 = vmatprep.subr.bf16.mxu0 0
    %3175 = vmatpush1.bf16.msra.mxu0 0
    %3176 = vmatprep.subr.bf16.mxu0 0
    %3177 = vmatpush1.bf16.msra.mxu0 0
    %3178 = vmatprep.subr.bf16.mxu0 0
    %3179 = vmatpush1.bf16.msra.mxu0 0
    %3180 = vmatprep.subr.bf16.mxu0 0
    %3181 = vmatpush1.bf16.msra.mxu0 0
    %3182 = vmatprep.subr.bf16.mxu0 0
    %3183 = vmatpush1.bf16.msra.mxu0 0
    %3184 = vmatprep.subr.bf16.mxu0 0
    %3185 = vmatpush1.bf16.msra.mxu0 0
    %3186 = vmatprep.subr.bf16.mxu0 0
    %3187 = vmatpush1.bf16.msra.mxu0 0
    %3188 = vmatprep.subr.bf16.mxu0 0
    %3189 = vmatpush1.bf16.msra.mxu0 0
    %3190 = vmatprep.subr.bf16.mxu0 0
    %3191 = vmatpush1.bf16.msra.mxu0 0
    %3192 = vmatprep.subr.bf16.mxu0 0
    %3193 = vmatpush1.bf16.msra.mxu0 0
    %3194 = vmatprep.subr.bf16.mxu0 0
    %3195 = vmatpush1.bf16.msra.mxu0 0
    %3196 = vmatprep.subr.bf16.mxu0 0
    %3197 = vmatpush1.bf16.msra.mxu0 0
    %3198 = vmatprep.subr.bf16.mxu0 0
    %3199 = vmatpush1.bf16.msra.mxu0 0
    %3200 = vmatprep.subr.bf16.mxu0 0
    %3201 = vmatpush1.bf16.msra.mxu0 0
    %3202 = vmatprep.mubr.bf16.mxu0 0
    %3203 = vmatmul.mubr.bf16.gmra.mrb[0].mxu0 %v3168
    %v3204 = vpop.f32.mrb[0].mxu0
    %v3205 = vadd.f32 0.0, %v3204
    %v3206 = vpop.f32.mrb[0].mxu0
    %v3207 = vpop.f32.mrb[0].mxu0
    %v3208 = vadd.f32 0.0, %v3207
    %v3209 = vpop.f32.mrb[0].mxu0
    %3210 = vdwg.mxu0
    %v3211 = vpack.c.bf16 %v2879, %v2876
    %v3212 = vpack.c.bf16 %v2926, %v2923
    %v3213 = vpack.c.bf16 %v2973, %v2970
    %v3214 = vpack.c.bf16 %v3020, %v3017
    %v3215 = vpack.c.bf16 %v3067, %v3064
    %v3216 = vpack.c.bf16 %v3114, %v3111
    %v3217 = vpack.c.bf16 %v3161, %v3158
    %v3218 = vpack.c.bf16 %v3208, %v3205
    %3219 = vrot.lane.b32.xlu0 %v289, 104
    %v3220 = vpop.permute.xlu0 %3219
    %3221 = vrot.lane.b32.xlu0 %v289, 72
    %v3222 = vpop.permute.xlu0 %3221
    %v3224 = vsel %vm300, %v3220, 0
    %v3227 = vsel %vm300, %v3222, 0
    %3229 = vmatprep.subr.bf16.mxu0 0
    %3230 = vmatpush1.bf16.xpose.msra.mxu0 %v3227
    %3231 = vmatprep.subr.bf16.mxu0 0
    %3232 = vmatpush1.bf16.xpose.msra.mxu0 0
    %3233 = vmatprep.subr.bf16.mxu0 0
    %3234 = vmatpush1.bf16.xpose.msra.mxu0 0
    %3235 = vmatprep.subr.bf16.mxu0 0
    %3236 = vmatpush1.bf16.xpose.msra.mxu0 0
    %3237 = vmatprep.subr.bf16.mxu0 0
    %3238 = vmatpush1.bf16.xpose.msra.mxu0 0
    %3239 = vmatprep.subr.bf16.mxu0 0
    %3240 = vmatpush1.bf16.xpose.msra.mxu0 0
    %3241 = vmatprep.subr.bf16.mxu0 0
    %3242 = vmatpush1.bf16.xpose.msra.mxu0 0
    %3243 = vmatprep.subr.bf16.mxu0 0
    %3244 = vmatpush1.bf16.xpose.msra.mxu0 0
    %3245 = vmatprep.subr.bf16.mxu0 0
    %3246 = vmatpush1.bf16.xpose.msra.mxu0 0
    %3247 = vmatprep.subr.bf16.mxu0 0
    %3248 = vmatpush1.bf16.xpose.msra.mxu0 0
    %3249 = vmatprep.subr.bf16.mxu0 0
    %3250 = vmatpush1.bf16.xpose.msra.mxu0 0
    %3251 = vmatprep.subr.bf16.mxu0 0
    %3252 = vmatpush1.bf16.xpose.msra.mxu0 0
    %3253 = vmatprep.subr.bf16.mxu0 0
    %3254 = vmatpush1.bf16.xpose.msra.mxu0 0
    %3255 = vmatprep.subr.bf16.mxu0 0
    %3256 = vmatpush1.bf16.xpose.msra.mxu0 0
    %3257 = vmatprep.subr.bf16.mxu0 0
    %3258 = vmatpush1.bf16.xpose.msra.mxu0 0
    %3259 = vmatprep.subr.bf16.mxu0 0
    %3260 = vmatpush1.bf16.xpose.msra.mxu0 0
    %3261 = vmatprep.mubr.bf16.mxu0 0
    %3262 = vmatmul.mubr.bf16.gmra.mrb[0].mxu0 %v3224
    %v3263 = vpop.f32.mrb[0].mxu0
    %v3264 = vadd.f32 %v287, %v3263
    %v3265 = vpop.f32.mrb[0].mxu0
    %v3266 = vpop.f32.mrb[0].mxu0
    %v3267 = vadd.f32 %v288, %v3266
    %v3268 = vpop.f32.mrb[0].mxu0
    %3269 = vdwg.mxu0
    %3270 = vrot.lane.b32.xlu0 %v290, 104
    %v3271 = vpop.permute.xlu0 %3270
    %3272 = vrot.lane.b32.xlu0 %v290, 72
    %v3273 = vpop.permute.xlu0 %3272
    %v3275 = vsel %vm300, %v3271, 0
    %v3278 = vsel %vm300, %v3273, 0
    %3280 = vmatprep.subr.bf16.mxu0 0
    %3281 = vmatpush1.bf16.xpose.msra.mxu0 %v3278
    %3282 = vmatprep.subr.bf16.mxu0 0
    %3283 = vmatpush1.bf16.xpose.msra.mxu0 0
    %3284 = vmatprep.subr.bf16.mxu0 0
    %3285 = vmatpush1.bf16.xpose.msra.mxu0 0
    %3286 = vmatprep.subr.bf16.mxu0 0
    %3287 = vmatpush1.bf16.xpose.msra.mxu0 0
    %3288 = vmatprep.subr.bf16.mxu0 0
    %3289 = vmatpush1.bf16.xpose.msra.mxu0 0
    %3290 = vmatprep.subr.bf16.mxu0 0
    %3291 = vmatpush1.bf16.xpose.msra.mxu0 0
    %3292 = vmatprep.subr.bf16.mxu0 0
    %3293 = vmatpush1.bf16.xpose.msra.mxu0 0
    %3294 = vmatprep.subr.bf16.mxu0 0
    %3295 = vmatpush1.bf16.xpose.msra.mxu0 0
    %3296 = vmatprep.subr.bf16.mxu0 0
    %3297 = vmatpush1.bf16.xpose.msra.mxu0 0
    %3298 = vmatprep.subr.bf16.mxu0 0
    %3299 = vmatpush1.bf16.xpose.msra.mxu0 0
    %3300 = vmatprep.subr.bf16.mxu0 0
    %3301 = vmatpush1.bf16.xpose.msra.mxu0 0
    %3302 = vmatprep.subr.bf16.mxu0 0
    %3303 = vmatpush1.bf16.xpose.msra.mxu0 0
    %3304 = vmatprep.subr.bf16.mxu0 0
    %3305 = vmatpush1.bf16.xpose.msra.mxu0 0
    %3306 = vmatprep.subr.bf16.mxu0 0
    %3307 = vmatpush1.bf16.xpose.msra.mxu0 0
    %3308 = vmatprep.subr.bf16.mxu0 0
    %3309 = vmatpush1.bf16.xpose.msra.mxu0 0
    %3310 = vmatprep.subr.bf16.mxu0 0
    %3311 = vmatpush1.bf16.xpose.msra.mxu0 0
    %3312 = vmatprep.mubr.bf16.mxu0 0
    %3313 = vmatmul.mubr.bf16.gmra.mrb[0].mxu0 %v3275
    %v3314 = vpop.f32.mrb[0].mxu0
    %v3315 = vadd.f32 %v287, %v3314
    %v3316 = vpop.f32.mrb[0].mxu0
    %v3317 = vpop.f32.mrb[0].mxu0
    %v3318 = vadd.f32 %v288, %v3317
    %v3319 = vpop.f32.mrb[0].mxu0
    %3320 = vdwg.mxu0
    %3321 = vrot.lane.b32.xlu0 %v291, 104
    %v3322 = vpop.permute.xlu0 %3321
    %3323 = vrot.lane.b32.xlu0 %v291, 72
    %v3324 = vpop.permute.xlu0 %3323
    %v3326 = vsel %vm300, %v3322, 0
    %v3329 = vsel %vm300, %v3324, 0
    %3331 = vmatprep.subr.bf16.mxu0 0
    %3332 = vmatpush1.bf16.xpose.msra.mxu0 %v3329
    %3333 = vmatprep.subr.bf16.mxu0 0
    %3334 = vmatpush1.bf16.xpose.msra.mxu0 0
    %3335 = vmatprep.subr.bf16.mxu0 0
    %3336 = vmatpush1.bf16.xpose.msra.mxu0 0
    %3337 = vmatprep.subr.bf16.mxu0 0
    %3338 = vmatpush1.bf16.xpose.msra.mxu0 0
    %3339 = vmatprep.subr.bf16.mxu0 0
    %3340 = vmatpush1.bf16.xpose.msra.mxu0 0
    %3341 = vmatprep.subr.bf16.mxu0 0
    %3342 = vmatpush1.bf16.xpose.msra.mxu0 0
    %3343 = vmatprep.subr.bf16.mxu0 0
    %3344 = vmatpush1.bf16.xpose.msra.mxu0 0
    %3345 = vmatprep.subr.bf16.mxu0 0
    %3346 = vmatpush1.bf16.xpose.msra.mxu0 0
    %3347 = vmatprep.subr.bf16.mxu0 0
    %3348 = vmatpush1.bf16.xpose.msra.mxu0 0
    %3349 = vmatprep.subr.bf16.mxu0 0
    %3350 = vmatpush1.bf16.xpose.msra.mxu0 0
    %3351 = vmatprep.subr.bf16.mxu0 0
    %3352 = vmatpush1.bf16.xpose.msra.mxu0 0
    %3353 = vmatprep.subr.bf16.mxu0 0
    %3354 = vmatpush1.bf16.xpose.msra.mxu0 0
    %3355 = vmatprep.subr.bf16.mxu0 0
    %3356 = vmatpush1.bf16.xpose.msra.mxu0 0
    %3357 = vmatprep.subr.bf16.mxu0 0
    %3358 = vmatpush1.bf16.xpose.msra.mxu0 0
    %3359 = vmatprep.subr.bf16.mxu0 0
    %3360 = vmatpush1.bf16.xpose.msra.mxu0 0
    %3361 = vmatprep.subr.bf16.mxu0 0
    %3362 = vmatpush1.bf16.xpose.msra.mxu0 0
    %3363 = vmatprep.mubr.bf16.mxu0 0
    %3364 = vmatmul.mubr.bf16.gmra.mrb[0].mxu0 %v3326
    %v3365 = vpop.f32.mrb[0].mxu0
    %v3366 = vadd.f32 %v287, %v3365
    %v3367 = vpop.f32.mrb[0].mxu0
    %v3368 = vpop.f32.mrb[0].mxu0
    %v3369 = vadd.f32 %v288, %v3368
    %v3370 = vpop.f32.mrb[0].mxu0
    %3371 = vdwg.mxu0
    %3372 = vrot.lane.b32.xlu0 %v292, 104
    %v3373 = vpop.permute.xlu0 %3372
    %3374 = vrot.lane.b32.xlu0 %v292, 72
    %v3375 = vpop.permute.xlu0 %3374
    %v3377 = vsel %vm300, %v3373, 0
    %v3380 = vsel %vm300, %v3375, 0
    %3382 = vmatprep.subr.bf16.mxu0 0
    %3383 = vmatpush1.bf16.xpose.msra.mxu0 %v3380
    %3384 = vmatprep.subr.bf16.mxu0 0
    %3385 = vmatpush1.bf16.xpose.msra.mxu0 0
    %3386 = vmatprep.subr.bf16.mxu0 0
    %3387 = vmatpush1.bf16.xpose.msra.mxu0 0
    %3388 = vmatprep.subr.bf16.mxu0 0
    %3389 = vmatpush1.bf16.xpose.msra.mxu0 0
    %3390 = vmatprep.subr.bf16.mxu0 0
    %3391 = vmatpush1.bf16.xpose.msra.mxu0 0
    %3392 = vmatprep.subr.bf16.mxu0 0
    %3393 = vmatpush1.bf16.xpose.msra.mxu0 0
    %3394 = vmatprep.subr.bf16.mxu0 0
    %3395 = vmatpush1.bf16.xpose.msra.mxu0 0
    %3396 = vmatprep.subr.bf16.mxu0 0
    %3397 = vmatpush1.bf16.xpose.msra.mxu0 0
    %3398 = vmatprep.subr.bf16.mxu0 0
    %3399 = vmatpush1.bf16.xpose.msra.mxu0 0
    %3400 = vmatprep.subr.bf16.mxu0 0
    %3401 = vmatpush1.bf16.xpose.msra.mxu0 0
    %3402 = vmatprep.subr.bf16.mxu0 0
    %3403 = vmatpush1.bf16.xpose.msra.mxu0 0
    %3404 = vmatprep.subr.bf16.mxu0 0
    %3405 = vmatpush1.bf16.xpose.msra.mxu0 0
    %3406 = vmatprep.subr.bf16.mxu0 0
    %3407 = vmatpush1.bf16.xpose.msra.mxu0 0
    %3408 = vmatprep.subr.bf16.mxu0 0
    %3409 = vmatpush1.bf16.xpose.msra.mxu0 0
    %3410 = vmatprep.subr.bf16.mxu0 0
    %3411 = vmatpush1.bf16.xpose.msra.mxu0 0
    %3412 = vmatprep.subr.bf16.mxu0 0
    %3413 = vmatpush1.bf16.xpose.msra.mxu0 0
    %3414 = vmatprep.mubr.bf16.mxu0 0
    %3415 = vmatmul.mubr.bf16.gmra.mrb[0].mxu0 %v3377
    %v3416 = vpop.f32.mrb[0].mxu0
    %v3417 = vadd.f32 %v287, %v3416
    %v3418 = vpop.f32.mrb[0].mxu0
    %v3419 = vpop.f32.mrb[0].mxu0
    %v3420 = vadd.f32 %v288, %v3419
    %v3421 = vpop.f32.mrb[0].mxu0
    %3422 = vdwg.mxu0
    %3423 = vrot.lane.b32.xlu0 %v293, 104
    %v3424 = vpop.permute.xlu0 %3423
    %3425 = vrot.lane.b32.xlu0 %v293, 72
    %v3426 = vpop.permute.xlu0 %3425
    %v3428 = vsel %vm300, %v3424, 0
    %v3431 = vsel %vm300, %v3426, 0
    %3433 = vmatprep.subr.bf16.mxu0 0
    %3434 = vmatpush1.bf16.xpose.msra.mxu0 %v3431
    %3435 = vmatprep.subr.bf16.mxu0 0
    %3436 = vmatpush1.bf16.xpose.msra.mxu0 0
    %3437 = vmatprep.subr.bf16.mxu0 0
    %3438 = vmatpush1.bf16.xpose.msra.mxu0 0
    %3439 = vmatprep.subr.bf16.mxu0 0
    %3440 = vmatpush1.bf16.xpose.msra.mxu0 0
    %3441 = vmatprep.subr.bf16.mxu0 0
    %3442 = vmatpush1.bf16.xpose.msra.mxu0 0
    %3443 = vmatprep.subr.bf16.mxu0 0
    %3444 = vmatpush1.bf16.xpose.msra.mxu0 0
    %3445 = vmatprep.subr.bf16.mxu0 0
    %3446 = vmatpush1.bf16.xpose.msra.mxu0 0
    %3447 = vmatprep.subr.bf16.mxu0 0
    %3448 = vmatpush1.bf16.xpose.msra.mxu0 0
    %3449 = vmatprep.subr.bf16.mxu0 0
    %3450 = vmatpush1.bf16.xpose.msra.mxu0 0
    %3451 = vmatprep.subr.bf16.mxu0 0
    %3452 = vmatpush1.bf16.xpose.msra.mxu0 0
    %3453 = vmatprep.subr.bf16.mxu0 0
    %3454 = vmatpush1.bf16.xpose.msra.mxu0 0
    %3455 = vmatprep.subr.bf16.mxu0 0
    %3456 = vmatpush1.bf16.xpose.msra.mxu0 0
    %3457 = vmatprep.subr.bf16.mxu0 0
    %3458 = vmatpush1.bf16.xpose.msra.mxu0 0
    %3459 = vmatprep.subr.bf16.mxu0 0
    %3460 = vmatpush1.bf16.xpose.msra.mxu0 0
    %3461 = vmatprep.subr.bf16.mxu0 0
    %3462 = vmatpush1.bf16.xpose.msra.mxu0 0
    %3463 = vmatprep.subr.bf16.mxu0 0
    %3464 = vmatpush1.bf16.xpose.msra.mxu0 0
    %3465 = vmatprep.mubr.bf16.mxu0 0
    %3466 = vmatmul.mubr.bf16.gmra.mrb[0].mxu0 %v3428
    %v3467 = vpop.f32.mrb[0].mxu0
    %v3468 = vadd.f32 %v287, %v3467
    %v3469 = vpop.f32.mrb[0].mxu0
    %v3470 = vpop.f32.mrb[0].mxu0
    %v3471 = vadd.f32 %v288, %v3470
    %v3472 = vpop.f32.mrb[0].mxu0
    %3473 = vdwg.mxu0
    %3474 = vrot.lane.b32.xlu0 %v294, 104
    %v3475 = vpop.permute.xlu0 %3474
    %3476 = vrot.lane.b32.xlu0 %v294, 72
    %v3477 = vpop.permute.xlu0 %3476
    %v3479 = vsel %vm300, %v3475, 0
    %v3482 = vsel %vm300, %v3477, 0
    %3484 = vmatprep.subr.bf16.mxu0 0
    %3485 = vmatpush1.bf16.xpose.msra.mxu0 %v3482
    %3486 = vmatprep.subr.bf16.mxu0 0
    %3487 = vmatpush1.bf16.xpose.msra.mxu0 0
    %3488 = vmatprep.subr.bf16.mxu0 0
    %3489 = vmatpush1.bf16.xpose.msra.mxu0 0
    %3490 = vmatprep.subr.bf16.mxu0 0
    %3491 = vmatpush1.bf16.xpose.msra.mxu0 0
    %3492 = vmatprep.subr.bf16.mxu0 0
    %3493 = vmatpush1.bf16.xpose.msra.mxu0 0
    %3494 = vmatprep.subr.bf16.mxu0 0
    %3495 = vmatpush1.bf16.xpose.msra.mxu0 0
    %3496 = vmatprep.subr.bf16.mxu0 0
    %3497 = vmatpush1.bf16.xpose.msra.mxu0 0
    %3498 = vmatprep.subr.bf16.mxu0 0
    %3499 = vmatpush1.bf16.xpose.msra.mxu0 0
    %3500 = vmatprep.subr.bf16.mxu0 0
    %3501 = vmatpush1.bf16.xpose.msra.mxu0 0
    %3502 = vmatprep.subr.bf16.mxu0 0
    %3503 = vmatpush1.bf16.xpose.msra.mxu0 0
    %3504 = vmatprep.subr.bf16.mxu0 0
    %3505 = vmatpush1.bf16.xpose.msra.mxu0 0
    %3506 = vmatprep.subr.bf16.mxu0 0
    %3507 = vmatpush1.bf16.xpose.msra.mxu0 0
    %3508 = vmatprep.subr.bf16.mxu0 0
    %3509 = vmatpush1.bf16.xpose.msra.mxu0 0
    %3510 = vmatprep.subr.bf16.mxu0 0
    %3511 = vmatpush1.bf16.xpose.msra.mxu0 0
    %3512 = vmatprep.subr.bf16.mxu0 0
    %3513 = vmatpush1.bf16.xpose.msra.mxu0 0
    %3514 = vmatprep.subr.bf16.mxu0 0
    %3515 = vmatpush1.bf16.xpose.msra.mxu0 0
    %3516 = vmatprep.mubr.bf16.mxu0 0
    %3517 = vmatmul.mubr.bf16.gmra.mrb[0].mxu0 %v3479
    %v3518 = vpop.f32.mrb[0].mxu0
    %v3519 = vadd.f32 %v287, %v3518
    %v3520 = vpop.f32.mrb[0].mxu0
    %v3521 = vpop.f32.mrb[0].mxu0
    %v3522 = vadd.f32 %v288, %v3521
    %v3523 = vpop.f32.mrb[0].mxu0
    %3524 = vdwg.mxu0
    %3525 = vrot.lane.b32.xlu0 %v295, 104
    %v3526 = vpop.permute.xlu0 %3525
    %3527 = vrot.lane.b32.xlu0 %v295, 72
    %v3528 = vpop.permute.xlu0 %3527
    %v3530 = vsel %vm300, %v3526, 0
    %v3533 = vsel %vm300, %v3528, 0
    %3535 = vmatprep.subr.bf16.mxu0 0
    %3536 = vmatpush1.bf16.xpose.msra.mxu0 %v3533
    %3537 = vmatprep.subr.bf16.mxu0 0
    %3538 = vmatpush1.bf16.xpose.msra.mxu0 0
    %3539 = vmatprep.subr.bf16.mxu0 0
    %3540 = vmatpush1.bf16.xpose.msra.mxu0 0
    %3541 = vmatprep.subr.bf16.mxu0 0
    %3542 = vmatpush1.bf16.xpose.msra.mxu0 0
    %3543 = vmatprep.subr.bf16.mxu0 0
    %3544 = vmatpush1.bf16.xpose.msra.mxu0 0
    %3545 = vmatprep.subr.bf16.mxu0 0
    %3546 = vmatpush1.bf16.xpose.msra.mxu0 0
    %3547 = vmatprep.subr.bf16.mxu0 0
    %3548 = vmatpush1.bf16.xpose.msra.mxu0 0
    %3549 = vmatprep.subr.bf16.mxu0 0
    %3550 = vmatpush1.bf16.xpose.msra.mxu0 0
    %3551 = vmatprep.subr.bf16.mxu0 0
    %3552 = vmatpush1.bf16.xpose.msra.mxu0 0
    %3553 = vmatprep.subr.bf16.mxu0 0
    %3554 = vmatpush1.bf16.xpose.msra.mxu0 0
    %3555 = vmatprep.subr.bf16.mxu0 0
    %3556 = vmatpush1.bf16.xpose.msra.mxu0 0
    %3557 = vmatprep.subr.bf16.mxu0 0
    %3558 = vmatpush1.bf16.xpose.msra.mxu0 0
    %3559 = vmatprep.subr.bf16.mxu0 0
    %3560 = vmatpush1.bf16.xpose.msra.mxu0 0
    %3561 = vmatprep.subr.bf16.mxu0 0
    %3562 = vmatpush1.bf16.xpose.msra.mxu0 0
    %3563 = vmatprep.subr.bf16.mxu0 0
    %3564 = vmatpush1.bf16.xpose.msra.mxu0 0
    %3565 = vmatprep.subr.bf16.mxu0 0
    %3566 = vmatpush1.bf16.xpose.msra.mxu0 0
    %3567 = vmatprep.mubr.bf16.mxu0 0
    %3568 = vmatmul.mubr.bf16.gmra.mrb[0].mxu0 %v3530
    %v3569 = vpop.f32.mrb[0].mxu0
    %v3570 = vadd.f32 %v287, %v3569
    %v3571 = vpop.f32.mrb[0].mxu0
    %v3572 = vpop.f32.mrb[0].mxu0
    %v3573 = vadd.f32 %v288, %v3572
    %v3574 = vpop.f32.mrb[0].mxu0
    %3575 = vdwg.mxu0
    %3576 = vrot.lane.b32.xlu0 %v296, 104
    %v3577 = vpop.permute.xlu0 %3576
    %3578 = vrot.lane.b32.xlu0 %v296, 72
    %v3579 = vpop.permute.xlu0 %3578
    %v3581 = vsel %vm300, %v3577, 0
    %v3584 = vsel %vm300, %v3579, 0
    %3586 = vmatprep.subr.bf16.mxu0 0
    %3587 = vmatpush1.bf16.xpose.msra.mxu0 %v3584
    %3588 = vmatprep.subr.bf16.mxu0 0
    %3589 = vmatpush1.bf16.xpose.msra.mxu0 0
    %3590 = vmatprep.subr.bf16.mxu0 0
    %3591 = vmatpush1.bf16.xpose.msra.mxu0 0
    %3592 = vmatprep.subr.bf16.mxu0 0
    %3593 = vmatpush1.bf16.xpose.msra.mxu0 0
    %3594 = vmatprep.subr.bf16.mxu0 0
    %3595 = vmatpush1.bf16.xpose.msra.mxu0 0
    %3596 = vmatprep.subr.bf16.mxu0 0
    %3597 = vmatpush1.bf16.xpose.msra.mxu0 0
    %3598 = vmatprep.subr.bf16.mxu0 0
    %3599 = vmatpush1.bf16.xpose.msra.mxu0 0
    %3600 = vmatprep.subr.bf16.mxu0 0
    %3601 = vmatpush1.bf16.xpose.msra.mxu0 0
    %3602 = vmatprep.subr.bf16.mxu0 0
    %3603 = vmatpush1.bf16.xpose.msra.mxu0 0
    %3604 = vmatprep.subr.bf16.mxu0 0
    %3605 = vmatpush1.bf16.xpose.msra.mxu0 0
    %3606 = vmatprep.subr.bf16.mxu0 0
    %3607 = vmatpush1.bf16.xpose.msra.mxu0 0
    %3608 = vmatprep.subr.bf16.mxu0 0
    %3609 = vmatpush1.bf16.xpose.msra.mxu0 0
    %3610 = vmatprep.subr.bf16.mxu0 0
    %3611 = vmatpush1.bf16.xpose.msra.mxu0 0
    %3612 = vmatprep.subr.bf16.mxu0 0
    %3613 = vmatpush1.bf16.xpose.msra.mxu0 0
    %3614 = vmatprep.subr.bf16.mxu0 0
    %3615 = vmatpush1.bf16.xpose.msra.mxu0 0
    %3616 = vmatprep.subr.bf16.mxu0 0
    %3617 = vmatpush1.bf16.xpose.msra.mxu0 0
    %3618 = vmatprep.mubr.bf16.mxu0 0
    %3619 = vmatmul.mubr.bf16.gmra.mrb[0].mxu0 %v3581
    %v3620 = vpop.f32.mrb[0].mxu0
    %v3621 = vadd.f32 %v287, %v3620
    %v3622 = vpop.f32.mrb[0].mxu0
    %v3623 = vpop.f32.mrb[0].mxu0
    %v3624 = vadd.f32 %v288, %v3623
    %v3625 = vpop.f32.mrb[0].mxu0
    %3626 = vdwg.mxu0
    %v3627 = vsel %vm698, %v3264, -inf
    %3628 = vmax.xlane.f32.xlu0 %v3627
    %v3629 = vpop.xlane.xlu0 %3628
    %v3630 = vsel %vm698, %v3267, -inf
    %3631 = vmax.xlane.f32.xlu0 %v3630
    %v3632 = vpop.xlane.xlu0 %3631
    %v3633 = vsel %vm698, %v3315, -inf
    %3634 = vmax.xlane.f32.xlu0 %v3633
    %v3635 = vpop.xlane.xlu0 %3634
    %v3636 = vsel %vm698, %v3318, -inf
    %3637 = vmax.xlane.f32.xlu0 %v3636
    %v3638 = vpop.xlane.xlu0 %3637
    %v3639 = vsel %vm698, %v3366, -inf
    %3640 = vmax.xlane.f32.xlu0 %v3639
    %v3641 = vpop.xlane.xlu0 %3640
    %v3642 = vsel %vm698, %v3369, -inf
    %3643 = vmax.xlane.f32.xlu0 %v3642
    %v3644 = vpop.xlane.xlu0 %3643
    %v3645 = vsel %vm698, %v3417, -inf
    %3646 = vmax.xlane.f32.xlu0 %v3645
    %v3647 = vpop.xlane.xlu0 %3646
    %v3648 = vsel %vm698, %v3420, -inf
    %3649 = vmax.xlane.f32.xlu0 %v3648
    %v3650 = vpop.xlane.xlu0 %3649
    %v3651 = vsel %vm698, %v3468, -inf
    %3652 = vmax.xlane.f32.xlu0 %v3651
    %v3653 = vpop.xlane.xlu0 %3652
    %v3654 = vsel %vm698, %v3471, -inf
    %3655 = vmax.xlane.f32.xlu0 %v3654
    %v3656 = vpop.xlane.xlu0 %3655
    %v3657 = vsel %vm698, %v3519, -inf
    %3658 = vmax.xlane.f32.xlu0 %v3657
    %v3659 = vpop.xlane.xlu0 %3658
    %v3660 = vsel %vm698, %v3522, -inf
    %3661 = vmax.xlane.f32.xlu0 %v3660
    %v3662 = vpop.xlane.xlu0 %3661
    %v3663 = vsel %vm698, %v3570, -inf
    %3664 = vmax.xlane.f32.xlu0 %v3663
    %v3665 = vpop.xlane.xlu0 %3664
    %v3666 = vsel %vm698, %v3573, -inf
    %3667 = vmax.xlane.f32.xlu0 %v3666
    %v3668 = vpop.xlane.xlu0 %3667
    %v3669 = vsel %vm698, %v3621, -inf
    %3670 = vmax.xlane.f32.xlu0 %v3669
    %v3671 = vpop.xlane.xlu0 %3670
    %v3672 = vsel %vm698, %v3624, -inf
    %3673 = vmax.xlane.f32.xlu0 %v3672
    %v3674 = vpop.xlane.xlu0 %3673
    %v3675 = vsub.f32 %v3264, %v3629
    %v3676 = vsub.f32 %v3267, %v3632
    %v3677 = vsub.f32 %v3315, %v3635
    %v3678 = vsub.f32 %v3318, %v3638
    %v3679 = vsub.f32 %v3366, %v3641
    %v3680 = vsub.f32 %v3369, %v3644
    %v3681 = vsub.f32 %v3417, %v3647
    %v3682 = vsub.f32 %v3420, %v3650
    %v3683 = vsub.f32 %v3468, %v3653
    %v3684 = vsub.f32 %v3471, %v3656
    %v3685 = vsub.f32 %v3519, %v3659
    %v3686 = vsub.f32 %v3522, %v3662
    %v3687 = vsub.f32 %v3570, %v3665
    %v3688 = vsub.f32 %v3573, %v3668
    %v3689 = vsub.f32 %v3621, %v3671
    %v3690 = vsub.f32 %v3624, %v3674
    %v3691 = vmul.f32 %v3675, 1.442695
    %v3692 = vpow.pop %v3691
    %v3693 = vmul.f32 %v3676, 1.442695
    %v3694 = vpow.pop %v3693
    %v3695 = vmul.f32 %v3677, 1.442695
    %v3696 = vpow.pop %v3695
    %v3697 = vmul.f32 %v3678, 1.442695
    %v3698 = vpow.pop %v3697
    %v3699 = vmul.f32 %v3679, 1.442695
    %v3700 = vpow.pop %v3699
    %v3701 = vmul.f32 %v3680, 1.442695
    %v3702 = vpow.pop %v3701
    %v3703 = vmul.f32 %v3681, 1.442695
    %v3704 = vpow.pop %v3703
    %v3705 = vmul.f32 %v3682, 1.442695
    %v3706 = vpow.pop %v3705
    %v3707 = vmul.f32 %v3683, 1.442695
    %v3708 = vpow.pop %v3707
    %v3709 = vmul.f32 %v3684, 1.442695
    %v3710 = vpow.pop %v3709
    %v3711 = vmul.f32 %v3685, 1.442695
    %v3712 = vpow.pop %v3711
    %v3713 = vmul.f32 %v3686, 1.442695
    %v3714 = vpow.pop %v3713
    %v3715 = vmul.f32 %v3687, 1.442695
    %v3716 = vpow.pop %v3715
    %v3717 = vmul.f32 %v3688, 1.442695
    %v3718 = vpow.pop %v3717
    %v3719 = vmul.f32 %v3689, 1.442695
    %v3720 = vpow.pop %v3719
    %v3721 = vmul.f32 %v3690, 1.442695
    %v3722 = vpow.pop %v3721
    %v3723 = vsel %vm698, %v3692, 0.0
    %3724 = vadd.xlane.f32.xlu0 %v3723
    %v3725 = vpop.xlane.xlu0 %3724
    %v3726 = vsel %vm698, %v3694, 0.0
    %3727 = vadd.xlane.f32.xlu0 %v3726
    %v3728 = vpop.xlane.xlu0 %3727
    %v3729 = vsel %vm698, %v3696, 0.0
    %3730 = vadd.xlane.f32.xlu0 %v3729
    %v3731 = vpop.xlane.xlu0 %3730
    %v3732 = vsel %vm698, %v3698, 0.0
    %3733 = vadd.xlane.f32.xlu0 %v3732
    %v3734 = vpop.xlane.xlu0 %3733
    %v3735 = vsel %vm698, %v3700, 0.0
    %3736 = vadd.xlane.f32.xlu0 %v3735
    %v3737 = vpop.xlane.xlu0 %3736
    %v3738 = vsel %vm698, %v3702, 0.0
    %3739 = vadd.xlane.f32.xlu0 %v3738
    %v3740 = vpop.xlane.xlu0 %3739
    %v3741 = vsel %vm698, %v3704, 0.0
    %3742 = vadd.xlane.f32.xlu0 %v3741
    %v3743 = vpop.xlane.xlu0 %3742
    %v3744 = vsel %vm698, %v3706, 0.0
    %3745 = vadd.xlane.f32.xlu0 %v3744
    %v3746 = vpop.xlane.xlu0 %3745
    %v3747 = vsel %vm698, %v3708, 0.0
    %3748 = vadd.xlane.f32.xlu0 %v3747
    %v3749 = vpop.xlane.xlu0 %3748
    %v3750 = vsel %vm698, %v3710, 0.0
    %3751 = vadd.xlane.f32.xlu0 %v3750
    %v3752 = vpop.xlane.xlu0 %3751
    %v3753 = vsel %vm698, %v3712, 0.0
    %3754 = vadd.xlane.f32.xlu0 %v3753
    %v3755 = vpop.xlane.xlu0 %3754
    %v3756 = vsel %vm698, %v3714, 0.0
    %3757 = vadd.xlane.f32.xlu0 %v3756
    %v3758 = vpop.xlane.xlu0 %3757
    %v3759 = vsel %vm698, %v3716, 0.0
    %3760 = vadd.xlane.f32.xlu0 %v3759
    %v3761 = vpop.xlane.xlu0 %3760
    %v3762 = vsel %vm698, %v3718, 0.0
    %3763 = vadd.xlane.f32.xlu0 %v3762
    %v3764 = vpop.xlane.xlu0 %3763
    %v3765 = vsel %vm698, %v3720, 0.0
    %3766 = vadd.xlane.f32.xlu0 %v3765
    %v3767 = vpop.xlane.xlu0 %3766
    %v3768 = vsel %vm698, %v3722, 0.0
    %3769 = vadd.xlane.f32.xlu0 %v3768
    %v3770 = vpop.xlane.xlu0 %3769
    %v3771 = vrcp.pop %v3725
    %v3772 = vrcp.pop %v3728
    %v3773 = vrcp.pop %v3731
    %v3774 = vrcp.pop %v3734
    %v3775 = vrcp.pop %v3737
    %v3776 = vrcp.pop %v3740
    %v3777 = vrcp.pop %v3743
    %v3778 = vrcp.pop %v3746
    %v3779 = vrcp.pop %v3749
    %v3780 = vrcp.pop %v3752
    %v3781 = vrcp.pop %v3755
    %v3782 = vrcp.pop %v3758
    %v3783 = vrcp.pop %v3761
    %v3784 = vrcp.pop %v3764
    %v3785 = vrcp.pop %v3767
    %v3786 = vrcp.pop %v3770
    %v3787 = vmul.f32 %v3692, %v3771
    %v3788 = vmul.f32 %v3694, %v3772
    %v3789 = vmul.f32 %v3696, %v3773
    %v3790 = vmul.f32 %v3698, %v3774
    %v3791 = vmul.f32 %v3700, %v3775
    %v3792 = vmul.f32 %v3702, %v3776
    %v3793 = vmul.f32 %v3704, %v3777
    %v3794 = vmul.f32 %v3706, %v3778
    %v3795 = vmul.f32 %v3708, %v3779
    %v3796 = vmul.f32 %v3710, %v3780
    %v3797 = vmul.f32 %v3712, %v3781
    %v3798 = vmul.f32 %v3714, %v3782
    %v3799 = vmul.f32 %v3716, %v3783
    %v3800 = vmul.f32 %v3718, %v3784
    %v3801 = vmul.f32 %v3720, %v3785
    %v3802 = vmul.f32 %v3722, %v3786
    %v3803 = vpack.c.bf16 %v3788, %v3787
    %v3804 = vpack.c.bf16 %v3790, %v3789
    %v3805 = vpack.c.bf16 %v3792, %v3791
    %v3806 = vpack.c.bf16 %v3794, %v3793
    %v3807 = vpack.c.bf16 %v3796, %v3795
    %v3808 = vpack.c.bf16 %v3798, %v3797
    %v3809 = vpack.c.bf16 %v3800, %v3799
    %v3810 = vpack.c.bf16 %v3802, %v3801
    %3811 = vrot.lane.b32.xlu0 %v289, 40
    %v3812 = vpop.permute.xlu0 %3811
    %v3815 = vsel %vm698, %v3803, 0
    %3817 = vmatprep.subr.bf16.mxu0 0
    %3818 = vmatpush1.bf16.msra.mxu0 %v3812
    %3819 = vmatprep.subr.bf16.mxu0 0
    %3820 = vmatpush1.bf16.msra.mxu0 0
    %3821 = vmatprep.subr.bf16.mxu0 0
    %3822 = vmatpush1.bf16.msra.mxu0 0
    %3823 = vmatprep.subr.bf16.mxu0 0
    %3824 = vmatpush1.bf16.msra.mxu0 0
    %3825 = vmatprep.subr.bf16.mxu0 0
    %3826 = vmatpush1.bf16.msra.mxu0 0
    %3827 = vmatprep.subr.bf16.mxu0 0
    %3828 = vmatpush1.bf16.msra.mxu0 0
    %3829 = vmatprep.subr.bf16.mxu0 0
    %3830 = vmatpush1.bf16.msra.mxu0 0
    %3831 = vmatprep.subr.bf16.mxu0 0
    %3832 = vmatpush1.bf16.msra.mxu0 0
    %3833 = vmatprep.subr.bf16.mxu0 0
    %3834 = vmatpush1.bf16.msra.mxu0 0
    %3835 = vmatprep.subr.bf16.mxu0 0
    %3836 = vmatpush1.bf16.msra.mxu0 0
    %3837 = vmatprep.subr.bf16.mxu0 0
    %3838 = vmatpush1.bf16.msra.mxu0 0
    %3839 = vmatprep.subr.bf16.mxu0 0
    %3840 = vmatpush1.bf16.msra.mxu0 0
    %3841 = vmatprep.subr.bf16.mxu0 0
    %3842 = vmatpush1.bf16.msra.mxu0 0
    %3843 = vmatprep.subr.bf16.mxu0 0
    %3844 = vmatpush1.bf16.msra.mxu0 0
    %3845 = vmatprep.subr.bf16.mxu0 0
    %3846 = vmatpush1.bf16.msra.mxu0 0
    %3847 = vmatprep.subr.bf16.mxu0 0
    %3848 = vmatpush1.bf16.msra.mxu0 0
    %3849 = vmatprep.mubr.bf16.mxu0 0
    %3850 = vmatmul.mubr.bf16.gmra.mrb[0].mxu0 %v3815
    %v3851 = vpop.f32.mrb[0].mxu0
    %v3852 = vadd.f32 0.0, %v3851
    %v3853 = vpop.f32.mrb[0].mxu0
    %v3854 = vpop.f32.mrb[0].mxu0
    %v3855 = vadd.f32 0.0, %v3854
    %v3856 = vpop.f32.mrb[0].mxu0
    %3857 = vdwg.mxu0
    %3858 = vrot.lane.b32.xlu0 %v290, 40
    %v3859 = vpop.permute.xlu0 %3858
    %v3862 = vsel %vm698, %v3804, 0
    %3864 = vmatprep.subr.bf16.mxu0 0
    %3865 = vmatpush1.bf16.msra.mxu0 %v3859
    %3866 = vmatprep.subr.bf16.mxu0 0
    %3867 = vmatpush1.bf16.msra.mxu0 0
    %3868 = vmatprep.subr.bf16.mxu0 0
    %3869 = vmatpush1.bf16.msra.mxu0 0
    %3870 = vmatprep.subr.bf16.mxu0 0
    %3871 = vmatpush1.bf16.msra.mxu0 0
    %3872 = vmatprep.subr.bf16.mxu0 0
    %3873 = vmatpush1.bf16.msra.mxu0 0
    %3874 = vmatprep.subr.bf16.mxu0 0
    %3875 = vmatpush1.bf16.msra.mxu0 0
    %3876 = vmatprep.subr.bf16.mxu0 0
    %3877 = vmatpush1.bf16.msra.mxu0 0
    %3878 = vmatprep.subr.bf16.mxu0 0
    %3879 = vmatpush1.bf16.msra.mxu0 0
    %3880 = vmatprep.subr.bf16.mxu0 0
    %3881 = vmatpush1.bf16.msra.mxu0 0
    %3882 = vmatprep.subr.bf16.mxu0 0
    %3883 = vmatpush1.bf16.msra.mxu0 0
    %3884 = vmatprep.subr.bf16.mxu0 0
    %3885 = vmatpush1.bf16.msra.mxu0 0
    %3886 = vmatprep.subr.bf16.mxu0 0
    %3887 = vmatpush1.bf16.msra.mxu0 0
    %3888 = vmatprep.subr.bf16.mxu0 0
    %3889 = vmatpush1.bf16.msra.mxu0 0
    %3890 = vmatprep.subr.bf16.mxu0 0
    %3891 = vmatpush1.bf16.msra.mxu0 0
    %3892 = vmatprep.subr.bf16.mxu0 0
    %3893 = vmatpush1.bf16.msra.mxu0 0
    %3894 = vmatprep.subr.bf16.mxu0 0
    %3895 = vmatpush1.bf16.msra.mxu0 0
    %3896 = vmatprep.mubr.bf16.mxu0 0
    %3897 = vmatmul.mubr.bf16.gmra.mrb[0].mxu0 %v3862
    %v3898 = vpop.f32.mrb[0].mxu0
    %v3899 = vadd.f32 0.0, %v3898
    %v3900 = vpop.f32.mrb[0].mxu0
    %v3901 = vpop.f32.mrb[0].mxu0
    %v3902 = vadd.f32 0.0, %v3901
    %v3903 = vpop.f32.mrb[0].mxu0
    %3904 = vdwg.mxu0
    %3905 = vrot.lane.b32.xlu0 %v291, 40
    %v3906 = vpop.permute.xlu0 %3905
    %v3909 = vsel %vm698, %v3805, 0
    %3911 = vmatprep.subr.bf16.mxu0 0
    %3912 = vmatpush1.bf16.msra.mxu0 %v3906
    %3913 = vmatprep.subr.bf16.mxu0 0
    %3914 = vmatpush1.bf16.msra.mxu0 0
    %3915 = vmatprep.subr.bf16.mxu0 0
    %3916 = vmatpush1.bf16.msra.mxu0 0
    %3917 = vmatprep.subr.bf16.mxu0 0
    %3918 = vmatpush1.bf16.msra.mxu0 0
    %3919 = vmatprep.subr.bf16.mxu0 0
    %3920 = vmatpush1.bf16.msra.mxu0 0
    %3921 = vmatprep.subr.bf16.mxu0 0
    %3922 = vmatpush1.bf16.msra.mxu0 0
    %3923 = vmatprep.subr.bf16.mxu0 0
    %3924 = vmatpush1.bf16.msra.mxu0 0
    %3925 = vmatprep.subr.bf16.mxu0 0
    %3926 = vmatpush1.bf16.msra.mxu0 0
    %3927 = vmatprep.subr.bf16.mxu0 0
    %3928 = vmatpush1.bf16.msra.mxu0 0
    %3929 = vmatprep.subr.bf16.mxu0 0
    %3930 = vmatpush1.bf16.msra.mxu0 0
    %3931 = vmatprep.subr.bf16.mxu0 0
    %3932 = vmatpush1.bf16.msra.mxu0 0
    %3933 = vmatprep.subr.bf16.mxu0 0
    %3934 = vmatpush1.bf16.msra.mxu0 0
    %3935 = vmatprep.subr.bf16.mxu0 0
    %3936 = vmatpush1.bf16.msra.mxu0 0
    %3937 = vmatprep.subr.bf16.mxu0 0
    %3938 = vmatpush1.bf16.msra.mxu0 0
    %3939 = vmatprep.subr.bf16.mxu0 0
    %3940 = vmatpush1.bf16.msra.mxu0 0
    %3941 = vmatprep.subr.bf16.mxu0 0
    %3942 = vmatpush1.bf16.msra.mxu0 0
    %3943 = vmatprep.mubr.bf16.mxu0 0
    %3944 = vmatmul.mubr.bf16.gmra.mrb[0].mxu0 %v3909
    %v3945 = vpop.f32.mrb[0].mxu0
    %v3946 = vadd.f32 0.0, %v3945
    %v3947 = vpop.f32.mrb[0].mxu0
    %v3948 = vpop.f32.mrb[0].mxu0
    %v3949 = vadd.f32 0.0, %v3948
    %v3950 = vpop.f32.mrb[0].mxu0
    %3951 = vdwg.mxu0
    %3952 = vrot.lane.b32.xlu0 %v292, 40
    %v3953 = vpop.permute.xlu0 %3952
    %v3956 = vsel %vm698, %v3806, 0
    %3958 = vmatprep.subr.bf16.mxu0 0
    %3959 = vmatpush1.bf16.msra.mxu0 %v3953
    %3960 = vmatprep.subr.bf16.mxu0 0
    %3961 = vmatpush1.bf16.msra.mxu0 0
    %3962 = vmatprep.subr.bf16.mxu0 0
    %3963 = vmatpush1.bf16.msra.mxu0 0
    %3964 = vmatprep.subr.bf16.mxu0 0
    %3965 = vmatpush1.bf16.msra.mxu0 0
    %3966 = vmatprep.subr.bf16.mxu0 0
    %3967 = vmatpush1.bf16.msra.mxu0 0
    %3968 = vmatprep.subr.bf16.mxu0 0
    %3969 = vmatpush1.bf16.msra.mxu0 0
    %3970 = vmatprep.subr.bf16.mxu0 0
    %3971 = vmatpush1.bf16.msra.mxu0 0
    %3972 = vmatprep.subr.bf16.mxu0 0
    %3973 = vmatpush1.bf16.msra.mxu0 0
    %3974 = vmatprep.subr.bf16.mxu0 0
    %3975 = vmatpush1.bf16.msra.mxu0 0
    %3976 = vmatprep.subr.bf16.mxu0 0
    %3977 = vmatpush1.bf16.msra.mxu0 0
    %3978 = vmatprep.subr.bf16.mxu0 0
    %3979 = vmatpush1.bf16.msra.mxu0 0
    %3980 = vmatprep.subr.bf16.mxu0 0
    %3981 = vmatpush1.bf16.msra.mxu0 0
    %3982 = vmatprep.subr.bf16.mxu0 0
    %3983 = vmatpush1.bf16.msra.mxu0 0
    %3984 = vmatprep.subr.bf16.mxu0 0
    %3985 = vmatpush1.bf16.msra.mxu0 0
    %3986 = vmatprep.subr.bf16.mxu0 0
    %3987 = vmatpush1.bf16.msra.mxu0 0
    %3988 = vmatprep.subr.bf16.mxu0 0
    %3989 = vmatpush1.bf16.msra.mxu0 0
    %3990 = vmatprep.mubr.bf16.mxu0 0
    %3991 = vmatmul.mubr.bf16.gmra.mrb[0].mxu0 %v3956
    %v3992 = vpop.f32.mrb[0].mxu0
    %v3993 = vadd.f32 0.0, %v3992
    %v3994 = vpop.f32.mrb[0].mxu0
    %v3995 = vpop.f32.mrb[0].mxu0
    %v3996 = vadd.f32 0.0, %v3995
    %v3997 = vpop.f32.mrb[0].mxu0
    %3998 = vdwg.mxu0
    %3999 = vrot.lane.b32.xlu0 %v293, 40
    %v4000 = vpop.permute.xlu0 %3999
    %v4003 = vsel %vm698, %v3807, 0
    %4005 = vmatprep.subr.bf16.mxu0 0
    %4006 = vmatpush1.bf16.msra.mxu0 %v4000
    %4007 = vmatprep.subr.bf16.mxu0 0
    %4008 = vmatpush1.bf16.msra.mxu0 0
    %4009 = vmatprep.subr.bf16.mxu0 0
    %4010 = vmatpush1.bf16.msra.mxu0 0
    %4011 = vmatprep.subr.bf16.mxu0 0
    %4012 = vmatpush1.bf16.msra.mxu0 0
    %4013 = vmatprep.subr.bf16.mxu0 0
    %4014 = vmatpush1.bf16.msra.mxu0 0
    %4015 = vmatprep.subr.bf16.mxu0 0
    %4016 = vmatpush1.bf16.msra.mxu0 0
    %4017 = vmatprep.subr.bf16.mxu0 0
    %4018 = vmatpush1.bf16.msra.mxu0 0
    %4019 = vmatprep.subr.bf16.mxu0 0
    %4020 = vmatpush1.bf16.msra.mxu0 0
    %4021 = vmatprep.subr.bf16.mxu0 0
    %4022 = vmatpush1.bf16.msra.mxu0 0
    %4023 = vmatprep.subr.bf16.mxu0 0
    %4024 = vmatpush1.bf16.msra.mxu0 0
    %4025 = vmatprep.subr.bf16.mxu0 0
    %4026 = vmatpush1.bf16.msra.mxu0 0
    %4027 = vmatprep.subr.bf16.mxu0 0
    %4028 = vmatpush1.bf16.msra.mxu0 0
    %4029 = vmatprep.subr.bf16.mxu0 0
    %4030 = vmatpush1.bf16.msra.mxu0 0
    %4031 = vmatprep.subr.bf16.mxu0 0
    %4032 = vmatpush1.bf16.msra.mxu0 0
    %4033 = vmatprep.subr.bf16.mxu0 0
    %4034 = vmatpush1.bf16.msra.mxu0 0
    %4035 = vmatprep.subr.bf16.mxu0 0
    %4036 = vmatpush1.bf16.msra.mxu0 0
    %4037 = vmatprep.mubr.bf16.mxu0 0
    %4038 = vmatmul.mubr.bf16.gmra.mrb[0].mxu0 %v4003
    %v4039 = vpop.f32.mrb[0].mxu0
    %v4040 = vadd.f32 0.0, %v4039
    %v4041 = vpop.f32.mrb[0].mxu0
    %v4042 = vpop.f32.mrb[0].mxu0
    %v4043 = vadd.f32 0.0, %v4042
    %v4044 = vpop.f32.mrb[0].mxu0
    %4045 = vdwg.mxu0
    %4046 = vrot.lane.b32.xlu0 %v294, 40
    %v4047 = vpop.permute.xlu0 %4046
    %v4050 = vsel %vm698, %v3808, 0
    %4052 = vmatprep.subr.bf16.mxu0 0
    %4053 = vmatpush1.bf16.msra.mxu0 %v4047
    %4054 = vmatprep.subr.bf16.mxu0 0
    %4055 = vmatpush1.bf16.msra.mxu0 0
    %4056 = vmatprep.subr.bf16.mxu0 0
    %4057 = vmatpush1.bf16.msra.mxu0 0
    %4058 = vmatprep.subr.bf16.mxu0 0
    %4059 = vmatpush1.bf16.msra.mxu0 0
    %4060 = vmatprep.subr.bf16.mxu0 0
    %4061 = vmatpush1.bf16.msra.mxu0 0
    %4062 = vmatprep.subr.bf16.mxu0 0
    %4063 = vmatpush1.bf16.msra.mxu0 0
    %4064 = vmatprep.subr.bf16.mxu0 0
    %4065 = vmatpush1.bf16.msra.mxu0 0
    %4066 = vmatprep.subr.bf16.mxu0 0
    %4067 = vmatpush1.bf16.msra.mxu0 0
    %4068 = vmatprep.subr.bf16.mxu0 0
    %4069 = vmatpush1.bf16.msra.mxu0 0
    %4070 = vmatprep.subr.bf16.mxu0 0
    %4071 = vmatpush1.bf16.msra.mxu0 0
    %4072 = vmatprep.subr.bf16.mxu0 0
    %4073 = vmatpush1.bf16.msra.mxu0 0
    %4074 = vmatprep.subr.bf16.mxu0 0
    %4075 = vmatpush1.bf16.msra.mxu0 0
    %4076 = vmatprep.subr.bf16.mxu0 0
    %4077 = vmatpush1.bf16.msra.mxu0 0
    %4078 = vmatprep.subr.bf16.mxu0 0
    %4079 = vmatpush1.bf16.msra.mxu0 0
    %4080 = vmatprep.subr.bf16.mxu0 0
    %4081 = vmatpush1.bf16.msra.mxu0 0
    %4082 = vmatprep.subr.bf16.mxu0 0
    %4083 = vmatpush1.bf16.msra.mxu0 0
    %4084 = vmatprep.mubr.bf16.mxu0 0
    %4085 = vmatmul.mubr.bf16.gmra.mrb[0].mxu0 %v4050
    %v4086 = vpop.f32.mrb[0].mxu0
    %v4087 = vadd.f32 0.0, %v4086
    %v4088 = vpop.f32.mrb[0].mxu0
    %v4089 = vpop.f32.mrb[0].mxu0
    %v4090 = vadd.f32 0.0, %v4089
    %v4091 = vpop.f32.mrb[0].mxu0
    %4092 = vdwg.mxu0
    %4093 = vrot.lane.b32.xlu0 %v295, 40
    %v4094 = vpop.permute.xlu0 %4093
    %v4097 = vsel %vm698, %v3809, 0
    %4099 = vmatprep.subr.bf16.mxu0 0
    %4100 = vmatpush1.bf16.msra.mxu0 %v4094
    %4101 = vmatprep.subr.bf16.mxu0 0
    %4102 = vmatpush1.bf16.msra.mxu0 0
    %4103 = vmatprep.subr.bf16.mxu0 0
    %4104 = vmatpush1.bf16.msra.mxu0 0
    %4105 = vmatprep.subr.bf16.mxu0 0
    %4106 = vmatpush1.bf16.msra.mxu0 0
    %4107 = vmatprep.subr.bf16.mxu0 0
    %4108 = vmatpush1.bf16.msra.mxu0 0
    %4109 = vmatprep.subr.bf16.mxu0 0
    %4110 = vmatpush1.bf16.msra.mxu0 0
    %4111 = vmatprep.subr.bf16.mxu0 0
    %4112 = vmatpush1.bf16.msra.mxu0 0
    %4113 = vmatprep.subr.bf16.mxu0 0
    %4114 = vmatpush1.bf16.msra.mxu0 0
    %4115 = vmatprep.subr.bf16.mxu0 0
    %4116 = vmatpush1.bf16.msra.mxu0 0
    %4117 = vmatprep.subr.bf16.mxu0 0
    %4118 = vmatpush1.bf16.msra.mxu0 0
    %4119 = vmatprep.subr.bf16.mxu0 0
    %4120 = vmatpush1.bf16.msra.mxu0 0
    %4121 = vmatprep.subr.bf16.mxu0 0
    %4122 = vmatpush1.bf16.msra.mxu0 0
    %4123 = vmatprep.subr.bf16.mxu0 0
    %4124 = vmatpush1.bf16.msra.mxu0 0
    %4125 = vmatprep.subr.bf16.mxu0 0
    %4126 = vmatpush1.bf16.msra.mxu0 0
    %4127 = vmatprep.subr.bf16.mxu0 0
    %4128 = vmatpush1.bf16.msra.mxu0 0
    %4129 = vmatprep.subr.bf16.mxu0 0
    %4130 = vmatpush1.bf16.msra.mxu0 0
    %4131 = vmatprep.mubr.bf16.mxu0 0
    %4132 = vmatmul.mubr.bf16.gmra.mrb[0].mxu0 %v4097
    %v4133 = vpop.f32.mrb[0].mxu0
    %v4134 = vadd.f32 0.0, %v4133
    %v4135 = vpop.f32.mrb[0].mxu0
    %v4136 = vpop.f32.mrb[0].mxu0
    %v4137 = vadd.f32 0.0, %v4136
    %v4138 = vpop.f32.mrb[0].mxu0
    %4139 = vdwg.mxu0
    %4140 = vrot.lane.b32.xlu0 %v296, 40
    %v4141 = vpop.permute.xlu0 %4140
    %v4144 = vsel %vm698, %v3810, 0
    %4146 = vmatprep.subr.bf16.mxu0 0
    %4147 = vmatpush1.bf16.msra.mxu0 %v4141
    %4148 = vmatprep.subr.bf16.mxu0 0
    %4149 = vmatpush1.bf16.msra.mxu0 0
    %4150 = vmatprep.subr.bf16.mxu0 0
    %4151 = vmatpush1.bf16.msra.mxu0 0
    %4152 = vmatprep.subr.bf16.mxu0 0
    %4153 = vmatpush1.bf16.msra.mxu0 0
    %4154 = vmatprep.subr.bf16.mxu0 0
    %4155 = vmatpush1.bf16.msra.mxu0 0
    %4156 = vmatprep.subr.bf16.mxu0 0
    %4157 = vmatpush1.bf16.msra.mxu0 0
    %4158 = vmatprep.subr.bf16.mxu0 0
    %4159 = vmatpush1.bf16.msra.mxu0 0
    %4160 = vmatprep.subr.bf16.mxu0 0
    %4161 = vmatpush1.bf16.msra.mxu0 0
    %4162 = vmatprep.subr.bf16.mxu0 0
    %4163 = vmatpush1.bf16.msra.mxu0 0
    %4164 = vmatprep.subr.bf16.mxu0 0
    %4165 = vmatpush1.bf16.msra.mxu0 0
    %4166 = vmatprep.subr.bf16.mxu0 0
    %4167 = vmatpush1.bf16.msra.mxu0 0
    %4168 = vmatprep.subr.bf16.mxu0 0
    %4169 = vmatpush1.bf16.msra.mxu0 0
    %4170 = vmatprep.subr.bf16.mxu0 0
    %4171 = vmatpush1.bf16.msra.mxu0 0
    %4172 = vmatprep.subr.bf16.mxu0 0
    %4173 = vmatpush1.bf16.msra.mxu0 0
    %4174 = vmatprep.subr.bf16.mxu0 0
    %4175 = vmatpush1.bf16.msra.mxu0 0
    %4176 = vmatprep.subr.bf16.mxu0 0
    %4177 = vmatpush1.bf16.msra.mxu0 0
    %4178 = vmatprep.mubr.bf16.mxu0 0
    %4179 = vmatmul.mubr.bf16.gmra.mrb[0].mxu0 %v4144
    %v4180 = vpop.f32.mrb[0].mxu0
    %v4181 = vadd.f32 0.0, %v4180
    %v4182 = vpop.f32.mrb[0].mxu0
    %v4183 = vpop.f32.mrb[0].mxu0
    %v4184 = vadd.f32 0.0, %v4183
    %v4185 = vpop.f32.mrb[0].mxu0
    %4186 = vdwg.mxu0
    %v4187 = vpack.c.bf16 %v3855, %v3852
    %v4188 = vpack.c.bf16 %v3902, %v3899
    %v4189 = vpack.c.bf16 %v3949, %v3946
    %v4190 = vpack.c.bf16 %v3996, %v3993
    %v4191 = vpack.c.bf16 %v4043, %v4040
    %v4192 = vpack.c.bf16 %v4090, %v4087
    %v4193 = vpack.c.bf16 %v4137, %v4134
    %v4194 = vpack.c.bf16 %v4184, %v4181
    %4203 = vrot.lane.b32.xlu0 %v2235, 8
    %v4204 = vpop.permute.xlu0 %4203
    %4205 = vrot.lane.b32.xlu0 %v2236, 8
    %v4206 = vpop.permute.xlu0 %4205
    %4207 = vrot.lane.b32.xlu0 %v2237, 8
    %v4208 = vpop.permute.xlu0 %4207
    %4209 = vrot.lane.b32.xlu0 %v2238, 8
    %v4210 = vpop.permute.xlu0 %4209
    %4211 = vrot.lane.b32.xlu0 %v2239, 8
    %v4212 = vpop.permute.xlu0 %4211
    %4213 = vrot.lane.b32.xlu0 %v2240, 8
    %v4214 = vpop.permute.xlu0 %4213
    %4215 = vrot.lane.b32.xlu0 %v2241, 8
    %v4216 = vpop.permute.xlu0 %4215
    %4217 = vrot.lane.b32.xlu0 %v2242, 8
    %v4218 = vpop.permute.xlu0 %4217
    %4227 = vrot.lane.b32.xlu0 %v3211, 16
    %v4228 = vpop.permute.xlu0 %4227
    %4229 = vrot.lane.b32.xlu0 %v3212, 16
    %v4230 = vpop.permute.xlu0 %4229
    %4231 = vrot.lane.b32.xlu0 %v3213, 16
    %v4232 = vpop.permute.xlu0 %4231
    %4233 = vrot.lane.b32.xlu0 %v3214, 16
    %v4234 = vpop.permute.xlu0 %4233
    %4235 = vrot.lane.b32.xlu0 %v3215, 16
    %v4236 = vpop.permute.xlu0 %4235
    %4237 = vrot.lane.b32.xlu0 %v3216, 16
    %v4238 = vpop.permute.xlu0 %4237
    %4239 = vrot.lane.b32.xlu0 %v3217, 16
    %v4240 = vpop.permute.xlu0 %4239
    %4241 = vrot.lane.b32.xlu0 %v3218, 16
    %v4242 = vpop.permute.xlu0 %4241
    %4251 = vrot.lane.b32.xlu0 %v4187, 24
    %v4252 = vpop.permute.xlu0 %4251
    %4253 = vrot.lane.b32.xlu0 %v4188, 24
    %v4254 = vpop.permute.xlu0 %4253
    %4255 = vrot.lane.b32.xlu0 %v4189, 24
    %v4256 = vpop.permute.xlu0 %4255
    %4257 = vrot.lane.b32.xlu0 %v4190, 24
    %v4258 = vpop.permute.xlu0 %4257
    %4259 = vrot.lane.b32.xlu0 %v4191, 24
    %v4260 = vpop.permute.xlu0 %4259
    %4261 = vrot.lane.b32.xlu0 %v4192, 24
    %v4262 = vpop.permute.xlu0 %4261
    %4263 = vrot.lane.b32.xlu0 %v4193, 24
    %v4264 = vpop.permute.xlu0 %4263
    %4265 = vrot.lane.b32.xlu0 %v4194, 24
    %v4266 = vpop.permute.xlu0 %4265
    %v4269 = vsel %vm300, %v1259, %v4204
    %v4272 = vsel %vm300, %v1260, %v4206
    %v4275 = vsel %vm300, %v1261, %v4208
    %v4278 = vsel %vm300, %v1262, %v4210
    %v4281 = vsel %vm300, %v1263, %v4212
    %v4284 = vsel %vm300, %v1264, %v4214
    %v4287 = vsel %vm300, %v1265, %v4216
    %v4290 = vsel %vm300, %v1266, %v4218
    %v4292 = vsel %vm698, %v4269, %v4228
    %v4294 = vsel %vm698, %v4272, %v4230
    %v4296 = vsel %vm698, %v4275, %v4232
    %v4298 = vsel %vm698, %v4278, %v4234
    %v4300 = vsel %vm698, %v4281, %v4236
    %v4302 = vsel %vm698, %v4284, %v4238
    %v4304 = vsel %vm698, %v4287, %v4240
    %v4306 = vsel %vm698, %v4290, %v4242
    %vm4307 = vcmask 195584
    %v4309 = vsel %vm4307, %v4292, %v4252
    %v4311 = vsel %vm4307, %v4294, %v4254
    %v4313 = vsel %vm4307, %v4296, %v4256
    %v4315 = vsel %vm4307, %v4298, %v4258
    %v4317 = vsel %vm4307, %v4300, %v4260
    %v4319 = vsel %vm4307, %v4302, %v4262
    %v4321 = vsel %vm4307, %v4304, %v4264
    %v4323 = vsel %vm4307, %v4306, %v4266
    %v4324 = vld [vmem:[#allocation8] sm:$0xf]
    %v4325 = vld [vmem:[#allocation8 + $0x4] sm:$0xf]
    %v4326 = vld [vmem:[#allocation8 + $0x8] sm:$0xf]
    %v4327 = vld [vmem:[#allocation8 + $0xc] sm:$0xf]
    %v4328 = vld [vmem:[%s5] sm:$0x1]
    %v4330 = vlaneseq
    %v4331 = vshrl.u32 %v4330, 7
    %v4332 = vsub.s32 0, %v4331
    %v4333 = vrot.slane %v4328, %v4332
    %v4339 = vunpack.c.l.b16 %v4324
    %v4340 = vunpack.c.l.b16 %v4325
    %v4341 = vunpack.c.l.b16 %v4326
    %v4342 = vunpack.c.l.b16 %v4327
    %v4343 = vpack.c.b16 %v4340, %v4339
    %v4344 = vpack.c.b16 %v4342, %v4341
    %v4347 = vsel %vm159, %v4309, 0
    %v4349 = vsel %vm159, %v4311, 0
    %v4351 = vsel %vm159, %v4313, 0
    %v4353 = vsel %vm159, %v4315, 0
    %v4355 = vsel %vm159, %v4317, 0
    %v4357 = vsel %vm159, %v4319, 0
    %v4359 = vsel %vm159, %v4321, 0
    %v4361 = vsel %vm159, %v4323, 0
    %4363 = vmatprep.subr.bf16.mxu0 0
    %4364 = vmatpush1.bf16.msra.mxu0 %v4343
    %4365 = vmatprep.subr.bf16.mxu0 0
    %4366 = vmatpush1.bf16.msra.mxu0 %v4344
    %4367 = vmatprep.subr.bf16.mxu0 0
    %4368 = vmatpush1.bf16.msra.mxu0 0
    %4369 = vmatprep.subr.bf16.mxu0 0
    %4370 = vmatpush1.bf16.msra.mxu0 0
    %4371 = vmatprep.subr.bf16.mxu0 0
    %4372 = vmatpush1.bf16.msra.mxu0 0
    %4373 = vmatprep.subr.bf16.mxu0 0
    %4374 = vmatpush1.bf16.msra.mxu0 0
    %4375 = vmatprep.subr.bf16.mxu0 0
    %4376 = vmatpush1.bf16.msra.mxu0 0
    %4377 = vmatprep.subr.bf16.mxu0 0
    %4378 = vmatpush1.bf16.msra.mxu0 0
    %4379 = vmatprep.subr.bf16.mxu0 0
    %4380 = vmatpush1.bf16.msra.mxu0 0
    %4381 = vmatprep.subr.bf16.mxu0 0
    %4382 = vmatpush1.bf16.msra.mxu0 0
    %4383 = vmatprep.subr.bf16.mxu0 0
    %4384 = vmatpush1.bf16.msra.mxu0 0
    %4385 = vmatprep.subr.bf16.mxu0 0
    %4386 = vmatpush1.bf16.msra.mxu0 0
    %4387 = vmatprep.subr.bf16.mxu0 0
    %4388 = vmatpush1.bf16.msra.mxu0 0
    %4389 = vmatprep.subr.bf16.mxu0 0
    %4390 = vmatpush1.bf16.msra.mxu0 0
    %4391 = vmatprep.subr.bf16.mxu0 0
    %4392 = vmatpush1.bf16.msra.mxu0 0
    %4393 = vmatprep.subr.bf16.mxu0 0
    %4394 = vmatpush1.bf16.msra.mxu0 0
    %4395 = vmatprep.mubr.bf16.mxu0 0
    %4396 = vmatmul.mubr.bf16.gmra.mrb[0].mxu0 %v4347
    %v4397 = vpop.f32.mrb[0].mxu0
    %v4398 = vadd.f32 %v4333, %v4397
    %v4399 = vpop.f32.mrb[0].mxu0
    %v4400 = vpop.f32.mrb[0].mxu0
    %v4401 = vadd.f32 %v4333, %v4400
    %v4402 = vpop.f32.mrb[0].mxu0
    %4403 = vmatprep.mubr.bf16.mxu0 0
    %4404 = vmatmul.mubr.bf16.gmra.mrb[0].mxu0 %v4349
    %v4405 = vpop.f32.mrb[0].mxu0
    %v4406 = vadd.f32 %v4333, %v4405
    %v4407 = vpop.f32.mrb[0].mxu0
    %v4408 = vpop.f32.mrb[0].mxu0
    %v4409 = vadd.f32 %v4333, %v4408
    %v4410 = vpop.f32.mrb[0].mxu0
    %4411 = vmatprep.mubr.bf16.mxu0 0
    %4412 = vmatmul.mubr.bf16.gmra.mrb[0].mxu0 %v4351
    %v4413 = vpop.f32.mrb[0].mxu0
    %v4414 = vadd.f32 %v4333, %v4413
    %v4415 = vpop.f32.mrb[0].mxu0
    %v4416 = vpop.f32.mrb[0].mxu0
    %v4417 = vadd.f32 %v4333, %v4416
    %v4418 = vpop.f32.mrb[0].mxu0
    %4419 = vmatprep.mubr.bf16.mxu0 0
    %4420 = vmatmul.mubr.bf16.gmra.mrb[0].mxu0 %v4353
    %v4421 = vpop.f32.mrb[0].mxu0
    %v4422 = vadd.f32 %v4333, %v4421
    %v4423 = vpop.f32.mrb[0].mxu0
    %v4424 = vpop.f32.mrb[0].mxu0
    %v4425 = vadd.f32 %v4333, %v4424
    %v4426 = vpop.f32.mrb[0].mxu0
    %4427 = vmatprep.mubr.bf16.mxu0 0
    %4428 = vmatmul.mubr.bf16.gmra.mrb[0].mxu0 %v4355
    %v4429 = vpop.f32.mrb[0].mxu0
    %v4430 = vadd.f32 %v4333, %v4429
    %v4431 = vpop.f32.mrb[0].mxu0
    %v4432 = vpop.f32.mrb[0].mxu0
    %v4433 = vadd.f32 %v4333, %v4432
    %v4434 = vpop.f32.mrb[0].mxu0
    %4435 = vmatprep.mubr.bf16.mxu0 0
    %4436 = vmatmul.mubr.bf16.gmra.mrb[0].mxu0 %v4357
    %v4437 = vpop.f32.mrb[0].mxu0
    %v4438 = vadd.f32 %v4333, %v4437
    %v4439 = vpop.f32.mrb[0].mxu0
    %v4440 = vpop.f32.mrb[0].mxu0
    %v4441 = vadd.f32 %v4333, %v4440
    %v4442 = vpop.f32.mrb[0].mxu0
    %4443 = vmatprep.mubr.bf16.mxu0 0
    %4444 = vmatmul.mubr.bf16.gmra.mrb[0].mxu0 %v4359
    %v4445 = vpop.f32.mrb[0].mxu0
    %v4446 = vadd.f32 %v4333, %v4445
    %v4447 = vpop.f32.mrb[0].mxu0
    %v4448 = vpop.f32.mrb[0].mxu0
    %v4449 = vadd.f32 %v4333, %v4448
    %v4450 = vpop.f32.mrb[0].mxu0
    %4451 = vmatprep.mubr.bf16.mxu0 0
    %4452 = vmatmul.mubr.bf16.gmra.mrb[0].mxu0 %v4361
    %v4453 = vpop.f32.mrb[0].mxu0
    %v4454 = vadd.f32 %v4333, %v4453
    %v4455 = vpop.f32.mrb[0].mxu0
    %v4456 = vpop.f32.mrb[0].mxu0
    %v4457 = vadd.f32 %v4333, %v4456
    %v4458 = vpop.f32.mrb[0].mxu0
    %4459 = vdwg.mxu0
    %4460 = vst.msk [vmem:[#allocation10] sm:$0xff] %vm159, %v4398
    %4461 = vst.msk [vmem:[#allocation10 + $0x8] sm:$0xff] %vm159, %v4401
    %4462 = vst.msk [vmem:[#allocation10 + $0x10] sm:$0xff] %vm159, %v4406
    %4463 = vst.msk [vmem:[#allocation10 + $0x18] sm:$0xff] %vm159, %v4409
    %4464 = vst.msk [vmem:[#allocation10 + $0x20] sm:$0xff] %vm159, %v4414
    %4465 = vst.msk [vmem:[#allocation10 + $0x28] sm:$0xff] %vm159, %v4417
    %4466 = vst.msk [vmem:[#allocation10 + $0x30] sm:$0xff] %vm159, %v4422
    %4467 = vst.msk [vmem:[#allocation10 + $0x38] sm:$0xff] %vm159, %v4425
    %4468 = vst.msk [vmem:[#allocation10 + $0x40] sm:$0xff] %vm159, %v4430
    %4469 = vst.msk [vmem:[#allocation10 + $0x48] sm:$0xff] %vm159, %v4433
    %4470 = vst.msk [vmem:[#allocation10 + $0x50] sm:$0xff] %vm159, %v4438
    %4471 = vst.msk [vmem:[#allocation10 + $0x58] sm:$0xff] %vm159, %v4441
    %4472 = vst.msk [vmem:[#allocation10 + $0x60] sm:$0xff] %vm159, %v4446
    %4473 = vst.msk [vmem:[#allocation10 + $0x68] sm:$0xff] %vm159, %v4449
    %4474 = vst.msk [vmem:[#allocation10 + $0x70] sm:$0xff] %vm159, %v4454
    %4475 = vst.msk [vmem:[#allocation10 + $0x78] sm:$0xff] %vm159, %v4457
    // Predicated region
    $region42: #{tpu_custom_call.1} parent=1 // pred_check
      _
    $region43: #{tpu_custom_call.1} parent=1 // pred_check_branch
      %4477 = sbr.rel (0) target = $region45
    $region44: #{tpu_custom_call.1} parent=1 // pred_region
      %s4479 = ssub.s32 2048, 2048
      %4480 = vsyncadd [#allocation4], %s4479
      %s4481 = sshll.u32 [#allocation10], 4
      %s4482 = int_to_ptr.vmem [resolvable:$true] %s4481
      %4487 = dma.vmem_to_hbm [thread:$0]  %s4482, 2048, %s6, [#allocation4], 128, 128, 8
    $region45: #{tpu_custom_call.1} parent=1 // pred_fallthru
      _
    // Predicated region
    $region46: #{tpu_custom_call.1} parent=1 // pred_check
      _
    $region47: #{tpu_custom_call.1} parent=1 // pred_check_branch
      %4489 = sbr.rel (0) target = $region49
    $region48: #{tpu_custom_call.1} parent=1 // pred_region
      %4490 = dma.done [#allocation4], 2048
    $region49: #{tpu_custom_call.1} parent=1 // pred_fallthru
      _
    %4491 = vsyncpa [#allocation3], 1
    %4492 = vsyncpa [#allocation6], 1
    %4493 = vsyncpa [#allocation9], 1
    %4494 = vsyncpa [#allocation4], 1

</llo_original>
